<compile_context>
chip_gen: v7x
topology: tpu7x:2x2x1
jax: 0.10.0
libtpu: 0.0.40
codegen_flags: <defaults>
</compile_context>

<pallas_src>
import jax
import jax.numpy as jnp
from jax.experimental import pallas as pl
from jax.experimental.pallas import tpu as pltpu


def _round_up(x, m):
    return (x + m - 1) // m * m


# ----------------------------------------------------------------------------
# Pallas kernel
# ----------------------------------------------------------------------------
def _make_kernel(layer_cfgs, kernel_size, T, B_blk, w_slots, b_slots,
                 out_pad, compute_dtype):
    """layer_cfgs: list of (c_in, c_out, dilation, has_downsample)."""
    K = kernel_size

    def kernel(x_ref, w_ref, b_ref, out_ref):
        # x_ref:  (B_blk, T, C_in)        f32
        # w_ref:  (n_w, R_pad, C_pad)     f32 packed weight slab
        # b_ref:  (n_b, C_pad)            f32 packed bias slab
        # out_ref:(B_blk, out_pad)        f32 (lane-dense, padded)

        def get_w(name):
            idx, r, c = w_slots[name]
            return w_ref[idx, :r, :c].astype(compute_dtype)     # (r, c)

        def get_b(name):
            idx, c = b_slots[name]
            return b_ref[idx:idx + 1, :c]                       # (1, c) f32

        def causal_conv(z, w, b, dilation, c_out):
            # z: (B_blk, T, c_in) f32; w: (K*c_in, c_out); b: (1, c_out)
            Bb, Tt, c_in = z.shape
            pad = (K - 1) * dilation
            zp = jnp.concatenate(
                [jnp.zeros((Bb, pad, c_in), jnp.float32), z], axis=1)
            # tap k multiplies x[t - (K-1-k)*d]  ==  zp[:, k*d : k*d + T]
            taps = [zp[:, k * dilation:k * dilation + Tt, :] for k in range(K)]
            col = jnp.concatenate(taps, axis=-1)                # (Bb,T,K*c_in)
            col2 = col.reshape(Bb * Tt, K * c_in).astype(compute_dtype)
            out = jnp.dot(col2, w, preferred_element_type=jnp.float32) + b
            return out.reshape(Bb, Tt, c_out)

        h = x_ref[...].astype(jnp.float32)                      # (B_blk,T,Cin)

        for li, (c_in, c_out, dil, need_ds) in enumerate(layer_cfgs):
            o = jnp.maximum(
                causal_conv(h, get_w(f"w1_{li}"), get_b(f"b1_{li}"), dil,
                            c_out), 0.0)
            # dropout1: identity (eval semantics)
            o = jnp.maximum(
                causal_conv(o, get_w(f"w2_{li}"), get_b(f"b2_{li}"), dil,
                            c_out), 0.0)
            # dropout2: identity (eval semantics)
            if need_ds:
                hm = h.reshape(B_blk * T, c_in).astype(compute_dtype)
                res = (jnp.dot(hm, get_w(f"wd_{li}"),
                               preferred_element_type=jnp.float32)
                       + get_b(f"bd_{li}")).reshape(B_blk, T, c_out)
            else:
                res = h
            h = jnp.maximum(o + res, 0.0)                       # (B_blk,T,c_out)

        # final Linear on the last time step (== y[:, :, -1]); lane-dense out
        h_last = h[:, T - 1, :].astype(compute_dtype)           # (B_blk, C_last)
        out_ref[...] = (jnp.dot(h_last, get_w("w_lin"),
                                preferred_element_type=jnp.float32)
                        + get_b("b_lin"))

    return kernel


# ----------------------------------------------------------------------------
# Wrapper
# ----------------------------------------------------------------------------
def tcn_model_forward(x_ncw, packed, layer_cfgs, kernel_size, output_size,
                      block_batch=None, target_rows=128,
                      compute_dtype=jnp.bfloat16):
    w_slab, b_slab, w_slots, b_slots, out_pad = packed
    B, Cin, T = x_ncw.shape
    x = jnp.transpose(x_ncw, (0, 2, 1)).astype(jnp.float32)     # (B, T, Cin)

    if block_batch is None:
        block_batch = max(1, min(B, max(1, target_rows // T)))
    B_blk = block_batch
    B_pad = _round_up(B, B_blk)
    if B_pad != B:
        x = jnp.pad(x, ((0, B_pad - B), (0, 0), (0, 0)))

    kernel = _make_kernel(layer_cfgs, kernel_size, T, B_blk,
                          w_slots, b_slots, out_pad, compute_dtype)

    n_w, R_pad, C_pad = w_slab.shape
    n_b, _ = b_slab.shape

    out = pl.pallas_call(
        kernel,
        out_shape=jax.ShapeDtypeStruct((B_pad, out_pad), jnp.float32),
        grid_spec=pltpu.PrefetchScalarGridSpec(
            num_scalar_prefetch=0,
            grid=(B_pad // B_blk,),
            in_specs=[
                pl.BlockSpec((B_blk, T, Cin), lambda b: (b, 0, 0)),
                pl.BlockSpec((n_w, R_pad, C_pad), lambda b: (0, 0, 0)),
                pl.BlockSpec((n_b, C_pad), lambda b: (0, 0)),
            ],
            out_specs=pl.BlockSpec((B_blk, out_pad), lambda b: (b, 0)),
        ),
        # Batch blocks are independent -> "parallel" (v7x dual-TC sharding).
        # VMEM per step is <1 MiB, far under the scoped default on all chips,
        # so no vmem_limit_bytes override is needed.
        compiler_params=pltpu.CompilerParams(
            dimension_semantics=("parallel",)),
    )(x, w_slab, b_slab)
    return out[:B, :output_size]


# ----------------------------------------------------------------------------
# Deterministic parameter init (weight_norm folds into effective weights)
# ----------------------------------------------------------------------------
def init_params(key, input_size, num_channels, kernel_size, output_size):
    keys = iter(jax.random.split(key, 6 * len(num_channels) + 2))
    layers, layer_cfgs = [], []
    cin = input_size
    for i, cout in enumerate(num_channels):
        dil = 2 ** i
        need_ds = cin != cout
        lp = {
            "w1": 0.1 * jax.random.normal(next(keys), (kernel_size, cin, cout), jnp.float32),
            "b1": 0.1 * jax.random.normal(next(keys), (1, cout), jnp.float32),
            "w2": 0.1 * jax.random.normal(next(keys), (kernel_size, cout, cout), jnp.float32),
            "b2": 0.1 * jax.random.normal(next(keys), (1, cout), jnp.float32),
        }
        if need_ds:
            lp["wd"] = 0.1 * jax.random.normal(next(keys), (cin, cout), jnp.float32)
            lp["bd"] = 0.1 * jax.random.normal(next(keys), (1, cout), jnp.float32)
        layers.append(lp)
        layer_cfgs.append((cin, cout, dil, need_ds))
        cin = cout
    w_lin = 0.1 * jax.random.normal(next(keys), (cin, output_size), jnp.float32)
    b_lin = 0.1 * jax.random.normal(next(keys), (1, output_size), jnp.float32)
    return layers, (w_lin, b_lin), layer_cfgs


# ----------------------------------------------------------------------------
# Pack all weights / biases into two slabs (one DMA stream each):
#   w_slab: (n_w, R_pad, C_pad)  -- conv weights reshaped to (K*Cin, Cout)
#   b_slab: (n_b, C_pad)
# The final linear is zero-padded to C_pad=128 columns (lane-dense output).
# ----------------------------------------------------------------------------
def pack_params(layers, lin, layer_cfgs, kernel_size, output_size):
    K = kernel_size
    w_lin, b_lin = lin
    c_last = w_lin.shape[0]
    out_pad = _round_up(output_size, 128)

    w_list, b_list = [], []
    for li, (cin, cout, dil, need_ds) in enumerate(layer_cfgs):
        lp = layers[li]
        w_list.append((f"w1_{li}", lp["w1"].reshape(K * cin, cout)))
        b_list.append((f"b1_{li}", lp["b1"].reshape(-1)))
        w_list.append((f"w2_{li}", lp["w2"].reshape(K * cout, cout)))
        b_list.append((f"b2_{li}", lp["b2"].reshape(-1)))
        if need_ds:
            w_list.append((f"wd_{li}", lp["wd"]))
            b_list.append((f"bd_{li}", lp["bd"].reshape(-1)))
    w_lin_pad = jnp.zeros((c_last, out_pad), jnp.float32).at[:, :output_size].set(w_lin)
    b_lin_pad = jnp.zeros((out_pad,), jnp.float32).at[:output_size].set(b_lin.reshape(-1))
    w_list.append(("w_lin", w_lin_pad))
    b_list.append(("b_lin", b_lin_pad))

    R_pad = _round_up(max(w.shape[0] for _, w in w_list), 8)
    C_pad = _round_up(max(max(w.shape[1] for _, w in w_list),
                          max(b.shape[0] for _, b in b_list)), 128)

    w_slots, b_slots, w_mats, b_rows = {}, {}, [], []
    for i, (name, w) in enumerate(w_list):
        w_slots[name] = (i, w.shape[0], w.shape[1])
        w_mats.append(jnp.zeros((R_pad, C_pad), jnp.float32)
                      .at[:w.shape[0], :w.shape[1]].set(w))
    for i, (name, b) in enumerate(b_list):
        b_slots[name] = (i, b.shape[0])
        b_rows.append(jnp.zeros((C_pad,), jnp.float32).at[:b.shape[0]].set(b))

    w_slab = jnp.stack(w_mats, axis=0)
    b_slab = jnp.stack(b_rows, axis=0)
    return w_slab, b_slab, w_slots, b_slots, out_pad


# ----------------------------------------------------------------------------
# Pure-JAX reference (explicit left pad + per-tap einsum, unpacked weights)
# ----------------------------------------------------------------------------
def ref_forward(x_ncw, layers, lin, kernel_size):
    B, Cin, T = x_ncw.shape
    h = jnp.transpose(x_ncw, (0, 2, 1)).astype(jnp.float32)     # (B, T, C)
    for i, lp in enumerate(layers):
        d = 2 ** i

        def conv(z, w, b):
            p = (kernel_size - 1) * d
            zp = jnp.pad(z, ((0, 0), (p, 0), (0, 0)))
            out = b[None]
            for k in range(kernel_size):
                out = out + jnp.einsum("btc,cd->btd",
                                       zp[:, k * d:k * d + T, :], w[k])
            return out

        o = jax.nn.relu(conv(h, lp["w1"], lp["b1"]))
        o = jax.nn.relu(conv(o, lp["w2"], lp["b2"]))
        if "wd" in lp:
            res = jnp.einsum("btc,cd->btd", h, lp["wd"]) + lp["bd"][None]
        else:
            res = h
        h = jax.nn.relu(o + res)
    w_lin, b_lin = lin
    return h[:, -1, :] @ w_lin + b_lin


# ----------------------------------------------------------------------------
if __name__ == "__main__":
    # Small shapes consistent with the module: x is (B, input_size, seq_len)
    input_size = 12
    num_channels = [16, 16, 16, 16]
    kernel_size = 3
    output_size = 6
    B, T = 16, 16        # -> B_blk = 8 per grid step (128-row matmul slabs)

    key = jax.random.PRNGKey(0)
    kx, kp = jax.random.split(key)
    x = jax.random.normal(kx, (B, input_size, T), jnp.float32)  # NCW like PyTorch

    layers, lin, layer_cfgs = init_params(
        kp, input_size, num_channels, kernel_size, output_size)
    packed = pack_params(layers, lin, layer_cfgs, kernel_size, output_size)

    y_ref = ref_forward(x, layers, lin, kernel_size)

    # f32-operand path: tight correctness check
    y32 = tcn_model_forward(x, packed, layer_cfgs, kernel_size, output_size,
                            compute_dtype=jnp.float32)
    y32 = jax.block_until_ready(y32)
    assert y32.shape == (B, output_size)
    assert jnp.allclose(y32, y_ref, atol=1e-4, rtol=1e-4), (y32, y_ref)

    # bf16-operand path (bf16-native MXU on v6e/v7x), f32 accumulation
    ybf = tcn_model_forward(x, packed, layer_cfgs, kernel_size, output_size,
                            compute_dtype=jnp.bfloat16)
    ybf = jax.block_until_ready(ybf)
    assert ybf.shape == (B, output_size)
    assert jnp.allclose(ybf, y_ref, atol=5e-2, rtol=5e-2), (ybf, y_ref)

    print("KERNEL_OK")
</pallas_src>

<mosaic_0001>
module attributes {stable_mosaic.version = 11 : i64} {
  func.func @kernel(%arg0: i32, %arg1: memref<8x16x12xf32, #tpu.memory_space<vmem>>, %arg2: memref<10x48x128xf32, #tpu.memory_space<vmem>>, %arg3: memref<10x128xf32, #tpu.memory_space<vmem>>, %arg4: memref<8x128xf32, #tpu.memory_space<vmem>>) attributes {dimension_semantics = [#tpu.dimension_semantics<parallel>], iteration_bounds = array<i64: 2>, scalar_prefetch = 0 : i64, scratch_operands = 0 : i64, tpu.core_type = #tpu.core_type<tc>, window_params = [{transform_indices = @transform_0, window_bounds = array<i64: 8, 16, 12>}, {pipeline_mode = #tpu.pipeline_mode<synchronous>, transform_indices = @transform_1, window_bounds = array<i64: 10, 48, 128>}, {pipeline_mode = #tpu.pipeline_mode<synchronous>, transform_indices = @transform_2, window_bounds = array<i64: 10, 128>}, {transform_indices = @transform_3, window_bounds = array<i64: 8, 128>}]} {
    %c0 = arith.constant 0 : index
    %c0_0 = arith.constant 0 : index
    %c0_1 = arith.constant 0 : index
    %0 = vector.load %arg1[%c0, %c0_0, %c0_1] : memref<8x16x12xf32, #tpu.memory_space<vmem>>, vector<8x16x12xf32>
    %c0_2 = arith.constant 0 : index
    %c0_3 = arith.constant 0 : index
    %c0_4 = arith.constant 0 : index
    %1 = vector.load %arg2[%c0_2, %c0_3, %c0_4] : memref<10x48x128xf32, #tpu.memory_space<vmem>>, vector<1x36x16xf32>
    %2 = vector.shape_cast %1 : vector<1x36x16xf32> to vector<36x16xf32>
    %c0_5 = arith.constant 0 : index
    %c0_6 = arith.constant 0 : index
    %3 = vector.load %arg3[%c0_5, %c0_6] : memref<10x128xf32, #tpu.memory_space<vmem>>, vector<1x16xf32>
    %cst = arith.constant 0.000000e+00 : f32
    %4 = vector.broadcast %cst : f32 to vector<8x2x12xf32>
    %5 = tpu.concatenate %4, %0 in 1 : vector<8x2x12xf32>, vector<8x16x12xf32> -> vector<8x18x12xf32>
    %6 = vector.extract_strided_slice %5 {offsets = [0, 0, 0], sizes = [8, 16, 12], strides = [1, 1, 1]} : vector<8x18x12xf32> to vector<8x16x12xf32>
    %7 = vector.extract_strided_slice %5 {offsets = [0, 1, 0], sizes = [8, 16, 12], strides = [1, 1, 1]} : vector<8x18x12xf32> to vector<8x16x12xf32>
    %8 = vector.extract_strided_slice %5 {offsets = [0, 2, 0], sizes = [8, 16, 12], strides = [1, 1, 1]} : vector<8x18x12xf32> to vector<8x16x12xf32>
    %9 = tpu.concatenate %6, %7, %8 in 2 : vector<8x16x12xf32>, vector<8x16x12xf32>, vector<8x16x12xf32> -> vector<8x16x36xf32>
    %10 = vector.shape_cast %9 : vector<8x16x36xf32> to vector<128x36xf32>
    %cst_7 = arith.constant dense<0.000000e+00> : vector<128x16xf32>
    %11 = tpu.matmul %10, %2, %cst_7 {dimension_numbers = #tpu.dot_dimension_numbers<[1], [0], [0], [1], [0, 0, 1, 1], [], []>} : vector<128x36xf32>, vector<36x16xf32>, vector<128x16xf32> -> vector<128x16xf32>
    %12 = vector.broadcast %3 : vector<1x16xf32> to vector<128x16xf32>
    %13 = arith.addf %11, %12 : vector<128x16xf32>
    %14 = vector.shape_cast %13 : vector<128x16xf32> to vector<8x16x16xf32>
    %cst_8 = arith.constant 0.000000e+00 : f32
    %15 = vector.broadcast %cst_8 : f32 to vector<8x16x16xf32>
    %16 = arith.maximumf %14, %15 : vector<8x16x16xf32>
    %c1 = arith.constant 1 : index
    %c0_9 = arith.constant 0 : index
    %c0_10 = arith.constant 0 : index
    %17 = vector.load %arg2[%c1, %c0_9, %c0_10] : memref<10x48x128xf32, #tpu.memory_space<vmem>>, vector<1x48x16xf32>
    %18 = vector.shape_cast %17 : vector<1x48x16xf32> to vector<48x16xf32>
    %c1_11 = arith.constant 1 : index
    %c0_12 = arith.constant 0 : index
    %19 = vector.load %arg3[%c1_11, %c0_12] : memref<10x128xf32, #tpu.memory_space<vmem>>, vector<1x16xf32>
    %cst_13 = arith.constant 0.000000e+00 : f32
    %20 = vector.broadcast %cst_13 : f32 to vector<8x2x16xf32>
    %21 = tpu.concatenate %20, %16 in 1 : vector<8x2x16xf32>, vector<8x16x16xf32> -> vector<8x18x16xf32>
    %22 = vector.extract_strided_slice %21 {offsets = [0, 0, 0], sizes = [8, 16, 16], strides = [1, 1, 1]} : vector<8x18x16xf32> to vector<8x16x16xf32>
    %23 = vector.extract_strided_slice %21 {offsets = [0, 1, 0], sizes = [8, 16, 16], strides = [1, 1, 1]} : vector<8x18x16xf32> to vector<8x16x16xf32>
    %24 = vector.extract_strided_slice %21 {offsets = [0, 2, 0], sizes = [8, 16, 16], strides = [1, 1, 1]} : vector<8x18x16xf32> to vector<8x16x16xf32>
    %25 = tpu.concatenate %22, %23, %24 in 2 : vector<8x16x16xf32>, vector<8x16x16xf32>, vector<8x16x16xf32> -> vector<8x16x48xf32>
    %26 = vector.shape_cast %25 : vector<8x16x48xf32> to vector<128x48xf32>
    %cst_14 = arith.constant dense<0.000000e+00> : vector<128x16xf32>
    %27 = tpu.matmul %26, %18, %cst_14 {dimension_numbers = #tpu.dot_dimension_numbers<[1], [0], [0], [1], [0, 0, 1, 1], [], []>} : vector<128x48xf32>, vector<48x16xf32>, vector<128x16xf32> -> vector<128x16xf32>
    %28 = vector.broadcast %19 : vector<1x16xf32> to vector<128x16xf32>
    %29 = arith.addf %27, %28 : vector<128x16xf32>
    %30 = vector.shape_cast %29 : vector<128x16xf32> to vector<8x16x16xf32>
    %cst_15 = arith.constant 0.000000e+00 : f32
    %31 = vector.broadcast %cst_15 : f32 to vector<8x16x16xf32>
    %32 = arith.maximumf %30, %31 : vector<8x16x16xf32>
    %33 = vector.shape_cast %0 : vector<8x16x12xf32> to vector<128x12xf32>
    %c2 = arith.constant 2 : index
    %c0_16 = arith.constant 0 : index
    %c0_17 = arith.constant 0 : index
    %34 = vector.load %arg2[%c2, %c0_16, %c0_17] : memref<10x48x128xf32, #tpu.memory_space<vmem>>, vector<1x12x16xf32>
    %35 = vector.shape_cast %34 : vector<1x12x16xf32> to vector<12x16xf32>
    %cst_18 = arith.constant dense<0.000000e+00> : vector<128x16xf32>
    %36 = tpu.matmul %33, %35, %cst_18 {dimension_numbers = #tpu.dot_dimension_numbers<[1], [0], [0], [1], [0, 0, 1, 1], [], []>} : vector<128x12xf32>, vector<12x16xf32>, vector<128x16xf32> -> vector<128x16xf32>
    %c2_19 = arith.constant 2 : index
    %c0_20 = arith.constant 0 : index
    %37 = vector.load %arg3[%c2_19, %c0_20] : memref<10x128xf32, #tpu.memory_space<vmem>>, vector<1x16xf32>
    %38 = vector.broadcast %37 : vector<1x16xf32> to vector<128x16xf32>
    %39 = arith.addf %36, %38 : vector<128x16xf32>
    %40 = vector.shape_cast %39 : vector<128x16xf32> to vector<8x16x16xf32>
    %41 = arith.addf %32, %40 : vector<8x16x16xf32>
    %cst_21 = arith.constant 0.000000e+00 : f32
    %42 = vector.broadcast %cst_21 : f32 to vector<8x16x16xf32>
    %43 = arith.maximumf %41, %42 : vector<8x16x16xf32>
    %c3 = arith.constant 3 : index
    %c0_22 = arith.constant 0 : index
    %c0_23 = arith.constant 0 : index
    %44 = vector.load %arg2[%c3, %c0_22, %c0_23] : memref<10x48x128xf32, #tpu.memory_space<vmem>>, vector<1x48x16xf32>
    %45 = vector.shape_cast %44 : vector<1x48x16xf32> to vector<48x16xf32>
    %c3_24 = arith.constant 3 : index
    %c0_25 = arith.constant 0 : index
    %46 = vector.load %arg3[%c3_24, %c0_25] : memref<10x128xf32, #tpu.memory_space<vmem>>, vector<1x16xf32>
    %cst_26 = arith.constant 0.000000e+00 : f32
    %47 = vector.broadcast %cst_26 : f32 to vector<8x4x16xf32>
    %48 = tpu.concatenate %47, %43 in 1 : vector<8x4x16xf32>, vector<8x16x16xf32> -> vector<8x20x16xf32>
    %49 = vector.extract_strided_slice %48 {offsets = [0, 0, 0], sizes = [8, 16, 16], strides = [1, 1, 1]} : vector<8x20x16xf32> to vector<8x16x16xf32>
    %50 = vector.extract_strided_slice %48 {offsets = [0, 2, 0], sizes = [8, 16, 16], strides = [1, 1, 1]} : vector<8x20x16xf32> to vector<8x16x16xf32>
    %51 = vector.extract_strided_slice %48 {offsets = [0, 4, 0], sizes = [8, 16, 16], strides = [1, 1, 1]} : vector<8x20x16xf32> to vector<8x16x16xf32>
    %52 = tpu.concatenate %49, %50, %51 in 2 : vector<8x16x16xf32>, vector<8x16x16xf32>, vector<8x16x16xf32> -> vector<8x16x48xf32>
    %53 = vector.shape_cast %52 : vector<8x16x48xf32> to vector<128x48xf32>
    %cst_27 = arith.constant dense<0.000000e+00> : vector<128x16xf32>
    %54 = tpu.matmul %53, %45, %cst_27 {dimension_numbers = #tpu.dot_dimension_numbers<[1], [0], [0], [1], [0, 0, 1, 1], [], []>} : vector<128x48xf32>, vector<48x16xf32>, vector<128x16xf32> -> vector<128x16xf32>
    %55 = vector.broadcast %46 : vector<1x16xf32> to vector<128x16xf32>
    %56 = arith.addf %54, %55 : vector<128x16xf32>
    %57 = vector.shape_cast %56 : vector<128x16xf32> to vector<8x16x16xf32>
    %cst_28 = arith.constant 0.000000e+00 : f32
    %58 = vector.broadcast %cst_28 : f32 to vector<8x16x16xf32>
    %59 = arith.maximumf %57, %58 : vector<8x16x16xf32>
    %c4 = arith.constant 4 : index
    %c0_29 = arith.constant 0 : index
    %c0_30 = arith.constant 0 : index
    %60 = vector.load %arg2[%c4, %c0_29, %c0_30] : memref<10x48x128xf32, #tpu.memory_space<vmem>>, vector<1x48x16xf32>
    %61 = vector.shape_cast %60 : vector<1x48x16xf32> to vector<48x16xf32>
    %c4_31 = arith.constant 4 : index
    %c0_32 = arith.constant 0 : index
    %62 = vector.load %arg3[%c4_31, %c0_32] : memref<10x128xf32, #tpu.memory_space<vmem>>, vector<1x16xf32>
    %cst_33 = arith.constant 0.000000e+00 : f32
    %63 = vector.broadcast %cst_33 : f32 to vector<8x4x16xf32>
    %64 = tpu.concatenate %63, %59 in 1 : vector<8x4x16xf32>, vector<8x16x16xf32> -> vector<8x20x16xf32>
    %65 = vector.extract_strided_slice %64 {offsets = [0, 0, 0], sizes = [8, 16, 16], strides = [1, 1, 1]} : vector<8x20x16xf32> to vector<8x16x16xf32>
    %66 = vector.extract_strided_slice %64 {offsets = [0, 2, 0], sizes = [8, 16, 16], strides = [1, 1, 1]} : vector<8x20x16xf32> to vector<8x16x16xf32>
    %67 = vector.extract_strided_slice %64 {offsets = [0, 4, 0], sizes = [8, 16, 16], strides = [1, 1, 1]} : vector<8x20x16xf32> to vector<8x16x16xf32>
    %68 = tpu.concatenate %65, %66, %67 in 2 : vector<8x16x16xf32>, vector<8x16x16xf32>, vector<8x16x16xf32> -> vector<8x16x48xf32>
    %69 = vector.shape_cast %68 : vector<8x16x48xf32> to vector<128x48xf32>
    %cst_34 = arith.constant dense<0.000000e+00> : vector<128x16xf32>
    %70 = tpu.matmul %69, %61, %cst_34 {dimension_numbers = #tpu.dot_dimension_numbers<[1], [0], [0], [1], [0, 0, 1, 1], [], []>} : vector<128x48xf32>, vector<48x16xf32>, vector<128x16xf32> -> vector<128x16xf32>
    %71 = vector.broadcast %62 : vector<1x16xf32> to vector<128x16xf32>
    %72 = arith.addf %70, %71 : vector<128x16xf32>
    %73 = vector.shape_cast %72 : vector<128x16xf32> to vector<8x16x16xf32>
    %cst_35 = arith.constant 0.000000e+00 : f32
    %74 = vector.broadcast %cst_35 : f32 to vector<8x16x16xf32>
    %75 = arith.maximumf %73, %74 : vector<8x16x16xf32>
    %76 = arith.addf %75, %43 : vector<8x16x16xf32>
    %cst_36 = arith.constant 0.000000e+00 : f32
    %77 = vector.broadcast %cst_36 : f32 to vector<8x16x16xf32>
    %78 = arith.maximumf %76, %77 : vector<8x16x16xf32>
    %c5 = arith.constant 5 : index
    %c0_37 = arith.constant 0 : index
    %c0_38 = arith.constant 0 : index
    %79 = vector.load %arg2[%c5, %c0_37, %c0_38] : memref<10x48x128xf32, #tpu.memory_space<vmem>>, vector<1x48x16xf32>
    %80 = vector.shape_cast %79 : vector<1x48x16xf32> to vector<48x16xf32>
    %c5_39 = arith.constant 5 : index
    %c0_40 = arith.constant 0 : index
    %81 = vector.load %arg3[%c5_39, %c0_40] : memref<10x128xf32, #tpu.memory_space<vmem>>, vector<1x16xf32>
    %cst_41 = arith.constant 0.000000e+00 : f32
    %82 = vector.broadcast %cst_41 : f32 to vector<8x8x16xf32>
    %83 = tpu.concatenate %82, %78 in 1 : vector<8x8x16xf32>, vector<8x16x16xf32> -> vector<8x24x16xf32>
    %84 = vector.extract_strided_slice %83 {offsets = [0, 0, 0], sizes = [8, 16, 16], strides = [1, 1, 1]} : vector<8x24x16xf32> to vector<8x16x16xf32>
    %85 = vector.extract_strided_slice %83 {offsets = [0, 4, 0], sizes = [8, 16, 16], strides = [1, 1, 1]} : vector<8x24x16xf32> to vector<8x16x16xf32>
    %86 = vector.extract_strided_slice %83 {offsets = [0, 8, 0], sizes = [8, 16, 16], strides = [1, 1, 1]} : vector<8x24x16xf32> to vector<8x16x16xf32>
    %87 = tpu.concatenate %84, %85, %86 in 2 : vector<8x16x16xf32>, vector<8x16x16xf32>, vector<8x16x16xf32> -> vector<8x16x48xf32>
    %88 = vector.shape_cast %87 : vector<8x16x48xf32> to vector<128x48xf32>
    %cst_42 = arith.constant dense<0.000000e+00> : vector<128x16xf32>
    %89 = tpu.matmul %88, %80, %cst_42 {dimension_numbers = #tpu.dot_dimension_numbers<[1], [0], [0], [1], [0, 0, 1, 1], [], []>} : vector<128x48xf32>, vector<48x16xf32>, vector<128x16xf32> -> vector<128x16xf32>
    %90 = vector.broadcast %81 : vector<1x16xf32> to vector<128x16xf32>
    %91 = arith.addf %89, %90 : vector<128x16xf32>
    %92 = vector.shape_cast %91 : vector<128x16xf32> to vector<8x16x16xf32>
    %cst_43 = arith.constant 0.000000e+00 : f32
    %93 = vector.broadcast %cst_43 : f32 to vector<8x16x16xf32>
    %94 = arith.maximumf %92, %93 : vector<8x16x16xf32>
    %c6 = arith.constant 6 : index
    %c0_44 = arith.constant 0 : index
    %c0_45 = arith.constant 0 : index
    %95 = vector.load %arg2[%c6, %c0_44, %c0_45] : memref<10x48x128xf32, #tpu.memory_space<vmem>>, vector<1x48x16xf32>
    %96 = vector.shape_cast %95 : vector<1x48x16xf32> to vector<48x16xf32>
    %c6_46 = arith.constant 6 : index
    %c0_47 = arith.constant 0 : index
    %97 = vector.load %arg3[%c6_46, %c0_47] : memref<10x128xf32, #tpu.memory_space<vmem>>, vector<1x16xf32>
    %cst_48 = arith.constant 0.000000e+00 : f32
    %98 = vector.broadcast %cst_48 : f32 to vector<8x8x16xf32>
    %99 = tpu.concatenate %98, %94 in 1 : vector<8x8x16xf32>, vector<8x16x16xf32> -> vector<8x24x16xf32>
    %100 = vector.extract_strided_slice %99 {offsets = [0, 0, 0], sizes = [8, 16, 16], strides = [1, 1, 1]} : vector<8x24x16xf32> to vector<8x16x16xf32>
    %101 = vector.extract_strided_slice %99 {offsets = [0, 4, 0], sizes = [8, 16, 16], strides = [1, 1, 1]} : vector<8x24x16xf32> to vector<8x16x16xf32>
    %102 = vector.extract_strided_slice %99 {offsets = [0, 8, 0], sizes = [8, 16, 16], strides = [1, 1, 1]} : vector<8x24x16xf32> to vector<8x16x16xf32>
    %103 = tpu.concatenate %100, %101, %102 in 2 : vector<8x16x16xf32>, vector<8x16x16xf32>, vector<8x16x16xf32> -> vector<8x16x48xf32>
    %104 = vector.shape_cast %103 : vector<8x16x48xf32> to vector<128x48xf32>
    %cst_49 = arith.constant dense<0.000000e+00> : vector<128x16xf32>
    %105 = tpu.matmul %104, %96, %cst_49 {dimension_numbers = #tpu.dot_dimension_numbers<[1], [0], [0], [1], [0, 0, 1, 1], [], []>} : vector<128x48xf32>, vector<48x16xf32>, vector<128x16xf32> -> vector<128x16xf32>
    %106 = vector.broadcast %97 : vector<1x16xf32> to vector<128x16xf32>
    %107 = arith.addf %105, %106 : vector<128x16xf32>
    %108 = vector.shape_cast %107 : vector<128x16xf32> to vector<8x16x16xf32>
    %cst_50 = arith.constant 0.000000e+00 : f32
    %109 = vector.broadcast %cst_50 : f32 to vector<8x16x16xf32>
    %110 = arith.maximumf %108, %109 : vector<8x16x16xf32>
    %111 = arith.addf %110, %78 : vector<8x16x16xf32>
    %cst_51 = arith.constant 0.000000e+00 : f32
    %112 = vector.broadcast %cst_51 : f32 to vector<8x16x16xf32>
    %113 = arith.maximumf %111, %112 : vector<8x16x16xf32>
    %c7 = arith.constant 7 : index
    %c0_52 = arith.constant 0 : index
    %c0_53 = arith.constant 0 : index
    %114 = vector.load %arg2[%c7, %c0_52, %c0_53] : memref<10x48x128xf32, #tpu.memory_space<vmem>>, vector<1x48x16xf32>
    %115 = vector.shape_cast %114 : vector<1x48x16xf32> to vector<48x16xf32>
    %c7_54 = arith.constant 7 : index
    %c0_55 = arith.constant 0 : index
    %116 = vector.load %arg3[%c7_54, %c0_55] : memref<10x128xf32, #tpu.memory_space<vmem>>, vector<1x16xf32>
    %cst_56 = arith.constant 0.000000e+00 : f32
    %117 = vector.broadcast %cst_56 : f32 to vector<8x16x16xf32>
    %118 = tpu.concatenate %117, %113 in 1 : vector<8x16x16xf32>, vector<8x16x16xf32> -> vector<8x32x16xf32>
    %119 = vector.extract_strided_slice %118 {offsets = [0, 0, 0], sizes = [8, 16, 16], strides = [1, 1, 1]} : vector<8x32x16xf32> to vector<8x16x16xf32>
    %120 = vector.extract_strided_slice %118 {offsets = [0, 8, 0], sizes = [8, 16, 16], strides = [1, 1, 1]} : vector<8x32x16xf32> to vector<8x16x16xf32>
    %121 = vector.extract_strided_slice %118 {offsets = [0, 16, 0], sizes = [8, 16, 16], strides = [1, 1, 1]} : vector<8x32x16xf32> to vector<8x16x16xf32>
    %122 = tpu.concatenate %119, %120, %121 in 2 : vector<8x16x16xf32>, vector<8x16x16xf32>, vector<8x16x16xf32> -> vector<8x16x48xf32>
    %123 = vector.shape_cast %122 : vector<8x16x48xf32> to vector<128x48xf32>
    %cst_57 = arith.constant dense<0.000000e+00> : vector<128x16xf32>
    %124 = tpu.matmul %123, %115, %cst_57 {dimension_numbers = #tpu.dot_dimension_numbers<[1], [0], [0], [1], [0, 0, 1, 1], [], []>} : vector<128x48xf32>, vector<48x16xf32>, vector<128x16xf32> -> vector<128x16xf32>
    %125 = vector.broadcast %116 : vector<1x16xf32> to vector<128x16xf32>
    %126 = arith.addf %124, %125 : vector<128x16xf32>
    %127 = vector.shape_cast %126 : vector<128x16xf32> to vector<8x16x16xf32>
    %cst_58 = arith.constant 0.000000e+00 : f32
    %128 = vector.broadcast %cst_58 : f32 to vector<8x16x16xf32>
    %129 = arith.maximumf %127, %128 : vector<8x16x16xf32>
    %c8 = arith.constant 8 : index
    %c0_59 = arith.constant 0 : index
    %c0_60 = arith.constant 0 : index
    %130 = vector.load %arg2[%c8, %c0_59, %c0_60] : memref<10x48x128xf32, #tpu.memory_space<vmem>>, vector<1x48x16xf32>
    %131 = vector.shape_cast %130 : vector<1x48x16xf32> to vector<48x16xf32>
    %c8_61 = arith.constant 8 : index
    %c0_62 = arith.constant 0 : index
    %132 = vector.load %arg3[%c8_61, %c0_62] : memref<10x128xf32, #tpu.memory_space<vmem>>, vector<1x16xf32>
    %cst_63 = arith.constant 0.000000e+00 : f32
    %133 = vector.broadcast %cst_63 : f32 to vector<8x16x16xf32>
    %134 = tpu.concatenate %133, %129 in 1 : vector<8x16x16xf32>, vector<8x16x16xf32> -> vector<8x32x16xf32>
    %135 = vector.extract_strided_slice %134 {offsets = [0, 0, 0], sizes = [8, 16, 16], strides = [1, 1, 1]} : vector<8x32x16xf32> to vector<8x16x16xf32>
    %136 = vector.extract_strided_slice %134 {offsets = [0, 8, 0], sizes = [8, 16, 16], strides = [1, 1, 1]} : vector<8x32x16xf32> to vector<8x16x16xf32>
    %137 = vector.extract_strided_slice %134 {offsets = [0, 16, 0], sizes = [8, 16, 16], strides = [1, 1, 1]} : vector<8x32x16xf32> to vector<8x16x16xf32>
    %138 = tpu.concatenate %135, %136, %137 in 2 : vector<8x16x16xf32>, vector<8x16x16xf32>, vector<8x16x16xf32> -> vector<8x16x48xf32>
    %139 = vector.shape_cast %138 : vector<8x16x48xf32> to vector<128x48xf32>
    %cst_64 = arith.constant dense<0.000000e+00> : vector<128x16xf32>
    %140 = tpu.matmul %139, %131, %cst_64 {dimension_numbers = #tpu.dot_dimension_numbers<[1], [0], [0], [1], [0, 0, 1, 1], [], []>} : vector<128x48xf32>, vector<48x16xf32>, vector<128x16xf32> -> vector<128x16xf32>
    %141 = vector.broadcast %132 : vector<1x16xf32> to vector<128x16xf32>
    %142 = arith.addf %140, %141 : vector<128x16xf32>
    %143 = vector.shape_cast %142 : vector<128x16xf32> to vector<8x16x16xf32>
    %cst_65 = arith.constant 0.000000e+00 : f32
    %144 = vector.broadcast %cst_65 : f32 to vector<8x16x16xf32>
    %145 = arith.maximumf %143, %144 : vector<8x16x16xf32>
    %146 = arith.addf %145, %113 : vector<8x16x16xf32>
    %cst_66 = arith.constant 0.000000e+00 : f32
    %147 = vector.broadcast %cst_66 : f32 to vector<8x16x16xf32>
    %148 = arith.maximumf %146, %147 : vector<8x16x16xf32>
    %149 = vector.extract_strided_slice %148 {offsets = [0, 15, 0], sizes = [8, 1, 16], strides = [1, 1, 1]} : vector<8x16x16xf32> to vector<8x1x16xf32>
    %150 = vector.shape_cast %149 : vector<8x1x16xf32> to vector<8x16xf32>
    %c9 = arith.constant 9 : index
    %c0_67 = arith.constant 0 : index
    %c0_68 = arith.constant 0 : index
    %151 = vector.load %arg2[%c9, %c0_67, %c0_68] : memref<10x48x128xf32, #tpu.memory_space<vmem>>, vector<1x16x128xf32>
    %152 = vector.shape_cast %151 : vector<1x16x128xf32> to vector<16x128xf32>
    %cst_69 = arith.constant dense<0.000000e+00> : vector<8x128xf32>
    %153 = tpu.matmul %150, %152, %cst_69 {dimension_numbers = #tpu.dot_dimension_numbers<[1], [0], [0], [1], [0, 0, 1, 1], [], []>} : vector<8x16xf32>, vector<16x128xf32>, vector<8x128xf32> -> vector<8x128xf32>
    %c9_70 = arith.constant 9 : index
    %c0_71 = arith.constant 0 : index
    %154 = vector.load %arg3[%c9_70, %c0_71] : memref<10x128xf32, #tpu.memory_space<vmem>>, vector<1x128xf32>
    %155 = vector.broadcast %154 : vector<1x128xf32> to vector<8x128xf32>
    %156 = arith.addf %153, %155 : vector<8x128xf32>
    %c0_72 = arith.constant 0 : index
    %c0_73 = arith.constant 0 : index
    %157 = vector.load %arg4[%c0_72, %c0_73] : memref<8x128xf32, #tpu.memory_space<vmem>>, vector<8x128xf32>
    tpu.vector_store %arg4[%c0_72, %c0_73], %156 {strides = array<i32>} : memref<8x128xf32, #tpu.memory_space<vmem>>, vector<8x128xf32>,
    return
  }
  func.func @transform_0(%arg0: i32) -> (i32, i32, i32) {
    %c0_i32 = arith.constant 0 : i32
    %c0_i32_0 = arith.constant 0 : i32
    %c0_i32_1 = arith.constant 0 : i32
    return %arg0, %c0_i32, %c0_i32_0 : i32, i32, i32
  }
  func.func @transform_1(%arg0: i32) -> (i32, i32, i32) {
    %c0_i32 = arith.constant 0 : i32
    %c0_i32_0 = arith.constant 0 : i32
    %c0_i32_1 = arith.constant 0 : i32
    %c0_i32_2 = arith.constant 0 : i32
    return %c0_i32, %c0_i32_0, %c0_i32_1 : i32, i32, i32
  }
  func.func @transform_2(%arg0: i32) -> (i32, i32) {
    %c0_i32 = arith.constant 0 : i32
    %c0_i32_0 = arith.constant 0 : i32
    %c0_i32_1 = arith.constant 0 : i32
    return %c0_i32, %c0_i32_0 : i32, i32
  }
  func.func @transform_3(%arg0: i32) -> (i32, i32) {
    %c0_i32 = arith.constant 0 : i32
    %c0_i32_0 = arith.constant 0 : i32
    return %arg0, %c0_i32 : i32, i32
  }
}

</mosaic_0001>

<llo_original>
// kernel: tpu_custom_call.1
$region0: #{tpu_custom_call.1}
  #allocation0 [shape = 'u32[]', space=smem, size = 0x4, offset = 0x4, fixed_abs, tag = 'smem constant byte address 0x4 - core index']
  #allocation1 [shape = 'u32[144,128]{1,0:T(1,128)}', space=vmem, size = 0x12000, scoped, tag = 'internal scratch']
  %s0 = inlined_call_operand.vmem [shape: f32[16,16,12], index: 0, kind: input, shape index: {}]
  %s1 = inlined_call_operand.hbm [shape: f32[10,48,128], index: 1, kind: input, shape index: {}]
  %s2 = inlined_call_operand.vmem [shape: f32[10,128], index: 2, kind: input, shape index: {}]
  %s3 = inlined_call_operand.hbm [shape: f32[16,128], index: 3, kind: output, shape index: {}]
  %s4 = sld [smem:[#allocation0]]
  $region49: #{tpu_custom_call.1} parent=0
    _
  %s6 = ssub.s32 1, %s4
  %s7 = scalar_select 0, %s6, %s4
  $region1: #{tpu_custom_call.1} parent=0
    #allocation2 [shape = 'u8[245760]{0}', space=vmem, size = 0x3c000, scoped, tag = 'input window, operand 1, single buffered']
    #allocation3 [shape = 's32[2]{0}', space=sflag, size = 0x8, scoped, tag = 'scoped memory for tpu_custom_call.1']
    #allocation4 [shape = 's32[2]{0}', space=sflag, size = 0x8, scoped, tag = 'scoped memory for tpu_custom_call.1']
    #allocation5 [shape = 'u8[8192]{0}', space=vmem, size = 0x2000, scoped, tag = 'output window, operand 0']
    %8 = vsyncpa [#allocation3], 0
    %9 = vsyncpa [#allocation4], 0
    %s10 = scalar_lea.sflag [#allocation4], 1
    %11 = vsyncpa %s10, 0
    loop: start=0, step=1, limit=4
    $region2: #{tpu_custom_call.1} parent=1 // loop_pre_header
      _
    $region3: #{tpu_custom_call.1} parent=1 // loop_header
      %s13 = sphi 0, %s17
      %p14 = scmp.ge.s32.totalorder %s13, 4
      %s23 = sphi 0, %s25
      %s26 = sphi 0, %s23
      %s27 = sphi 0, %s26
      %s43 = sphi 0, %s27
      %s47 = sphi 0, %s47
      %s49 = sphi 0, %s47
      %s50 = sphi 0, %s49
      %s64 = sphi 0, %s50
      %s68 = sphi 0, %s68
      %s70 = sphi 0, %s68
      %s71 = sphi 0, %s70
      %s85 = sphi 0, %s71
      %s91 = sphi 0, %s93
      %s94 = sphi 0, %s91
      %s95 = sphi 0, %s94
      %s111 = sphi 0, %s95
    $region4: #{tpu_custom_call.1} parent=1 // loop_header_branch
      %16 = sbr.rel (%p14) target = $region8
    $region5: #{tpu_custom_call.1} parent=1 // loop_body
      %s18 = ssub.s32 %s13, 1
      %s19 = ssub.s32 %s13, 2
      %s20 = sadd.s32 %s13, 1
      %s21 = ssub.s32 %s13, %s20
      %p22 = scmp.eq.s32.totalorder %s21, 0
      %s24 = sadd.s32 %s23, 1
      %s25 = scalar_select %p22, %s23, %s24
      %p28 = pneg %p22
      %p29 = scmp.eq.s32.totalorder %s13, 1
      %p30 = por %p28, %p29
      %p31 = scmp.ne.s32.totalorder %s23, %s26
      %p32 = scmp.eq.s32.totalorder %s13, 0
      %p33 = por %p31, %p32
      %p34 = scmp.ne.s32.totalorder %s23, %s26
      %p35 = scmp.eq.s32.totalorder %s18, 1
      %p36 = por %p34, %p35
      %p37 = scmp.ne.s32.totalorder %s26, %s27
      %p38 = scmp.eq.s32.totalorder %s18, 0
      %p39 = por %p37, %p38
      %p40 = scmp.ne.s32.totalorder %s26, %s27
      %p41 = scmp.eq.s32.totalorder %s19, 1
      %p42 = por %p40, %p41
      %p44 = scmp.ne.s32.totalorder %s27, %s43
      %p45 = scmp.eq.s32.totalorder %s19, 0
      %p46 = por %p44, %p45
      %s48 = sadd.s32 %s47, 1
      %p51 = scmp.eq.s32.totalorder %s13, 1
      %p52 = scmp.ne.s32.totalorder %s47, %s49
      %p53 = scmp.eq.s32.totalorder %s13, 0
      %p54 = por %p52, %p53
      %p55 = scmp.ne.s32.totalorder %s47, %s49
      %p56 = scmp.eq.s32.totalorder %s18, 1
      %p57 = por %p55, %p56
      %p58 = scmp.ne.s32.totalorder %s49, %s50
      %p59 = scmp.eq.s32.totalorder %s18, 0
      %p60 = por %p58, %p59
      %p61 = scmp.ne.s32.totalorder %s49, %s50
      %p62 = scmp.eq.s32.totalorder %s19, 1
      %p63 = por %p61, %p62
      %p65 = scmp.ne.s32.totalorder %s50, %s64
      %p66 = scmp.eq.s32.totalorder %s19, 0
      %p67 = por %p65, %p66
      %s69 = sadd.s32 %s68, 1
      %p72 = scmp.eq.s32.totalorder %s13, 1
      %p73 = scmp.ne.s32.totalorder %s68, %s70
      %p74 = scmp.eq.s32.totalorder %s13, 0
      %p75 = por %p73, %p74
      %p76 = scmp.ne.s32.totalorder %s68, %s70
      %p77 = scmp.eq.s32.totalorder %s18, 1
      %p78 = por %p76, %p77
      %p79 = scmp.ne.s32.totalorder %s70, %s71
      %p80 = scmp.eq.s32.totalorder %s18, 0
      %p81 = por %p79, %p80
      %p82 = scmp.ne.s32.totalorder %s70, %s71
      %p83 = scmp.eq.s32.totalorder %s19, 1
      %p84 = por %p82, %p83
      %p86 = scmp.ne.s32.totalorder %s71, %s85
      %p87 = scmp.eq.s32.totalorder %s19, 0
      %p88 = por %p86, %p87
      %s89 = ssub.s32 %s13, %s20
      %p90 = scmp.eq.s32.totalorder %s89, 0
      %s92 = sadd.s32 %s91, 1
      %s93 = scalar_select %p90, %s91, %s92
      %p96 = pneg %p90
      %p97 = scmp.eq.s32.totalorder %s13, 1
      %p98 = por %p96, %p97
      %p99 = scmp.ne.s32.totalorder %s91, %s94
      %p100 = scmp.eq.s32.totalorder %s13, 0
      %p101 = por %p99, %p100
      %p102 = scmp.ne.s32.totalorder %s91, %s94
      %p103 = scmp.eq.s32.totalorder %s18, 1
      %p104 = por %p102, %p103
      %p105 = scmp.ne.s32.totalorder %s94, %s95
      %p106 = scmp.eq.s32.totalorder %s18, 0
      %p107 = por %p105, %p106
      %p108 = scmp.ne.s32.totalorder %s94, %s95
      %p109 = scmp.eq.s32.totalorder %s19, 1
      %p110 = por %p108, %p109
      %p112 = scmp.ne.s32.totalorder %s95, %s111
      %p113 = scmp.eq.s32.totalorder %s19, 0
      %p114 = por %p112, %p113
      %p115 = scmp.le.s32.totalorder 1, %s13
      %p116 = scmp.lt.s32.totalorder %s13, 3
      %p117 = pnand %p115, %p116
      %p118 = pneg %p117
      // Predicated region
      $region9: #{tpu_custom_call.1} parent=5 // pred_check
        _
      $region10: #{tpu_custom_call.1} parent=5 // pred_check_branch
        %120 = sbr.rel (%p117) target = $region12
      $region11: #{tpu_custom_call.1} parent=5 // pred_region
        %s121 = ssub.s32 %s13, 1
        // Predicated region
        $region13: #{tpu_custom_call.1} parent=11 // pred_check
          %p122 = pneg %p60
        $region14: #{tpu_custom_call.1} parent=11 // pred_check_branch
          %124 = sbr.rel (%p122) target = $region16
        $region15: #{tpu_custom_call.1} parent=11 // pred_region
          %s126 = ssub.s32 7680, 7680
          %127 = vsyncadd [#allocation3], %s126
          %s128 = sshll.u32 [#allocation2], 4
          %s129 = int_to_ptr.vmem [resolvable:$true] %s128
          %134 = dma.hbm_to_vmem [thread:$0]  %s1, 7680, %s129, [#allocation3], 128, 128, 8
        $region16: #{tpu_custom_call.1} parent=11 // pred_fallthru
          _
        // Predicated region
        $region17: #{tpu_custom_call.1} parent=11 // pred_check
          %p135 = pneg %p81
        $region18: #{tpu_custom_call.1} parent=11 // pred_check_branch
          %137 = sbr.rel (%p135) target = $region20
        $region19: #{tpu_custom_call.1} parent=11 // pred_region
          _
        $region20: #{tpu_custom_call.1} parent=11 // pred_fallthru
          _
      $region12: #{tpu_custom_call.1} parent=5 // pred_fallthru
        _
      %p138 = scmp.lt.s32.totalorder %s13, 2
      // Predicated region
      $region21: #{tpu_custom_call.1} parent=5 // pred_check
        %p139 = pneg %p138
      $region22: #{tpu_custom_call.1} parent=5 // pred_check_branch
        %141 = sbr.rel (%p139) target = $region24
      $region23: #{tpu_custom_call.1} parent=5 // pred_region
        // Predicated region
        $region25: #{tpu_custom_call.1} parent=23 // pred_check
          %p142 = pneg %p33
        $region26: #{tpu_custom_call.1} parent=23 // pred_check_branch
          %144 = sbr.rel (%p142) target = $region28
        $region27: #{tpu_custom_call.1} parent=23 // pred_region
          %s145 = smul.u32 8, %s13
          %p146 = scmp.lt.s32.totalorder %s145, 15
          %s147 = scalar_select %p146, %s145, 15
          %s148 = smul.addr %s147, 2
          %s149 = smul.addr %s148, 8
          %s150 = scalar_lea.vmem %s0, %s149
          %s151 = smul.u32 8, %s13
        $region28: #{tpu_custom_call.1} parent=23 // pred_fallthru
          _
      $region24: #{tpu_custom_call.1} parent=5 // pred_fallthru
        _
      %p152 = scmp.le.s32.totalorder 1, %s13
      %p153 = scmp.lt.s32.totalorder %s13, 3
      %p154 = pnand %p152, %p153
      %p155 = pneg %p154
      // Predicated region
      $region29: #{tpu_custom_call.1} parent=5 // pred_check
        _
      $region30: #{tpu_custom_call.1} parent=5 // pred_check_branch
        %157 = sbr.rel (%p154) target = $region32
      $region31: #{tpu_custom_call.1} parent=5 // pred_region
        %s158 = ssub.s32 %s13, 1
        // Predicated region
        $region33: #{tpu_custom_call.1} parent=31 // pred_check
          %p159 = pneg %p60
        $region34: #{tpu_custom_call.1} parent=31 // pred_check_branch
          %161 = sbr.rel (%p159) target = $region36
        $region35: #{tpu_custom_call.1} parent=31 // pred_region
          %162 = dma.done [#allocation3], 7680
        $region36: #{tpu_custom_call.1} parent=31 // pred_fallthru
          _
        %s163 = smul.u32 8, %s18
        %p164 = scmp.lt.s32.totalorder %s163, 15
        %s165 = scalar_select %p164, %s163, 15
        %s166 = smul.addr %s165, 2
        %s167 = smul.addr %s166, 8
        %s168 = scalar_lea.vmem %s0, %s167
        %p169 = pneg %p39
        %p170 = pneg %p36
        %p171 = pneg %p60
        %p172 = pneg %p57
        %p173 = pneg %p81
        %p174 = pneg %p78
        %p175 = pneg %p107
        %p176 = pneg %p104
        %s177 = sand.u32 %s94, 1
        %s178 = scalar_lea.sflag [#allocation4], %s177
        %s179 = sand.u32 %s94, 1
        %s180 = smul.addr %s179, 8
        %s181 = scalar_lea.vmem [#allocation5], %s180
        %s182 = smul.u32 8, %s18
        %p183 = scmp.lt.s32.totalorder %s182, 15
        %s184 = scalar_select %p183, %s182, 15
        %s185 = smul.addr %s184, 2
        %s186 = smul.addr %s185, 8
        %s187 = scalar_lea.vmem %s0, %s186
        %s188 = smul.u32 8, %s18
        %v189 = vld [vmem:[%s187] sm:$0xff]
        %v190 = vld [vmem:[%s187 + $0x8] sm:$0xff]
        %v191 = vld [vmem:[%s187 + $0x10] sm:$0xff]
        %v192 = vld [vmem:[%s187 + $0x18] sm:$0xff]
        %v193 = vld [vmem:[%s187 + $0x20] sm:$0xff]
        %v194 = vld [vmem:[%s187 + $0x28] sm:$0xff]
        %v195 = vld [vmem:[%s187 + $0x30] sm:$0xff]
        %v196 = vld [vmem:[%s187 + $0x38] sm:$0xff]
        %v197 = vld [vmem:[%s187 + $0x40] sm:$0xff]
        %v198 = vld [vmem:[%s187 + $0x48] sm:$0xff]
        %v199 = vld [vmem:[%s187 + $0x50] sm:$0xff]
        %v200 = vld [vmem:[%s187 + $0x58] sm:$0xff]
        %v201 = vld [vmem:[%s187 + $0x60] sm:$0xff]
        %v202 = vld [vmem:[%s187 + $0x68] sm:$0xff]
        %v203 = vld [vmem:[%s187 + $0x70] sm:$0xff]
        %v204 = vld [vmem:[%s187 + $0x78] sm:$0xff]
        %v205 = vld [vmem:[#allocation2] sm:$0xff]
        %v206 = vld [vmem:[#allocation2 + $0x8] sm:$0xff]
        %v207 = vld [vmem:[#allocation2 + $0x10] sm:$0xff]
        %v208 = vld [vmem:[#allocation2 + $0x18] sm:$0xff]
        %v209 = vld [vmem:[#allocation2 + $0x20] sm:$0xf]
        %v210 = vld [vmem:[%s2] sm:$0x1]
        %vm227 = vcmask 1041408
        %v228 = vrot.slane %v189, 6
        %v229 = vrot.slane %v190, 6
        %v230 = vsel %vm227, %v228, %v229
        %v231 = vrot.slane %v191, 6
        %v232 = vrot.slane %v192, 6
        %v233 = vsel %vm227, %v231, %v232
        %v234 = vrot.slane %v193, 6
        %v235 = vrot.slane %v194, 6
        %v236 = vsel %vm227, %v234, %v235
        %v237 = vrot.slane %v195, 6
        %v238 = vrot.slane %v196, 6
        %v239 = vsel %vm227, %v237, %v238
        %v240 = vrot.slane %v197, 6
        %v241 = vrot.slane %v198, 6
        %v242 = vsel %vm227, %v240, %v241
        %v243 = vrot.slane %v199, 6
        %v244 = vrot.slane %v200, 6
        %v245 = vsel %vm227, %v243, %v244
        %v246 = vrot.slane %v201, 6
        %v247 = vrot.slane %v202, 6
        %v248 = vsel %vm227, %v246, %v247
        %v249 = vrot.slane %v203, 6
        %v250 = vrot.slane %v204, 6
        %v251 = vsel %vm227, %v249, %v250
        %v268 = vsel %vm227, 0.0, %v228
        %v269 = vsel %vm227, 0.0, %v231
        %v270 = vsel %vm227, 0.0, %v234
        %v271 = vsel %vm227, 0.0, %v237
        %v272 = vsel %vm227, 0.0, %v240
        %v273 = vsel %vm227, 0.0, %v243
        %v274 = vsel %vm227, 0.0, %v246
        %v275 = vsel %vm227, 0.0, %v249
        %vm284 = vcmask 1046528
        %v285 = vrot.slane %v268, 1
        %v286 = vrot.slane %v230, 1
        %v287 = vsel %vm284, %v285, %v286
        %v288 = vrot.slane %v229, 1
        %v289 = vsel %vm284, %v286, %v288
        %v290 = vrot.slane %v269, 1
        %v291 = vrot.slane %v233, 1
        %v292 = vsel %vm284, %v290, %v291
        %v293 = vrot.slane %v232, 1
        %v294 = vsel %vm284, %v291, %v293
        %v295 = vrot.slane %v270, 1
        %v296 = vrot.slane %v236, 1
        %v297 = vsel %vm284, %v295, %v296
        %v298 = vrot.slane %v235, 1
        %v299 = vsel %vm284, %v296, %v298
        %v300 = vrot.slane %v271, 1
        %v301 = vrot.slane %v239, 1
        %v302 = vsel %vm284, %v300, %v301
        %v303 = vrot.slane %v238, 1
        %v304 = vsel %vm284, %v301, %v303
        %v305 = vrot.slane %v272, 1
        %v306 = vrot.slane %v242, 1
        %v307 = vsel %vm284, %v305, %v306
        %v308 = vrot.slane %v241, 1
        %v309 = vsel %vm284, %v306, %v308
        %v310 = vrot.slane %v273, 1
        %v311 = vrot.slane %v245, 1
        %v312 = vsel %vm284, %v310, %v311
        %v313 = vrot.slane %v244, 1
        %v314 = vsel %vm284, %v311, %v313
        %v315 = vrot.slane %v274, 1
        %v316 = vrot.slane %v248, 1
        %v317 = vsel %vm284, %v315, %v316
        %v318 = vrot.slane %v247, 1
        %v319 = vsel %vm284, %v316, %v318
        %v320 = vrot.slane %v275, 1
        %v321 = vrot.slane %v251, 1
        %v322 = vsel %vm284, %v320, %v321
        %v323 = vrot.slane %v250, 1
        %v324 = vsel %vm284, %v321, %v323
        %325 = vrot.lane.b32.xlu0 %v287, 12
        %v326 = vpop.permute.xlu0 %325
        %327 = vrot.lane.b32.xlu0 %v289, 12
        %v328 = vpop.permute.xlu0 %327
        %329 = vrot.lane.b32.xlu0 %v292, 12
        %v330 = vpop.permute.xlu0 %329
        %331 = vrot.lane.b32.xlu0 %v294, 12
        %v332 = vpop.permute.xlu0 %331
        %333 = vrot.lane.b32.xlu0 %v297, 12
        %v334 = vpop.permute.xlu0 %333
        %335 = vrot.lane.b32.xlu0 %v299, 12
        %v336 = vpop.permute.xlu0 %335
        %337 = vrot.lane.b32.xlu0 %v302, 12
        %v338 = vpop.permute.xlu0 %337
        %339 = vrot.lane.b32.xlu0 %v304, 12
        %v340 = vpop.permute.xlu0 %339
        %341 = vrot.lane.b32.xlu0 %v307, 12
        %v342 = vpop.permute.xlu0 %341
        %343 = vrot.lane.b32.xlu0 %v309, 12
        %v344 = vpop.permute.xlu0 %343
        %345 = vrot.lane.b32.xlu0 %v312, 12
        %v346 = vpop.permute.xlu0 %345
        %347 = vrot.lane.b32.xlu0 %v314, 12
        %v348 = vpop.permute.xlu0 %347
        %349 = vrot.lane.b32.xlu0 %v317, 12
        %v350 = vpop.permute.xlu0 %349
        %351 = vrot.lane.b32.xlu0 %v319, 12
        %v352 = vpop.permute.xlu0 %351
        %353 = vrot.lane.b32.xlu0 %v322, 12
        %v354 = vpop.permute.xlu0 %353
        %355 = vrot.lane.b32.xlu0 %v324, 12
        %v356 = vpop.permute.xlu0 %355
        %vm373 = vcmask 1045504
        %v374 = vrot.slane %v268, 2
        %v375 = vrot.slane %v230, 2
        %v376 = vsel %vm373, %v374, %v375
        %v377 = vrot.slane %v229, 2
        %v378 = vsel %vm373, %v375, %v377
        %v379 = vrot.slane %v269, 2
        %v380 = vrot.slane %v233, 2
        %v381 = vsel %vm373, %v379, %v380
        %v382 = vrot.slane %v232, 2
        %v383 = vsel %vm373, %v380, %v382
        %v384 = vrot.slane %v270, 2
        %v385 = vrot.slane %v236, 2
        %v386 = vsel %vm373, %v384, %v385
        %v387 = vrot.slane %v235, 2
        %v388 = vsel %vm373, %v385, %v387
        %v389 = vrot.slane %v271, 2
        %v390 = vrot.slane %v239, 2
        %v391 = vsel %vm373, %v389, %v390
        %v392 = vrot.slane %v238, 2
        %v393 = vsel %vm373, %v390, %v392
        %v394 = vrot.slane %v272, 2
        %v395 = vrot.slane %v242, 2
        %v396 = vsel %vm373, %v394, %v395
        %v397 = vrot.slane %v241, 2
        %v398 = vsel %vm373, %v395, %v397
        %v399 = vrot.slane %v273, 2
        %v400 = vrot.slane %v245, 2
        %v401 = vsel %vm373, %v399, %v400
        %v402 = vrot.slane %v244, 2
        %v403 = vsel %vm373, %v400, %v402
        %v404 = vrot.slane %v274, 2
        %v405 = vrot.slane %v248, 2
        %v406 = vsel %vm373, %v404, %v405
        %v407 = vrot.slane %v247, 2
        %v408 = vsel %vm373, %v405, %v407
        %v409 = vrot.slane %v275, 2
        %v410 = vrot.slane %v251, 2
        %v411 = vsel %vm373, %v409, %v410
        %v412 = vrot.slane %v250, 2
        %v413 = vsel %vm373, %v410, %v412
        %414 = vrot.lane.b32.xlu0 %v376, 24
        %v415 = vpop.permute.xlu0 %414
        %416 = vrot.lane.b32.xlu0 %v378, 24
        %v417 = vpop.permute.xlu0 %416
        %418 = vrot.lane.b32.xlu0 %v381, 24
        %v419 = vpop.permute.xlu0 %418
        %420 = vrot.lane.b32.xlu0 %v383, 24
        %v421 = vpop.permute.xlu0 %420
        %422 = vrot.lane.b32.xlu0 %v386, 24
        %v423 = vpop.permute.xlu0 %422
        %424 = vrot.lane.b32.xlu0 %v388, 24
        %v425 = vpop.permute.xlu0 %424
        %426 = vrot.lane.b32.xlu0 %v391, 24
        %v427 = vpop.permute.xlu0 %426
        %428 = vrot.lane.b32.xlu0 %v393, 24
        %v429 = vpop.permute.xlu0 %428
        %430 = vrot.lane.b32.xlu0 %v396, 24
        %v431 = vpop.permute.xlu0 %430
        %432 = vrot.lane.b32.xlu0 %v398, 24
        %v433 = vpop.permute.xlu0 %432
        %434 = vrot.lane.b32.xlu0 %v401, 24
        %v435 = vpop.permute.xlu0 %434
        %436 = vrot.lane.b32.xlu0 %v403, 24
        %v437 = vpop.permute.xlu0 %436
        %438 = vrot.lane.b32.xlu0 %v406, 24
        %v439 = vpop.permute.xlu0 %438
        %440 = vrot.lane.b32.xlu0 %v408, 24
        %v441 = vpop.permute.xlu0 %440
        %442 = vrot.lane.b32.xlu0 %v411, 24
        %v443 = vpop.permute.xlu0 %442
        %444 = vrot.lane.b32.xlu0 %v413, 24
        %v445 = vpop.permute.xlu0 %444
        %vm462 = vcmask 97280
        %v463 = vsel %vm462, %v268, %v326
        %v464 = vsel %vm462, %v230, %v328
        %v465 = vsel %vm462, %v269, %v330
        %v466 = vsel %vm462, %v233, %v332
        %v467 = vsel %vm462, %v270, %v334
        %v468 = vsel %vm462, %v236, %v336
        %v469 = vsel %vm462, %v271, %v338
        %v470 = vsel %vm462, %v239, %v340
        %v471 = vsel %vm462, %v272, %v342
        %v472 = vsel %vm462, %v242, %v344
        %v473 = vsel %vm462, %v273, %v346
        %v474 = vsel %vm462, %v245, %v348
        %v475 = vsel %vm462, %v274, %v350
        %v476 = vsel %vm462, %v248, %v352
        %v477 = vsel %vm462, %v275, %v354
        %v478 = vsel %vm462, %v251, %v356
        %vm479 = vcmask 195584
        %v480 = vsel %vm479, %v463, %v415
        %v481 = vsel %vm479, %v464, %v417
        %v482 = vsel %vm479, %v465, %v419
        %v483 = vsel %vm479, %v466, %v421
        %v484 = vsel %vm479, %v467, %v423
        %v485 = vsel %vm479, %v468, %v425
        %v486 = vsel %vm479, %v469, %v427
        %v487 = vsel %vm479, %v470, %v429
        %v488 = vsel %vm479, %v471, %v431
        %v489 = vsel %vm479, %v472, %v433
        %v490 = vsel %vm479, %v473, %v435
        %v491 = vsel %vm479, %v474, %v437
        %v492 = vsel %vm479, %v475, %v439
        %v493 = vsel %vm479, %v476, %v441
        %v494 = vsel %vm479, %v477, %v443
        %v495 = vsel %vm479, %v478, %v445
        %v496 = vlaneseq
        %v497 = vshrl.u32 %v496, 7
        %v498 = vsub.s32 0, %v497
        %v499 = vrot.slane %v210, %v498
        %vm500 = vcmask 293888
        %v502 = vsel %vm500, %v480, 0
        %v505 = vsel %vm500, %v481, 0
        %v508 = vsel %vm500, %v482, 0
        %v511 = vsel %vm500, %v483, 0
        %v514 = vsel %vm500, %v484, 0
        %v517 = vsel %vm500, %v485, 0
        %v520 = vsel %vm500, %v486, 0
        %v523 = vsel %vm500, %v487, 0
        %v526 = vsel %vm500, %v488, 0
        %v529 = vsel %vm500, %v489, 0
        %v532 = vsel %vm500, %v490, 0
        %v535 = vsel %vm500, %v491, 0
        %v538 = vsel %vm500, %v492, 0
        %v541 = vsel %vm500, %v493, 0
        %v544 = vsel %vm500, %v494, 0
        %v547 = vsel %vm500, %v495, 0
        %vm549 = vcmask 1043456
        %v551 = vsel %vm549, %v209, 0
        %553 = vmatprep.subr.mxu0 0.0
        %554 = vmatpush1.msra.mxu0 %v205
        %555 = vmatprep.subr.mxu0 0.0
        %556 = vmatpush1.msra.mxu0 %v206
        %557 = vmatprep.subr.mxu0 0.0
        %558 = vmatpush1.msra.mxu0 %v207
        %559 = vmatprep.subr.mxu0 0.0
        %560 = vmatpush1.msra.mxu0 %v208
        %561 = vmatprep.subr.mxu0 0.0
        %562 = vmatpush1.msra.mxu0 %v551
        %563 = vmatprep.subr.mxu0 0.0
        %564 = vmatpush1.msra.mxu0 0.0
        %565 = vmatprep.subr.mxu0 0.0
        %566 = vmatpush1.msra.mxu0 0.0
        %567 = vmatprep.subr.mxu0 0.0
        %568 = vmatpush1.msra.mxu0 0.0
        %569 = vmatprep.subr.mxu0 0.0
        %570 = vmatpush1.msra.mxu0 0.0
        %571 = vmatprep.subr.mxu0 0.0
        %572 = vmatpush1.msra.mxu0 0.0
        %573 = vmatprep.subr.mxu0 0.0
        %574 = vmatpush1.msra.mxu0 0.0
        %575 = vmatprep.subr.mxu0 0.0
        %576 = vmatpush1.msra.mxu0 0.0
        %577 = vmatprep.subr.mxu0 0.0
        %578 = vmatpush1.msra.mxu0 0.0
        %579 = vmatprep.subr.mxu0 0.0
        %580 = vmatpush1.msra.mxu0 0.0
        %581 = vmatprep.subr.mxu0 0.0
        %582 = vmatpush1.msra.mxu0 0.0
        %583 = vmatprep.subr.mxu0 0.0
        %584 = vmatpush1.msra.mxu0 0.0
        %585 = vmatprep.subr.mxu0 0.0
        %586 = vmatpush1.msra.mxu0 0.0
        %587 = vmatprep.subr.mxu0 0.0
        %588 = vmatpush1.msra.mxu0 0.0
        %589 = vmatprep.subr.mxu0 0.0
        %590 = vmatpush1.msra.mxu0 0.0
        %591 = vmatprep.subr.mxu0 0.0
        %592 = vmatpush1.msra.mxu0 0.0
        %593 = vmatprep.subr.mxu0 0.0
        %594 = vmatpush1.msra.mxu0 0.0
        %595 = vmatprep.subr.mxu0 0.0
        %596 = vmatpush1.msra.mxu0 0.0
        %597 = vmatprep.subr.mxu0 0.0
        %598 = vmatpush1.msra.mxu0 0.0
        %599 = vmatprep.subr.mxu0 0.0
        %600 = vmatpush1.msra.mxu0 0.0
        %601 = vmatprep.subr.mxu0 0.0
        %602 = vmatpush1.msra.mxu0 0.0
        %603 = vmatprep.subr.mxu0 0.0
        %604 = vmatpush1.msra.mxu0 0.0
        %605 = vmatprep.subr.mxu0 0.0
        %606 = vmatpush1.msra.mxu0 0.0
        %607 = vmatprep.subr.mxu0 0.0
        %608 = vmatpush1.msra.mxu0 0.0
        %609 = vmatprep.subr.mxu0 0.0
        %610 = vmatpush1.msra.mxu0 0.0
        %611 = vmatprep.subr.mxu0 0.0
        %612 = vmatpush1.msra.mxu0 0.0
        %613 = vmatprep.subr.mxu0 0.0
        %614 = vmatpush1.msra.mxu0 0.0
        %615 = vmatprep.subr.mxu0 0.0
        %616 = vmatpush1.msra.mxu0 0.0
        %617 = vmatprep.mubr.f32.mxu0 0.0
        %618 = vmatmul.mubr.f32.gmra.mrb[0].mxu0 %v502
        %v619 = vpop.f32.mrb[0].mxu0
        %v620 = vadd.f32 %v499, %v619
        %v621 = vpop.f32.mrb[0].mxu0
        %622 = vmatprep.mubr.f32.mxu0 0.0
        %623 = vmatmul.mubr.f32.gmra.mrb[0].mxu0 %v505
        %v624 = vpop.f32.mrb[0].mxu0
        %v625 = vadd.f32 %v499, %v624
        %v626 = vpop.f32.mrb[0].mxu0
        %627 = vmatprep.mubr.f32.mxu0 0.0
        %628 = vmatmul.mubr.f32.gmra.mrb[0].mxu0 %v508
        %v629 = vpop.f32.mrb[0].mxu0
        %v630 = vadd.f32 %v499, %v629
        %v631 = vpop.f32.mrb[0].mxu0
        %632 = vmatprep.mubr.f32.mxu0 0.0
        %633 = vmatmul.mubr.f32.gmra.mrb[0].mxu0 %v511
        %v634 = vpop.f32.mrb[0].mxu0
        %v635 = vadd.f32 %v499, %v634
        %v636 = vpop.f32.mrb[0].mxu0
        %637 = vmatprep.mubr.f32.mxu0 0.0
        %638 = vmatmul.mubr.f32.gmra.mrb[0].mxu0 %v514
        %v639 = vpop.f32.mrb[0].mxu0
        %v640 = vadd.f32 %v499, %v639
        %v641 = vpop.f32.mrb[0].mxu0
        %642 = vmatprep.mubr.f32.mxu0 0.0
        %643 = vmatmul.mubr.f32.gmra.mrb[0].mxu0 %v517
        %v644 = vpop.f32.mrb[0].mxu0
        %v645 = vadd.f32 %v499, %v644
        %v646 = vpop.f32.mrb[0].mxu0
        %647 = vmatprep.mubr.f32.mxu0 0.0
        %648 = vmatmul.mubr.f32.gmra.mrb[0].mxu0 %v520
        %v649 = vpop.f32.mrb[0].mxu0
        %v650 = vadd.f32 %v499, %v649
        %v651 = vpop.f32.mrb[0].mxu0
        %652 = vmatprep.mubr.f32.mxu0 0.0
        %653 = vmatmul.mubr.f32.gmra.mrb[0].mxu0 %v523
        %v654 = vpop.f32.mrb[0].mxu0
        %v655 = vadd.f32 %v499, %v654
        %v656 = vpop.f32.mrb[0].mxu0
        %657 = vmatprep.mubr.f32.mxu0 0.0
        %658 = vmatmul.mubr.f32.gmra.mrb[0].mxu0 %v526
        %v659 = vpop.f32.mrb[0].mxu0
        %v660 = vadd.f32 %v499, %v659
        %v661 = vpop.f32.mrb[0].mxu0
        %662 = vmatprep.mubr.f32.mxu0 0.0
        %663 = vmatmul.mubr.f32.gmra.mrb[0].mxu0 %v529
        %v664 = vpop.f32.mrb[0].mxu0
        %v665 = vadd.f32 %v499, %v664
        %v666 = vpop.f32.mrb[0].mxu0
        %667 = vmatprep.mubr.f32.mxu0 0.0
        %668 = vmatmul.mubr.f32.gmra.mrb[0].mxu0 %v532
        %v669 = vpop.f32.mrb[0].mxu0
        %v670 = vadd.f32 %v499, %v669
        %v671 = vpop.f32.mrb[0].mxu0
        %672 = vmatprep.mubr.f32.mxu0 0.0
        %673 = vmatmul.mubr.f32.gmra.mrb[0].mxu0 %v535
        %v674 = vpop.f32.mrb[0].mxu0
        %v675 = vadd.f32 %v499, %v674
        %v676 = vpop.f32.mrb[0].mxu0
        %677 = vmatprep.mubr.f32.mxu0 0.0
        %678 = vmatmul.mubr.f32.gmra.mrb[0].mxu0 %v538
        %v679 = vpop.f32.mrb[0].mxu0
        %v680 = vadd.f32 %v499, %v679
        %v681 = vpop.f32.mrb[0].mxu0
        %682 = vmatprep.mubr.f32.mxu0 0.0
        %683 = vmatmul.mubr.f32.gmra.mrb[0].mxu0 %v541
        %v684 = vpop.f32.mrb[0].mxu0
        %v685 = vadd.f32 %v499, %v684
        %v686 = vpop.f32.mrb[0].mxu0
        %687 = vmatprep.mubr.f32.mxu0 0.0
        %688 = vmatmul.mubr.f32.gmra.mrb[0].mxu0 %v544
        %v689 = vpop.f32.mrb[0].mxu0
        %v690 = vadd.f32 %v499, %v689
        %v691 = vpop.f32.mrb[0].mxu0
        %692 = vmatprep.mubr.f32.mxu0 0.0
        %693 = vmatmul.mubr.f32.gmra.mrb[0].mxu0 %v547
        %v694 = vpop.f32.mrb[0].mxu0
        %v695 = vadd.f32 %v499, %v694
        %v696 = vpop.f32.mrb[0].mxu0
        %697 = vdwg.mxu0
        %v698 = vmax.f32 %v620, 0.0
        %v699 = vmax.f32 %v625, 0.0
        %v700 = vmax.f32 %v630, 0.0
        %v701 = vmax.f32 %v635, 0.0
        %v702 = vmax.f32 %v640, 0.0
        %v703 = vmax.f32 %v645, 0.0
        %v704 = vmax.f32 %v650, 0.0
        %v705 = vmax.f32 %v655, 0.0
        %v706 = vmax.f32 %v660, 0.0
        %v707 = vmax.f32 %v665, 0.0
        %v708 = vmax.f32 %v670, 0.0
        %v709 = vmax.f32 %v675, 0.0
        %v710 = vmax.f32 %v680, 0.0
        %v711 = vmax.f32 %v685, 0.0
        %v712 = vmax.f32 %v690, 0.0
        %v713 = vmax.f32 %v695, 0.0
        %s714 = scalar_lea.vmem [#allocation2], 48
        %v715 = vld [vmem:[%s714] sm:$0xff]
        %v716 = vld [vmem:[%s714 + $0x8] sm:$0xff]
        %v717 = vld [vmem:[%s714 + $0x10] sm:$0xff]
        %v718 = vld [vmem:[%s714 + $0x18] sm:$0xff]
        %v719 = vld [vmem:[%s714 + $0x20] sm:$0xff]
        %v720 = vld [vmem:[%s714 + $0x28] sm:$0xff]
        %v721 = vld [vmem:[%s2 + $0x1] sm:$0x1]
        %v738 = vrot.slane %v698, 6
        %v739 = vrot.slane %v699, 6
        %v740 = vsel %vm227, %v738, %v739
        %v741 = vrot.slane %v700, 6
        %v742 = vrot.slane %v701, 6
        %v743 = vsel %vm227, %v741, %v742
        %v744 = vrot.slane %v702, 6
        %v745 = vrot.slane %v703, 6
        %v746 = vsel %vm227, %v744, %v745
        %v747 = vrot.slane %v704, 6
        %v748 = vrot.slane %v705, 6
        %v749 = vsel %vm227, %v747, %v748
        %v750 = vrot.slane %v706, 6
        %v751 = vrot.slane %v707, 6
        %v752 = vsel %vm227, %v750, %v751
        %v753 = vrot.slane %v708, 6
        %v754 = vrot.slane %v709, 6
        %v755 = vsel %vm227, %v753, %v754
        %v756 = vrot.slane %v710, 6
        %v757 = vrot.slane %v711, 6
        %v758 = vsel %vm227, %v756, %v757
        %v759 = vrot.slane %v712, 6
        %v760 = vrot.slane %v713, 6
        %v761 = vsel %vm227, %v759, %v760
        %v778 = vsel %vm227, 0.0, %v738
        %v779 = vsel %vm227, 0.0, %v741
        %v780 = vsel %vm227, 0.0, %v744
        %v781 = vsel %vm227, 0.0, %v747
        %v782 = vsel %vm227, 0.0, %v750
        %v783 = vsel %vm227, 0.0, %v753
        %v784 = vsel %vm227, 0.0, %v756
        %v785 = vsel %vm227, 0.0, %v759
        %v794 = vrot.slane %v778, 1
        %v795 = vrot.slane %v740, 1
        %v796 = vsel %vm284, %v794, %v795
        %v797 = vrot.slane %v739, 1
        %v798 = vsel %vm284, %v795, %v797
        %v799 = vrot.slane %v779, 1
        %v800 = vrot.slane %v743, 1
        %v801 = vsel %vm284, %v799, %v800
        %v802 = vrot.slane %v742, 1
        %v803 = vsel %vm284, %v800, %v802
        %v804 = vrot.slane %v780, 1
        %v805 = vrot.slane %v746, 1
        %v806 = vsel %vm284, %v804, %v805
        %v807 = vrot.slane %v745, 1
        %v808 = vsel %vm284, %v805, %v807
        %v809 = vrot.slane %v781, 1
        %v810 = vrot.slane %v749, 1
        %v811 = vsel %vm284, %v809, %v810
        %v812 = vrot.slane %v748, 1
        %v813 = vsel %vm284, %v810, %v812
        %v814 = vrot.slane %v782, 1
        %v815 = vrot.slane %v752, 1
        %v816 = vsel %vm284, %v814, %v815
        %v817 = vrot.slane %v751, 1
        %v818 = vsel %vm284, %v815, %v817
        %v819 = vrot.slane %v783, 1
        %v820 = vrot.slane %v755, 1
        %v821 = vsel %vm284, %v819, %v820
        %v822 = vrot.slane %v754, 1
        %v823 = vsel %vm284, %v820, %v822
        %v824 = vrot.slane %v784, 1
        %v825 = vrot.slane %v758, 1
        %v826 = vsel %vm284, %v824, %v825
        %v827 = vrot.slane %v757, 1
        %v828 = vsel %vm284, %v825, %v827
        %v829 = vrot.slane %v785, 1
        %v830 = vrot.slane %v761, 1
        %v831 = vsel %vm284, %v829, %v830
        %v832 = vrot.slane %v760, 1
        %v833 = vsel %vm284, %v830, %v832
        %834 = vrot.lane.b32.xlu0 %v796, 16
        %v835 = vpop.permute.xlu0 %834
        %836 = vrot.lane.b32.xlu0 %v798, 16
        %v837 = vpop.permute.xlu0 %836
        %838 = vrot.lane.b32.xlu0 %v801, 16
        %v839 = vpop.permute.xlu0 %838
        %840 = vrot.lane.b32.xlu0 %v803, 16
        %v841 = vpop.permute.xlu0 %840
        %842 = vrot.lane.b32.xlu0 %v806, 16
        %v843 = vpop.permute.xlu0 %842
        %844 = vrot.lane.b32.xlu0 %v808, 16
        %v845 = vpop.permute.xlu0 %844
        %846 = vrot.lane.b32.xlu0 %v811, 16
        %v847 = vpop.permute.xlu0 %846
        %848 = vrot.lane.b32.xlu0 %v813, 16
        %v849 = vpop.permute.xlu0 %848
        %850 = vrot.lane.b32.xlu0 %v816, 16
        %v851 = vpop.permute.xlu0 %850
        %852 = vrot.lane.b32.xlu0 %v818, 16
        %v853 = vpop.permute.xlu0 %852
        %854 = vrot.lane.b32.xlu0 %v821, 16
        %v855 = vpop.permute.xlu0 %854
        %856 = vrot.lane.b32.xlu0 %v823, 16
        %v857 = vpop.permute.xlu0 %856
        %858 = vrot.lane.b32.xlu0 %v826, 16
        %v859 = vpop.permute.xlu0 %858
        %860 = vrot.lane.b32.xlu0 %v828, 16
        %v861 = vpop.permute.xlu0 %860
        %862 = vrot.lane.b32.xlu0 %v831, 16
        %v863 = vpop.permute.xlu0 %862
        %864 = vrot.lane.b32.xlu0 %v833, 16
        %v865 = vpop.permute.xlu0 %864
        %v882 = vrot.slane %v778, 2
        %v883 = vrot.slane %v740, 2
        %v884 = vsel %vm373, %v882, %v883
        %v885 = vrot.slane %v739, 2
        %v886 = vsel %vm373, %v883, %v885
        %v887 = vrot.slane %v779, 2
        %v888 = vrot.slane %v743, 2
        %v889 = vsel %vm373, %v887, %v888
        %v890 = vrot.slane %v742, 2
        %v891 = vsel %vm373, %v888, %v890
        %v892 = vrot.slane %v780, 2
        %v893 = vrot.slane %v746, 2
        %v894 = vsel %vm373, %v892, %v893
        %v895 = vrot.slane %v745, 2
        %v896 = vsel %vm373, %v893, %v895
        %v897 = vrot.slane %v781, 2
        %v898 = vrot.slane %v749, 2
        %v899 = vsel %vm373, %v897, %v898
        %v900 = vrot.slane %v748, 2
        %v901 = vsel %vm373, %v898, %v900
        %v902 = vrot.slane %v782, 2
        %v903 = vrot.slane %v752, 2
        %v904 = vsel %vm373, %v902, %v903
        %v905 = vrot.slane %v751, 2
        %v906 = vsel %vm373, %v903, %v905
        %v907 = vrot.slane %v783, 2
        %v908 = vrot.slane %v755, 2
        %v909 = vsel %vm373, %v907, %v908
        %v910 = vrot.slane %v754, 2
        %v911 = vsel %vm373, %v908, %v910
        %v912 = vrot.slane %v784, 2
        %v913 = vrot.slane %v758, 2
        %v914 = vsel %vm373, %v912, %v913
        %v915 = vrot.slane %v757, 2
        %v916 = vsel %vm373, %v913, %v915
        %v917 = vrot.slane %v785, 2
        %v918 = vrot.slane %v761, 2
        %v919 = vsel %vm373, %v917, %v918
        %v920 = vrot.slane %v760, 2
        %v921 = vsel %vm373, %v918, %v920
        %922 = vrot.lane.b32.xlu0 %v884, 32
        %v923 = vpop.permute.xlu0 %922
        %924 = vrot.lane.b32.xlu0 %v886, 32
        %v925 = vpop.permute.xlu0 %924
        %926 = vrot.lane.b32.xlu0 %v889, 32
        %v927 = vpop.permute.xlu0 %926
        %928 = vrot.lane.b32.xlu0 %v891, 32
        %v929 = vpop.permute.xlu0 %928
        %930 = vrot.lane.b32.xlu0 %v894, 32
        %v931 = vpop.permute.xlu0 %930
        %932 = vrot.lane.b32.xlu0 %v896, 32
        %v933 = vpop.permute.xlu0 %932
        %934 = vrot.lane.b32.xlu0 %v899, 32
        %v935 = vpop.permute.xlu0 %934
        %936 = vrot.lane.b32.xlu0 %v901, 32
        %v937 = vpop.permute.xlu0 %936
        %938 = vrot.lane.b32.xlu0 %v904, 32
        %v939 = vpop.permute.xlu0 %938
        %940 = vrot.lane.b32.xlu0 %v906, 32
        %v941 = vpop.permute.xlu0 %940
        %942 = vrot.lane.b32.xlu0 %v909, 32
        %v943 = vpop.permute.xlu0 %942
        %944 = vrot.lane.b32.xlu0 %v911, 32
        %v945 = vpop.permute.xlu0 %944
        %946 = vrot.lane.b32.xlu0 %v914, 32
        %v947 = vpop.permute.xlu0 %946
        %948 = vrot.lane.b32.xlu0 %v916, 32
        %v949 = vpop.permute.xlu0 %948
        %950 = vrot.lane.b32.xlu0 %v919, 32
        %v951 = vpop.permute.xlu0 %950
        %952 = vrot.lane.b32.xlu0 %v921, 32
        %v953 = vpop.permute.xlu0 %952
        %vm970 = vcmask 130048
        %v971 = vsel %vm970, %v778, %v835
        %v972 = vsel %vm970, %v740, %v837
        %v973 = vsel %vm970, %v779, %v839
        %v974 = vsel %vm970, %v743, %v841
        %v975 = vsel %vm970, %v780, %v843
        %v976 = vsel %vm970, %v746, %v845
        %v977 = vsel %vm970, %v781, %v847
        %v978 = vsel %vm970, %v749, %v849
        %v979 = vsel %vm970, %v782, %v851
        %v980 = vsel %vm970, %v752, %v853
        %v981 = vsel %vm970, %v783, %v855
        %v982 = vsel %vm970, %v755, %v857
        %v983 = vsel %vm970, %v784, %v859
        %v984 = vsel %vm970, %v758, %v861
        %v985 = vsel %vm970, %v785, %v863
        %v986 = vsel %vm970, %v761, %v865
        %vm987 = vcmask 261120
        %v988 = vsel %vm987, %v971, %v923
        %v989 = vsel %vm987, %v972, %v925
        %v990 = vsel %vm987, %v973, %v927
        %v991 = vsel %vm987, %v974, %v929
        %v992 = vsel %vm987, %v975, %v931
        %v993 = vsel %vm987, %v976, %v933
        %v994 = vsel %vm987, %v977, %v935
        %v995 = vsel %vm987, %v978, %v937
        %v996 = vsel %vm987, %v979, %v939
        %v997 = vsel %vm987, %v980, %v941
        %v998 = vsel %vm987, %v981, %v943
        %v999 = vsel %vm987, %v982, %v945
        %v1000 = vsel %vm987, %v983, %v947
        %v1001 = vsel %vm987, %v984, %v949
        %v1002 = vsel %vm987, %v985, %v951
        %v1003 = vsel %vm987, %v986, %v953
        %v1004 = vlaneseq
        %v1005 = vshrl.u32 %v1004, 7
        %v1006 = vsub.s32 0, %v1005
        %v1007 = vrot.slane %v721, %v1006
        %vm1008 = vcmask 392192
        %v1010 = vsel %vm1008, %v988, 0
        %v1013 = vsel %vm1008, %v989, 0
        %v1016 = vsel %vm1008, %v990, 0
        %v1019 = vsel %vm1008, %v991, 0
        %v1022 = vsel %vm1008, %v992, 0
        %v1025 = vsel %vm1008, %v993, 0
        %v1028 = vsel %vm1008, %v994, 0
        %v1031 = vsel %vm1008, %v995, 0
        %v1034 = vsel %vm1008, %v996, 0
        %v1037 = vsel %vm1008, %v997, 0
        %v1040 = vsel %vm1008, %v998, 0
        %v1043 = vsel %vm1008, %v999, 0
        %v1046 = vsel %vm1008, %v1000, 0
        %v1049 = vsel %vm1008, %v1001, 0
        %v1052 = vsel %vm1008, %v1002, 0
        %v1055 = vsel %vm1008, %v1003, 0
        %1057 = vmatprep.subr.mxu0 0.0
        %1058 = vmatpush1.msra.mxu0 %v715
        %1059 = vmatprep.subr.mxu0 0.0
        %1060 = vmatpush1.msra.mxu0 %v716
        %1061 = vmatprep.subr.mxu0 0.0
        %1062 = vmatpush1.msra.mxu0 %v717
        %1063 = vmatprep.subr.mxu0 0.0
        %1064 = vmatpush1.msra.mxu0 %v718
        %1065 = vmatprep.subr.mxu0 0.0
        %1066 = vmatpush1.msra.mxu0 %v719
        %1067 = vmatprep.subr.mxu0 0.0
        %1068 = vmatpush1.msra.mxu0 %v720
        %1069 = vmatprep.subr.mxu0 0.0
        %1070 = vmatpush1.msra.mxu0 0.0
        %1071 = vmatprep.subr.mxu0 0.0
        %1072 = vmatpush1.msra.mxu0 0.0
        %1073 = vmatprep.subr.mxu0 0.0
        %1074 = vmatpush1.msra.mxu0 0.0
        %1075 = vmatprep.subr.mxu0 0.0
        %1076 = vmatpush1.msra.mxu0 0.0
        %1077 = vmatprep.subr.mxu0 0.0
        %1078 = vmatpush1.msra.mxu0 0.0
        %1079 = vmatprep.subr.mxu0 0.0
        %1080 = vmatpush1.msra.mxu0 0.0
        %1081 = vmatprep.subr.mxu0 0.0
        %1082 = vmatpush1.msra.mxu0 0.0
        %1083 = vmatprep.subr.mxu0 0.0
        %1084 = vmatpush1.msra.mxu0 0.0
        %1085 = vmatprep.subr.mxu0 0.0
        %1086 = vmatpush1.msra.mxu0 0.0
        %1087 = vmatprep.subr.mxu0 0.0
        %1088 = vmatpush1.msra.mxu0 0.0
        %1089 = vmatprep.subr.mxu0 0.0
        %1090 = vmatpush1.msra.mxu0 0.0
        %1091 = vmatprep.subr.mxu0 0.0
        %1092 = vmatpush1.msra.mxu0 0.0
        %1093 = vmatprep.subr.mxu0 0.0
        %1094 = vmatpush1.msra.mxu0 0.0
        %1095 = vmatprep.subr.mxu0 0.0
        %1096 = vmatpush1.msra.mxu0 0.0
        %1097 = vmatprep.subr.mxu0 0.0
        %1098 = vmatpush1.msra.mxu0 0.0
        %1099 = vmatprep.subr.mxu0 0.0
        %1100 = vmatpush1.msra.mxu0 0.0
        %1101 = vmatprep.subr.mxu0 0.0
        %1102 = vmatpush1.msra.mxu0 0.0
        %1103 = vmatprep.subr.mxu0 0.0
        %1104 = vmatpush1.msra.mxu0 0.0
        %1105 = vmatprep.subr.mxu0 0.0
        %1106 = vmatpush1.msra.mxu0 0.0
        %1107 = vmatprep.subr.mxu0 0.0
        %1108 = vmatpush1.msra.mxu0 0.0
        %1109 = vmatprep.subr.mxu0 0.0
        %1110 = vmatpush1.msra.mxu0 0.0
        %1111 = vmatprep.subr.mxu0 0.0
        %1112 = vmatpush1.msra.mxu0 0.0
        %1113 = vmatprep.subr.mxu0 0.0
        %1114 = vmatpush1.msra.mxu0 0.0
        %1115 = vmatprep.subr.mxu0 0.0
        %1116 = vmatpush1.msra.mxu0 0.0
        %1117 = vmatprep.subr.mxu0 0.0
        %1118 = vmatpush1.msra.mxu0 0.0
        %1119 = vmatprep.subr.mxu0 0.0
        %1120 = vmatpush1.msra.mxu0 0.0
        %1121 = vmatprep.mubr.f32.mxu0 0.0
        %1122 = vmatmul.mubr.f32.gmra.mrb[0].mxu0 %v1010
        %v1123 = vpop.f32.mrb[0].mxu0
        %v1124 = vadd.f32 %v1007, %v1123
        %v1125 = vpop.f32.mrb[0].mxu0
        %1126 = vmatprep.mubr.f32.mxu0 0.0
        %1127 = vmatmul.mubr.f32.gmra.mrb[0].mxu0 %v1013
        %v1128 = vpop.f32.mrb[0].mxu0
        %v1129 = vadd.f32 %v1007, %v1128
        %v1130 = vpop.f32.mrb[0].mxu0
        %1131 = vmatprep.mubr.f32.mxu0 0.0
        %1132 = vmatmul.mubr.f32.gmra.mrb[0].mxu0 %v1016
        %v1133 = vpop.f32.mrb[0].mxu0
        %v1134 = vadd.f32 %v1007, %v1133
        %v1135 = vpop.f32.mrb[0].mxu0
        %1136 = vmatprep.mubr.f32.mxu0 0.0
        %1137 = vmatmul.mubr.f32.gmra.mrb[0].mxu0 %v1019
        %v1138 = vpop.f32.mrb[0].mxu0
        %v1139 = vadd.f32 %v1007, %v1138
        %v1140 = vpop.f32.mrb[0].mxu0
        %1141 = vmatprep.mubr.f32.mxu0 0.0
        %1142 = vmatmul.mubr.f32.gmra.mrb[0].mxu0 %v1022
        %v1143 = vpop.f32.mrb[0].mxu0
        %v1144 = vadd.f32 %v1007, %v1143
        %v1145 = vpop.f32.mrb[0].mxu0
        %1146 = vmatprep.mubr.f32.mxu0 0.0
        %1147 = vmatmul.mubr.f32.gmra.mrb[0].mxu0 %v1025
        %v1148 = vpop.f32.mrb[0].mxu0
        %v1149 = vadd.f32 %v1007, %v1148
        %v1150 = vpop.f32.mrb[0].mxu0
        %1151 = vmatprep.mubr.f32.mxu0 0.0
        %1152 = vmatmul.mubr.f32.gmra.mrb[0].mxu0 %v1028
        %v1153 = vpop.f32.mrb[0].mxu0
        %v1154 = vadd.f32 %v1007, %v1153
        %v1155 = vpop.f32.mrb[0].mxu0
        %1156 = vmatprep.mubr.f32.mxu0 0.0
        %1157 = vmatmul.mubr.f32.gmra.mrb[0].mxu0 %v1031
        %v1158 = vpop.f32.mrb[0].mxu0
        %v1159 = vadd.f32 %v1007, %v1158
        %v1160 = vpop.f32.mrb[0].mxu0
        %1161 = vmatprep.mubr.f32.mxu0 0.0
        %1162 = vmatmul.mubr.f32.gmra.mrb[0].mxu0 %v1034
        %v1163 = vpop.f32.mrb[0].mxu0
        %v1164 = vadd.f32 %v1007, %v1163
        %v1165 = vpop.f32.mrb[0].mxu0
        %1166 = vmatprep.mubr.f32.mxu0 0.0
        %1167 = vmatmul.mubr.f32.gmra.mrb[0].mxu0 %v1037
        %v1168 = vpop.f32.mrb[0].mxu0
        %v1169 = vadd.f32 %v1007, %v1168
        %v1170 = vpop.f32.mrb[0].mxu0
        %1171 = vmatprep.mubr.f32.mxu0 0.0
        %1172 = vmatmul.mubr.f32.gmra.mrb[0].mxu0 %v1040
        %v1173 = vpop.f32.mrb[0].mxu0
        %v1174 = vadd.f32 %v1007, %v1173
        %v1175 = vpop.f32.mrb[0].mxu0
        %1176 = vmatprep.mubr.f32.mxu0 0.0
        %1177 = vmatmul.mubr.f32.gmra.mrb[0].mxu0 %v1043
        %v1178 = vpop.f32.mrb[0].mxu0
        %v1179 = vadd.f32 %v1007, %v1178
        %v1180 = vpop.f32.mrb[0].mxu0
        %1181 = vmatprep.mubr.f32.mxu0 0.0
        %1182 = vmatmul.mubr.f32.gmra.mrb[0].mxu0 %v1046
        %v1183 = vpop.f32.mrb[0].mxu0
        %v1184 = vadd.f32 %v1007, %v1183
        %v1185 = vpop.f32.mrb[0].mxu0
        %1186 = vmatprep.mubr.f32.mxu0 0.0
        %1187 = vmatmul.mubr.f32.gmra.mrb[0].mxu0 %v1049
        %v1188 = vpop.f32.mrb[0].mxu0
        %v1189 = vadd.f32 %v1007, %v1188
        %v1190 = vpop.f32.mrb[0].mxu0
        %1191 = vmatprep.mubr.f32.mxu0 0.0
        %1192 = vmatmul.mubr.f32.gmra.mrb[0].mxu0 %v1052
        %v1193 = vpop.f32.mrb[0].mxu0
        %v1194 = vadd.f32 %v1007, %v1193
        %v1195 = vpop.f32.mrb[0].mxu0
        %1196 = vmatprep.mubr.f32.mxu0 0.0
        %1197 = vmatmul.mubr.f32.gmra.mrb[0].mxu0 %v1055
        %v1198 = vpop.f32.mrb[0].mxu0
        %v1199 = vadd.f32 %v1007, %v1198
        %v1200 = vpop.f32.mrb[0].mxu0
        %1201 = vdwg.mxu0
        %v1202 = vmax.f32 %v1124, 0.0
        %v1203 = vmax.f32 %v1129, 0.0
        %v1204 = vmax.f32 %v1134, 0.0
        %v1205 = vmax.f32 %v1139, 0.0
        %v1206 = vmax.f32 %v1144, 0.0
        %v1207 = vmax.f32 %v1149, 0.0
        %v1208 = vmax.f32 %v1154, 0.0
        %v1209 = vmax.f32 %v1159, 0.0
        %v1210 = vmax.f32 %v1164, 0.0
        %v1211 = vmax.f32 %v1169, 0.0
        %v1212 = vmax.f32 %v1174, 0.0
        %v1213 = vmax.f32 %v1179, 0.0
        %v1214 = vmax.f32 %v1184, 0.0
        %v1215 = vmax.f32 %v1189, 0.0
        %v1216 = vmax.f32 %v1194, 0.0
        %v1217 = vmax.f32 %v1199, 0.0
        %s1218 = scalar_lea.vmem [#allocation2], 96
        %v1219 = vld [vmem:[%s1218] sm:$0xff]
        %v1220 = vld [vmem:[%s1218 + $0x8] sm:$0xf]
        %v1221 = vld [vmem:[%s2 + $0x2] sm:$0x1]
        %v1222 = vlaneseq
        %v1223 = vshrl.u32 %v1222, 7
        %v1224 = vsub.s32 0, %v1223
        %v1225 = vrot.slane %v1221, %v1224
        %v1226 = vsel %vm462, %v189, 0
        %v1228 = vsel %vm462, %v190, 0
        %v1230 = vsel %vm462, %v191, 0
        %v1232 = vsel %vm462, %v192, 0
        %v1234 = vsel %vm462, %v193, 0
        %v1236 = vsel %vm462, %v194, 0
        %v1238 = vsel %vm462, %v195, 0
        %v1240 = vsel %vm462, %v196, 0
        %v1242 = vsel %vm462, %v197, 0
        %v1244 = vsel %vm462, %v198, 0
        %v1246 = vsel %vm462, %v199, 0
        %v1248 = vsel %vm462, %v200, 0
        %v1250 = vsel %vm462, %v201, 0
        %v1252 = vsel %vm462, %v202, 0
        %v1254 = vsel %vm462, %v203, 0
        %v1256 = vsel %vm462, %v204, 0
        %v1259 = vsel %vm549, %v1220, 0
        %1261 = vmatprep.subr.mxu0 0.0
        %1262 = vmatpush1.msra.mxu0 %v1219
        %1263 = vmatprep.subr.mxu0 0.0
        %1264 = vmatpush1.msra.mxu0 %v1259
        %1265 = vmatprep.subr.mxu0 0.0
        %1266 = vmatpush1.msra.mxu0 0.0
        %1267 = vmatprep.subr.mxu0 0.0
        %1268 = vmatpush1.msra.mxu0 0.0
        %1269 = vmatprep.subr.mxu0 0.0
        %1270 = vmatpush1.msra.mxu0 0.0
        %1271 = vmatprep.subr.mxu0 0.0
        %1272 = vmatpush1.msra.mxu0 0.0
        %1273 = vmatprep.subr.mxu0 0.0
        %1274 = vmatpush1.msra.mxu0 0.0
        %1275 = vmatprep.subr.mxu0 0.0
        %1276 = vmatpush1.msra.mxu0 0.0
        %1277 = vmatprep.subr.mxu0 0.0
        %1278 = vmatpush1.msra.mxu0 0.0
        %1279 = vmatprep.subr.mxu0 0.0
        %1280 = vmatpush1.msra.mxu0 0.0
        %1281 = vmatprep.subr.mxu0 0.0
        %1282 = vmatpush1.msra.mxu0 0.0
        %1283 = vmatprep.subr.mxu0 0.0
        %1284 = vmatpush1.msra.mxu0 0.0
        %1285 = vmatprep.subr.mxu0 0.0
        %1286 = vmatpush1.msra.mxu0 0.0
        %1287 = vmatprep.subr.mxu0 0.0
        %1288 = vmatpush1.msra.mxu0 0.0
        %1289 = vmatprep.subr.mxu0 0.0
        %1290 = vmatpush1.msra.mxu0 0.0
        %1291 = vmatprep.subr.mxu0 0.0
        %1292 = vmatpush1.msra.mxu0 0.0
        %1293 = vmatprep.subr.mxu0 0.0
        %1294 = vmatpush1.msra.mxu0 0.0
        %1295 = vmatprep.subr.mxu0 0.0
        %1296 = vmatpush1.msra.mxu0 0.0
        %1297 = vmatprep.subr.mxu0 0.0
        %1298 = vmatpush1.msra.mxu0 0.0
        %1299 = vmatprep.subr.mxu0 0.0
        %1300 = vmatpush1.msra.mxu0 0.0
        %1301 = vmatprep.subr.mxu0 0.0
        %1302 = vmatpush1.msra.mxu0 0.0
        %1303 = vmatprep.subr.mxu0 0.0
        %1304 = vmatpush1.msra.mxu0 0.0
        %1305 = vmatprep.subr.mxu0 0.0
        %1306 = vmatpush1.msra.mxu0 0.0
        %1307 = vmatprep.subr.mxu0 0.0
        %1308 = vmatpush1.msra.mxu0 0.0
        %1309 = vmatprep.subr.mxu0 0.0
        %1310 = vmatpush1.msra.mxu0 0.0
        %1311 = vmatprep.subr.mxu0 0.0
        %1312 = vmatpush1.msra.mxu0 0.0
        %1313 = vmatprep.subr.mxu0 0.0
        %1314 = vmatpush1.msra.mxu0 0.0
        %1315 = vmatprep.subr.mxu0 0.0
        %1316 = vmatpush1.msra.mxu0 0.0
        %1317 = vmatprep.subr.mxu0 0.0
        %1318 = vmatpush1.msra.mxu0 0.0
        %1319 = vmatprep.subr.mxu0 0.0
        %1320 = vmatpush1.msra.mxu0 0.0
        %1321 = vmatprep.subr.mxu0 0.0
        %1322 = vmatpush1.msra.mxu0 0.0
        %1323 = vmatprep.subr.mxu0 0.0
        %1324 = vmatpush1.msra.mxu0 0.0
        %1325 = vmatprep.mubr.f32.mxu0 0.0
        %1326 = vmatmul.mubr.f32.gmra.mrb[0].mxu0 %v1226
        %v1327 = vpop.f32.mrb[0].mxu0
        %v1328 = vadd.f32 %v1225, %v1327
        %v1329 = vpop.f32.mrb[0].mxu0
        %1330 = vmatprep.mubr.f32.mxu0 0.0
        %1331 = vmatmul.mubr.f32.gmra.mrb[0].mxu0 %v1228
        %v1332 = vpop.f32.mrb[0].mxu0
        %v1333 = vadd.f32 %v1225, %v1332
        %v1334 = vpop.f32.mrb[0].mxu0
        %1335 = vmatprep.mubr.f32.mxu0 0.0
        %1336 = vmatmul.mubr.f32.gmra.mrb[0].mxu0 %v1230
        %v1337 = vpop.f32.mrb[0].mxu0
        %v1338 = vadd.f32 %v1225, %v1337
        %v1339 = vpop.f32.mrb[0].mxu0
        %1340 = vmatprep.mubr.f32.mxu0 0.0
        %1341 = vmatmul.mubr.f32.gmra.mrb[0].mxu0 %v1232
        %v1342 = vpop.f32.mrb[0].mxu0
        %v1343 = vadd.f32 %v1225, %v1342
        %v1344 = vpop.f32.mrb[0].mxu0
        %1345 = vmatprep.mubr.f32.mxu0 0.0
        %1346 = vmatmul.mubr.f32.gmra.mrb[0].mxu0 %v1234
        %v1347 = vpop.f32.mrb[0].mxu0
        %v1348 = vadd.f32 %v1225, %v1347
        %v1349 = vpop.f32.mrb[0].mxu0
        %1350 = vmatprep.mubr.f32.mxu0 0.0
        %1351 = vmatmul.mubr.f32.gmra.mrb[0].mxu0 %v1236
        %v1352 = vpop.f32.mrb[0].mxu0
        %v1353 = vadd.f32 %v1225, %v1352
        %v1354 = vpop.f32.mrb[0].mxu0
        %1355 = vmatprep.mubr.f32.mxu0 0.0
        %1356 = vmatmul.mubr.f32.gmra.mrb[0].mxu0 %v1238
        %v1357 = vpop.f32.mrb[0].mxu0
        %v1358 = vadd.f32 %v1225, %v1357
        %v1359 = vpop.f32.mrb[0].mxu0
        %1360 = vmatprep.mubr.f32.mxu0 0.0
        %1361 = vmatmul.mubr.f32.gmra.mrb[0].mxu0 %v1240
        %v1362 = vpop.f32.mrb[0].mxu0
        %v1363 = vadd.f32 %v1225, %v1362
        %v1364 = vpop.f32.mrb[0].mxu0
        %1365 = vmatprep.mubr.f32.mxu0 0.0
        %1366 = vmatmul.mubr.f32.gmra.mrb[0].mxu0 %v1242
        %v1367 = vpop.f32.mrb[0].mxu0
        %v1368 = vadd.f32 %v1225, %v1367
        %v1369 = vpop.f32.mrb[0].mxu0
        %1370 = vmatprep.mubr.f32.mxu0 0.0
        %1371 = vmatmul.mubr.f32.gmra.mrb[0].mxu0 %v1244
        %v1372 = vpop.f32.mrb[0].mxu0
        %v1373 = vadd.f32 %v1225, %v1372
        %v1374 = vpop.f32.mrb[0].mxu0
        %1375 = vmatprep.mubr.f32.mxu0 0.0
        %1376 = vmatmul.mubr.f32.gmra.mrb[0].mxu0 %v1246
        %v1377 = vpop.f32.mrb[0].mxu0
        %v1378 = vadd.f32 %v1225, %v1377
        %v1379 = vpop.f32.mrb[0].mxu0
        %1380 = vmatprep.mubr.f32.mxu0 0.0
        %1381 = vmatmul.mubr.f32.gmra.mrb[0].mxu0 %v1248
        %v1382 = vpop.f32.mrb[0].mxu0
        %v1383 = vadd.f32 %v1225, %v1382
        %v1384 = vpop.f32.mrb[0].mxu0
        %1385 = vmatprep.mubr.f32.mxu0 0.0
        %1386 = vmatmul.mubr.f32.gmra.mrb[0].mxu0 %v1250
        %v1387 = vpop.f32.mrb[0].mxu0
        %v1388 = vadd.f32 %v1225, %v1387
        %v1389 = vpop.f32.mrb[0].mxu0
        %1390 = vmatprep.mubr.f32.mxu0 0.0
        %1391 = vmatmul.mubr.f32.gmra.mrb[0].mxu0 %v1252
        %v1392 = vpop.f32.mrb[0].mxu0
        %v1393 = vadd.f32 %v1225, %v1392
        %v1394 = vpop.f32.mrb[0].mxu0
        %1395 = vmatprep.mubr.f32.mxu0 0.0
        %1396 = vmatmul.mubr.f32.gmra.mrb[0].mxu0 %v1254
        %v1397 = vpop.f32.mrb[0].mxu0
        %v1398 = vadd.f32 %v1225, %v1397
        %v1399 = vpop.f32.mrb[0].mxu0
        %1400 = vmatprep.mubr.f32.mxu0 0.0
        %1401 = vmatmul.mubr.f32.gmra.mrb[0].mxu0 %v1256
        %v1402 = vpop.f32.mrb[0].mxu0
        %v1403 = vadd.f32 %v1225, %v1402
        %v1404 = vpop.f32.mrb[0].mxu0
        %1405 = vdwg.mxu0
        %v1406 = vadd.f32 %v1202, %v1328
        %v1407 = vadd.f32 %v1203, %v1333
        %v1408 = vadd.f32 %v1204, %v1338
        %v1409 = vadd.f32 %v1205, %v1343
        %v1410 = vadd.f32 %v1206, %v1348
        %v1411 = vadd.f32 %v1207, %v1353
        %v1412 = vadd.f32 %v1208, %v1358
        %v1413 = vadd.f32 %v1209, %v1363
        %v1414 = vadd.f32 %v1210, %v1368
        %v1415 = vadd.f32 %v1211, %v1373
        %v1416 = vadd.f32 %v1212, %v1378
        %v1417 = vadd.f32 %v1213, %v1383
        %v1418 = vadd.f32 %v1214, %v1388
        %v1419 = vadd.f32 %v1215, %v1393
        %v1420 = vadd.f32 %v1216, %v1398
        %v1421 = vadd.f32 %v1217, %v1403
        %v1422 = vmax.f32 %v1406, 0.0
        %v1423 = vmax.f32 %v1407, 0.0
        %v1424 = vmax.f32 %v1408, 0.0
        %v1425 = vmax.f32 %v1409, 0.0
        %v1426 = vmax.f32 %v1410, 0.0
        %v1427 = vmax.f32 %v1411, 0.0
        %v1428 = vmax.f32 %v1412, 0.0
        %v1429 = vmax.f32 %v1413, 0.0
        %v1430 = vmax.f32 %v1414, 0.0
        %v1431 = vmax.f32 %v1415, 0.0
        %v1432 = vmax.f32 %v1416, 0.0
        %v1433 = vmax.f32 %v1417, 0.0
        %v1434 = vmax.f32 %v1418, 0.0
        %v1435 = vmax.f32 %v1419, 0.0
        %v1436 = vmax.f32 %v1420, 0.0
        %v1437 = vmax.f32 %v1421, 0.0
        %s1438 = scalar_lea.vmem [#allocation2], 144
        %v1439 = vld [vmem:[%s1438] sm:$0xff]
        %v1440 = vld [vmem:[%s1438 + $0x8] sm:$0xff]
        %v1441 = vld [vmem:[%s1438 + $0x10] sm:$0xff]
        %v1442 = vld [vmem:[%s1438 + $0x18] sm:$0xff]
        %v1443 = vld [vmem:[%s1438 + $0x20] sm:$0xff]
        %v1444 = vld [vmem:[%s1438 + $0x28] sm:$0xff]
        %v1445 = vld [vmem:[%s2 + $0x3] sm:$0x1]
        %v1462 = vrot.slane %v1422, 4
        %v1463 = vrot.slane %v1423, 4
        %v1464 = vsel %vm549, %v1462, %v1463
        %v1465 = vrot.slane %v1424, 4
        %v1466 = vrot.slane %v1425, 4
        %v1467 = vsel %vm549, %v1465, %v1466
        %v1468 = vrot.slane %v1426, 4
        %v1469 = vrot.slane %v1427, 4
        %v1470 = vsel %vm549, %v1468, %v1469
        %v1471 = vrot.slane %v1428, 4
        %v1472 = vrot.slane %v1429, 4
        %v1473 = vsel %vm549, %v1471, %v1472
        %v1474 = vrot.slane %v1430, 4
        %v1475 = vrot.slane %v1431, 4
        %v1476 = vsel %vm549, %v1474, %v1475
        %v1477 = vrot.slane %v1432, 4
        %v1478 = vrot.slane %v1433, 4
        %v1479 = vsel %vm549, %v1477, %v1478
        %v1480 = vrot.slane %v1434, 4
        %v1481 = vrot.slane %v1435, 4
        %v1482 = vsel %vm549, %v1480, %v1481
        %v1483 = vrot.slane %v1436, 4
        %v1484 = vrot.slane %v1437, 4
        %v1485 = vsel %vm549, %v1483, %v1484
        %v1502 = vsel %vm549, 0.0, %v1462
        %v1503 = vsel %vm549, 0.0, %v1465
        %v1504 = vsel %vm549, 0.0, %v1468
        %v1505 = vsel %vm549, 0.0, %v1471
        %v1506 = vsel %vm549, 0.0, %v1474
        %v1507 = vsel %vm549, 0.0, %v1477
        %v1508 = vsel %vm549, 0.0, %v1480
        %v1509 = vsel %vm549, 0.0, %v1483
        %v1518 = vrot.slane %v1502, 2
        %v1519 = vrot.slane %v1464, 2
        %v1520 = vsel %vm373, %v1518, %v1519
        %v1521 = vrot.slane %v1463, 2
        %v1522 = vsel %vm373, %v1519, %v1521
        %v1523 = vrot.slane %v1503, 2
        %v1524 = vrot.slane %v1467, 2
        %v1525 = vsel %vm373, %v1523, %v1524
        %v1526 = vrot.slane %v1466, 2
        %v1527 = vsel %vm373, %v1524, %v1526
        %v1528 = vrot.slane %v1504, 2
        %v1529 = vrot.slane %v1470, 2
        %v1530 = vsel %vm373, %v1528, %v1529
        %v1531 = vrot.slane %v1469, 2
        %v1532 = vsel %vm373, %v1529, %v1531
        %v1533 = vrot.slane %v1505, 2
        %v1534 = vrot.slane %v1473, 2
        %v1535 = vsel %vm373, %v1533, %v1534
        %v1536 = vrot.slane %v1472, 2
        %v1537 = vsel %vm373, %v1534, %v1536
        %v1538 = vrot.slane %v1506, 2
        %v1539 = vrot.slane %v1476, 2
        %v1540 = vsel %vm373, %v1538, %v1539
        %v1541 = vrot.slane %v1475, 2
        %v1542 = vsel %vm373, %v1539, %v1541
        %v1543 = vrot.slane %v1507, 2
        %v1544 = vrot.slane %v1479, 2
        %v1545 = vsel %vm373, %v1543, %v1544
        %v1546 = vrot.slane %v1478, 2
        %v1547 = vsel %vm373, %v1544, %v1546
        %v1548 = vrot.slane %v1508, 2
        %v1549 = vrot.slane %v1482, 2
        %v1550 = vsel %vm373, %v1548, %v1549
        %v1551 = vrot.slane %v1481, 2
        %v1552 = vsel %vm373, %v1549, %v1551
        %v1553 = vrot.slane %v1509, 2
        %v1554 = vrot.slane %v1485, 2
        %v1555 = vsel %vm373, %v1553, %v1554
        %v1556 = vrot.slane %v1484, 2
        %v1557 = vsel %vm373, %v1554, %v1556
        %1558 = vrot.lane.b32.xlu0 %v1520, 16
        %v1559 = vpop.permute.xlu0 %1558
        %1560 = vrot.lane.b32.xlu0 %v1522, 16
        %v1561 = vpop.permute.xlu0 %1560
        %1562 = vrot.lane.b32.xlu0 %v1525, 16
        %v1563 = vpop.permute.xlu0 %1562
        %1564 = vrot.lane.b32.xlu0 %v1527, 16
        %v1565 = vpop.permute.xlu0 %1564
        %1566 = vrot.lane.b32.xlu0 %v1530, 16
        %v1567 = vpop.permute.xlu0 %1566
        %1568 = vrot.lane.b32.xlu0 %v1532, 16
        %v1569 = vpop.permute.xlu0 %1568
        %1570 = vrot.lane.b32.xlu0 %v1535, 16
        %v1571 = vpop.permute.xlu0 %1570
        %1572 = vrot.lane.b32.xlu0 %v1537, 16
        %v1573 = vpop.permute.xlu0 %1572
        %1574 = vrot.lane.b32.xlu0 %v1540, 16
        %v1575 = vpop.permute.xlu0 %1574
        %1576 = vrot.lane.b32.xlu0 %v1542, 16
        %v1577 = vpop.permute.xlu0 %1576
        %1578 = vrot.lane.b32.xlu0 %v1545, 16
        %v1579 = vpop.permute.xlu0 %1578
        %1580 = vrot.lane.b32.xlu0 %v1547, 16
        %v1581 = vpop.permute.xlu0 %1580
        %1582 = vrot.lane.b32.xlu0 %v1550, 16
        %v1583 = vpop.permute.xlu0 %1582
        %1584 = vrot.lane.b32.xlu0 %v1552, 16
        %v1585 = vpop.permute.xlu0 %1584
        %1586 = vrot.lane.b32.xlu0 %v1555, 16
        %v1587 = vpop.permute.xlu0 %1586
        %1588 = vrot.lane.b32.xlu0 %v1557, 16
        %v1589 = vpop.permute.xlu0 %1588
        %v1606 = vrot.slane %v1502, 4
        %v1607 = vrot.slane %v1464, 4
        %v1608 = vsel %vm549, %v1606, %v1607
        %v1609 = vrot.slane %v1463, 4
        %v1610 = vsel %vm549, %v1607, %v1609
        %v1611 = vrot.slane %v1503, 4
        %v1612 = vrot.slane %v1467, 4
        %v1613 = vsel %vm549, %v1611, %v1612
        %v1614 = vrot.slane %v1466, 4
        %v1615 = vsel %vm549, %v1612, %v1614
        %v1616 = vrot.slane %v1504, 4
        %v1617 = vrot.slane %v1470, 4
        %v1618 = vsel %vm549, %v1616, %v1617
        %v1619 = vrot.slane %v1469, 4
        %v1620 = vsel %vm549, %v1617, %v1619
        %v1621 = vrot.slane %v1505, 4
        %v1622 = vrot.slane %v1473, 4
        %v1623 = vsel %vm549, %v1621, %v1622
        %v1624 = vrot.slane %v1472, 4
        %v1625 = vsel %vm549, %v1622, %v1624
        %v1626 = vrot.slane %v1506, 4
        %v1627 = vrot.slane %v1476, 4
        %v1628 = vsel %vm549, %v1626, %v1627
        %v1629 = vrot.slane %v1475, 4
        %v1630 = vsel %vm549, %v1627, %v1629
        %v1631 = vrot.slane %v1507, 4
        %v1632 = vrot.slane %v1479, 4
        %v1633 = vsel %vm549, %v1631, %v1632
        %v1634 = vrot.slane %v1478, 4
        %v1635 = vsel %vm549, %v1632, %v1634
        %v1636 = vrot.slane %v1508, 4
        %v1637 = vrot.slane %v1482, 4
        %v1638 = vsel %vm549, %v1636, %v1637
        %v1639 = vrot.slane %v1481, 4
        %v1640 = vsel %vm549, %v1637, %v1639
        %v1641 = vrot.slane %v1509, 4
        %v1642 = vrot.slane %v1485, 4
        %v1643 = vsel %vm549, %v1641, %v1642
        %v1644 = vrot.slane %v1484, 4
        %v1645 = vsel %vm549, %v1642, %v1644
        %1646 = vrot.lane.b32.xlu0 %v1608, 32
        %v1647 = vpop.permute.xlu0 %1646
        %1648 = vrot.lane.b32.xlu0 %v1610, 32
        %v1649 = vpop.permute.xlu0 %1648
        %1650 = vrot.lane.b32.xlu0 %v1613, 32
        %v1651 = vpop.permute.xlu0 %1650
        %1652 = vrot.lane.b32.xlu0 %v1615, 32
        %v1653 = vpop.permute.xlu0 %1652
        %1654 = vrot.lane.b32.xlu0 %v1618, 32
        %v1655 = vpop.permute.xlu0 %1654
        %1656 = vrot.lane.b32.xlu0 %v1620, 32
        %v1657 = vpop.permute.xlu0 %1656
        %1658 = vrot.lane.b32.xlu0 %v1623, 32
        %v1659 = vpop.permute.xlu0 %1658
        %1660 = vrot.lane.b32.xlu0 %v1625, 32
        %v1661 = vpop.permute.xlu0 %1660
        %1662 = vrot.lane.b32.xlu0 %v1628, 32
        %v1663 = vpop.permute.xlu0 %1662
        %1664 = vrot.lane.b32.xlu0 %v1630, 32
        %v1665 = vpop.permute.xlu0 %1664
        %1666 = vrot.lane.b32.xlu0 %v1633, 32
        %v1667 = vpop.permute.xlu0 %1666
        %1668 = vrot.lane.b32.xlu0 %v1635, 32
        %v1669 = vpop.permute.xlu0 %1668
        %1670 = vrot.lane.b32.xlu0 %v1638, 32
        %v1671 = vpop.permute.xlu0 %1670
        %1672 = vrot.lane.b32.xlu0 %v1640, 32
        %v1673 = vpop.permute.xlu0 %1672
        %1674 = vrot.lane.b32.xlu0 %v1643, 32
        %v1675 = vpop.permute.xlu0 %1674
        %1676 = vrot.lane.b32.xlu0 %v1645, 32
        %v1677 = vpop.permute.xlu0 %1676
        %v1694 = vsel %vm970, %v1502, %v1559
        %v1695 = vsel %vm970, %v1464, %v1561
        %v1696 = vsel %vm970, %v1503, %v1563
        %v1697 = vsel %vm970, %v1467, %v1565
        %v1698 = vsel %vm970, %v1504, %v1567
        %v1699 = vsel %vm970, %v1470, %v1569
        %v1700 = vsel %vm970, %v1505, %v1571
        %v1701 = vsel %vm970, %v1473, %v1573
        %v1702 = vsel %vm970, %v1506, %v1575
        %v1703 = vsel %vm970, %v1476, %v1577
        %v1704 = vsel %vm970, %v1507, %v1579
        %v1705 = vsel %vm970, %v1479, %v1581
        %v1706 = vsel %vm970, %v1508, %v1583
        %v1707 = vsel %vm970, %v1482, %v1585
        %v1708 = vsel %vm970, %v1509, %v1587
        %v1709 = vsel %vm970, %v1485, %v1589
        %v1710 = vsel %vm987, %v1694, %v1647
        %v1711 = vsel %vm987, %v1695, %v1649
        %v1712 = vsel %vm987, %v1696, %v1651
        %v1713 = vsel %vm987, %v1697, %v1653
        %v1714 = vsel %vm987, %v1698, %v1655
        %v1715 = vsel %vm987, %v1699, %v1657
        %v1716 = vsel %vm987, %v1700, %v1659
        %v1717 = vsel %vm987, %v1701, %v1661
        %v1718 = vsel %vm987, %v1702, %v1663
        %v1719 = vsel %vm987, %v1703, %v1665
        %v1720 = vsel %vm987, %v1704, %v1667
        %v1721 = vsel %vm987, %v1705, %v1669
        %v1722 = vsel %vm987, %v1706, %v1671
        %v1723 = vsel %vm987, %v1707, %v1673
        %v1724 = vsel %vm987, %v1708, %v1675
        %v1725 = vsel %vm987, %v1709, %v1677
        %v1726 = vlaneseq
        %v1727 = vshrl.u32 %v1726, 7
        %v1728 = vsub.s32 0, %v1727
        %v1729 = vrot.slane %v1445, %v1728
        %v1731 = vsel %vm1008, %v1710, 0
        %v1734 = vsel %vm1008, %v1711, 0
        %v1737 = vsel %vm1008, %v1712, 0
        %v1740 = vsel %vm1008, %v1713, 0
        %v1743 = vsel %vm1008, %v1714, 0
        %v1746 = vsel %vm1008, %v1715, 0
        %v1749 = vsel %vm1008, %v1716, 0
        %v1752 = vsel %vm1008, %v1717, 0
        %v1755 = vsel %vm1008, %v1718, 0
        %v1758 = vsel %vm1008, %v1719, 0
        %v1761 = vsel %vm1008, %v1720, 0
        %v1764 = vsel %vm1008, %v1721, 0
        %v1767 = vsel %vm1008, %v1722, 0
        %v1770 = vsel %vm1008, %v1723, 0
        %v1773 = vsel %vm1008, %v1724, 0
        %v1776 = vsel %vm1008, %v1725, 0
        %1778 = vmatprep.subr.mxu0 0.0
        %1779 = vmatpush1.msra.mxu0 %v1439
        %1780 = vmatprep.subr.mxu0 0.0
        %1781 = vmatpush1.msra.mxu0 %v1440
        %1782 = vmatprep.subr.mxu0 0.0
        %1783 = vmatpush1.msra.mxu0 %v1441
        %1784 = vmatprep.subr.mxu0 0.0
        %1785 = vmatpush1.msra.mxu0 %v1442
        %1786 = vmatprep.subr.mxu0 0.0
        %1787 = vmatpush1.msra.mxu0 %v1443
        %1788 = vmatprep.subr.mxu0 0.0
        %1789 = vmatpush1.msra.mxu0 %v1444
        %1790 = vmatprep.subr.mxu0 0.0
        %1791 = vmatpush1.msra.mxu0 0.0
        %1792 = vmatprep.subr.mxu0 0.0
        %1793 = vmatpush1.msra.mxu0 0.0
        %1794 = vmatprep.subr.mxu0 0.0
        %1795 = vmatpush1.msra.mxu0 0.0
        %1796 = vmatprep.subr.mxu0 0.0
        %1797 = vmatpush1.msra.mxu0 0.0
        %1798 = vmatprep.subr.mxu0 0.0
        %1799 = vmatpush1.msra.mxu0 0.0
        %1800 = vmatprep.subr.mxu0 0.0
        %1801 = vmatpush1.msra.mxu0 0.0
        %1802 = vmatprep.subr.mxu0 0.0
        %1803 = vmatpush1.msra.mxu0 0.0
        %1804 = vmatprep.subr.mxu0 0.0
        %1805 = vmatpush1.msra.mxu0 0.0
        %1806 = vmatprep.subr.mxu0 0.0
        %1807 = vmatpush1.msra.mxu0 0.0
        %1808 = vmatprep.subr.mxu0 0.0
        %1809 = vmatpush1.msra.mxu0 0.0
        %1810 = vmatprep.subr.mxu0 0.0
        %1811 = vmatpush1.msra.mxu0 0.0
        %1812 = vmatprep.subr.mxu0 0.0
        %1813 = vmatpush1.msra.mxu0 0.0
        %1814 = vmatprep.subr.mxu0 0.0
        %1815 = vmatpush1.msra.mxu0 0.0
        %1816 = vmatprep.subr.mxu0 0.0
        %1817 = vmatpush1.msra.mxu0 0.0
        %1818 = vmatprep.subr.mxu0 0.0
        %1819 = vmatpush1.msra.mxu0 0.0
        %1820 = vmatprep.subr.mxu0 0.0
        %1821 = vmatpush1.msra.mxu0 0.0
        %1822 = vmatprep.subr.mxu0 0.0
        %1823 = vmatpush1.msra.mxu0 0.0
        %1824 = vmatprep.subr.mxu0 0.0
        %1825 = vmatpush1.msra.mxu0 0.0
        %1826 = vmatprep.subr.mxu0 0.0
        %1827 = vmatpush1.msra.mxu0 0.0
        %1828 = vmatprep.subr.mxu0 0.0
        %1829 = vmatpush1.msra.mxu0 0.0
        %1830 = vmatprep.subr.mxu0 0.0
        %1831 = vmatpush1.msra.mxu0 0.0
        %1832 = vmatprep.subr.mxu0 0.0
        %1833 = vmatpush1.msra.mxu0 0.0
        %1834 = vmatprep.subr.mxu0 0.0
        %1835 = vmatpush1.msra.mxu0 0.0
        %1836 = vmatprep.subr.mxu0 0.0
        %1837 = vmatpush1.msra.mxu0 0.0
        %1838 = vmatprep.subr.mxu0 0.0
        %1839 = vmatpush1.msra.mxu0 0.0
        %1840 = vmatprep.subr.mxu0 0.0
        %1841 = vmatpush1.msra.mxu0 0.0
        %1842 = vmatprep.mubr.f32.mxu0 0.0
        %1843 = vmatmul.mubr.f32.gmra.mrb[0].mxu0 %v1731
        %v1844 = vpop.f32.mrb[0].mxu0
        %v1845 = vadd.f32 %v1729, %v1844
        %v1846 = vpop.f32.mrb[0].mxu0
        %1847 = vmatprep.mubr.f32.mxu0 0.0
        %1848 = vmatmul.mubr.f32.gmra.mrb[0].mxu0 %v1734
        %v1849 = vpop.f32.mrb[0].mxu0
        %v1850 = vadd.f32 %v1729, %v1849
        %v1851 = vpop.f32.mrb[0].mxu0
        %1852 = vmatprep.mubr.f32.mxu0 0.0
        %1853 = vmatmul.mubr.f32.gmra.mrb[0].mxu0 %v1737
        %v1854 = vpop.f32.mrb[0].mxu0
        %v1855 = vadd.f32 %v1729, %v1854
        %v1856 = vpop.f32.mrb[0].mxu0
        %1857 = vmatprep.mubr.f32.mxu0 0.0
        %1858 = vmatmul.mubr.f32.gmra.mrb[0].mxu0 %v1740
        %v1859 = vpop.f32.mrb[0].mxu0
        %v1860 = vadd.f32 %v1729, %v1859
        %v1861 = vpop.f32.mrb[0].mxu0
        %1862 = vmatprep.mubr.f32.mxu0 0.0
        %1863 = vmatmul.mubr.f32.gmra.mrb[0].mxu0 %v1743
        %v1864 = vpop.f32.mrb[0].mxu0
        %v1865 = vadd.f32 %v1729, %v1864
        %v1866 = vpop.f32.mrb[0].mxu0
        %1867 = vmatprep.mubr.f32.mxu0 0.0
        %1868 = vmatmul.mubr.f32.gmra.mrb[0].mxu0 %v1746
        %v1869 = vpop.f32.mrb[0].mxu0
        %v1870 = vadd.f32 %v1729, %v1869
        %v1871 = vpop.f32.mrb[0].mxu0
        %1872 = vmatprep.mubr.f32.mxu0 0.0
        %1873 = vmatmul.mubr.f32.gmra.mrb[0].mxu0 %v1749
        %v1874 = vpop.f32.mrb[0].mxu0
        %v1875 = vadd.f32 %v1729, %v1874
        %v1876 = vpop.f32.mrb[0].mxu0
        %1877 = vmatprep.mubr.f32.mxu0 0.0
        %1878 = vmatmul.mubr.f32.gmra.mrb[0].mxu0 %v1752
        %v1879 = vpop.f32.mrb[0].mxu0
        %v1880 = vadd.f32 %v1729, %v1879
        %v1881 = vpop.f32.mrb[0].mxu0
        %1882 = vmatprep.mubr.f32.mxu0 0.0
        %1883 = vmatmul.mubr.f32.gmra.mrb[0].mxu0 %v1755
        %v1884 = vpop.f32.mrb[0].mxu0
        %v1885 = vadd.f32 %v1729, %v1884
        %v1886 = vpop.f32.mrb[0].mxu0
        %1887 = vmatprep.mubr.f32.mxu0 0.0
        %1888 = vmatmul.mubr.f32.gmra.mrb[0].mxu0 %v1758
        %v1889 = vpop.f32.mrb[0].mxu0
        %v1890 = vadd.f32 %v1729, %v1889
        %v1891 = vpop.f32.mrb[0].mxu0
        %1892 = vmatprep.mubr.f32.mxu0 0.0
        %1893 = vmatmul.mubr.f32.gmra.mrb[0].mxu0 %v1761
        %v1894 = vpop.f32.mrb[0].mxu0
        %v1895 = vadd.f32 %v1729, %v1894
        %v1896 = vpop.f32.mrb[0].mxu0
        %1897 = vmatprep.mubr.f32.mxu0 0.0
        %1898 = vmatmul.mubr.f32.gmra.mrb[0].mxu0 %v1764
        %v1899 = vpop.f32.mrb[0].mxu0
        %v1900 = vadd.f32 %v1729, %v1899
        %v1901 = vpop.f32.mrb[0].mxu0
        %1902 = vmatprep.mubr.f32.mxu0 0.0
        %1903 = vmatmul.mubr.f32.gmra.mrb[0].mxu0 %v1767
        %v1904 = vpop.f32.mrb[0].mxu0
        %v1905 = vadd.f32 %v1729, %v1904
        %v1906 = vpop.f32.mrb[0].mxu0
        %1907 = vmatprep.mubr.f32.mxu0 0.0
        %1908 = vmatmul.mubr.f32.gmra.mrb[0].mxu0 %v1770
        %v1909 = vpop.f32.mrb[0].mxu0
        %v1910 = vadd.f32 %v1729, %v1909
        %v1911 = vpop.f32.mrb[0].mxu0
        %1912 = vmatprep.mubr.f32.mxu0 0.0
        %1913 = vmatmul.mubr.f32.gmra.mrb[0].mxu0 %v1773
        %v1914 = vpop.f32.mrb[0].mxu0
        %v1915 = vadd.f32 %v1729, %v1914
        %v1916 = vpop.f32.mrb[0].mxu0
        %1917 = vmatprep.mubr.f32.mxu0 0.0
        %1918 = vmatmul.mubr.f32.gmra.mrb[0].mxu0 %v1776
        %v1919 = vpop.f32.mrb[0].mxu0
        %v1920 = vadd.f32 %v1729, %v1919
        %v1921 = vpop.f32.mrb[0].mxu0
        %1922 = vdwg.mxu0
        %v1923 = vmax.f32 %v1845, 0.0
        %v1924 = vmax.f32 %v1850, 0.0
        %v1925 = vmax.f32 %v1855, 0.0
        %v1926 = vmax.f32 %v1860, 0.0
        %v1927 = vmax.f32 %v1865, 0.0
        %v1928 = vmax.f32 %v1870, 0.0
        %v1929 = vmax.f32 %v1875, 0.0
        %v1930 = vmax.f32 %v1880, 0.0
        %v1931 = vmax.f32 %v1885, 0.0
        %v1932 = vmax.f32 %v1890, 0.0
        %v1933 = vmax.f32 %v1895, 0.0
        %v1934 = vmax.f32 %v1900, 0.0
        %v1935 = vmax.f32 %v1905, 0.0
        %v1936 = vmax.f32 %v1910, 0.0
        %v1937 = vmax.f32 %v1915, 0.0
        %v1938 = vmax.f32 %v1920, 0.0
        %s1939 = scalar_lea.vmem [#allocation2], 192
        %v1940 = vld [vmem:[%s1939] sm:$0xff]
        %v1941 = vld [vmem:[%s1939 + $0x8] sm:$0xff]
        %v1942 = vld [vmem:[%s1939 + $0x10] sm:$0xff]
        %v1943 = vld [vmem:[%s1939 + $0x18] sm:$0xff]
        %v1944 = vld [vmem:[%s1939 + $0x20] sm:$0xff]
        %v1945 = vld [vmem:[%s1939 + $0x28] sm:$0xff]
        %v1946 = vld [vmem:[%s2 + $0x4] sm:$0x1]
        %v1963 = vrot.slane %v1923, 4
        %v1964 = vrot.slane %v1924, 4
        %v1965 = vsel %vm549, %v1963, %v1964
        %v1966 = vrot.slane %v1925, 4
        %v1967 = vrot.slane %v1926, 4
        %v1968 = vsel %vm549, %v1966, %v1967
        %v1969 = vrot.slane %v1927, 4
        %v1970 = vrot.slane %v1928, 4
        %v1971 = vsel %vm549, %v1969, %v1970
        %v1972 = vrot.slane %v1929, 4
        %v1973 = vrot.slane %v1930, 4
        %v1974 = vsel %vm549, %v1972, %v1973
        %v1975 = vrot.slane %v1931, 4
        %v1976 = vrot.slane %v1932, 4
        %v1977 = vsel %vm549, %v1975, %v1976
        %v1978 = vrot.slane %v1933, 4
        %v1979 = vrot.slane %v1934, 4
        %v1980 = vsel %vm549, %v1978, %v1979
        %v1981 = vrot.slane %v1935, 4
        %v1982 = vrot.slane %v1936, 4
        %v1983 = vsel %vm549, %v1981, %v1982
        %v1984 = vrot.slane %v1937, 4
        %v1985 = vrot.slane %v1938, 4
        %v1986 = vsel %vm549, %v1984, %v1985
        %v2003 = vsel %vm549, 0.0, %v1963
        %v2004 = vsel %vm549, 0.0, %v1966
        %v2005 = vsel %vm549, 0.0, %v1969
        %v2006 = vsel %vm549, 0.0, %v1972
        %v2007 = vsel %vm549, 0.0, %v1975
        %v2008 = vsel %vm549, 0.0, %v1978
        %v2009 = vsel %vm549, 0.0, %v1981
        %v2010 = vsel %vm549, 0.0, %v1984
        %v2019 = vrot.slane %v2003, 2
        %v2020 = vrot.slane %v1965, 2
        %v2021 = vsel %vm373, %v2019, %v2020
        %v2022 = vrot.slane %v1964, 2
        %v2023 = vsel %vm373, %v2020, %v2022
        %v2024 = vrot.slane %v2004, 2
        %v2025 = vrot.slane %v1968, 2
        %v2026 = vsel %vm373, %v2024, %v2025
        %v2027 = vrot.slane %v1967, 2
        %v2028 = vsel %vm373, %v2025, %v2027
        %v2029 = vrot.slane %v2005, 2
        %v2030 = vrot.slane %v1971, 2
        %v2031 = vsel %vm373, %v2029, %v2030
        %v2032 = vrot.slane %v1970, 2
        %v2033 = vsel %vm373, %v2030, %v2032
        %v2034 = vrot.slane %v2006, 2
        %v2035 = vrot.slane %v1974, 2
        %v2036 = vsel %vm373, %v2034, %v2035
        %v2037 = vrot.slane %v1973, 2
        %v2038 = vsel %vm373, %v2035, %v2037
        %v2039 = vrot.slane %v2007, 2
        %v2040 = vrot.slane %v1977, 2
        %v2041 = vsel %vm373, %v2039, %v2040
        %v2042 = vrot.slane %v1976, 2
        %v2043 = vsel %vm373, %v2040, %v2042
        %v2044 = vrot.slane %v2008, 2
        %v2045 = vrot.slane %v1980, 2
        %v2046 = vsel %vm373, %v2044, %v2045
        %v2047 = vrot.slane %v1979, 2
        %v2048 = vsel %vm373, %v2045, %v2047
        %v2049 = vrot.slane %v2009, 2
        %v2050 = vrot.slane %v1983, 2
        %v2051 = vsel %vm373, %v2049, %v2050
        %v2052 = vrot.slane %v1982, 2
        %v2053 = vsel %vm373, %v2050, %v2052
        %v2054 = vrot.slane %v2010, 2
        %v2055 = vrot.slane %v1986, 2
        %v2056 = vsel %vm373, %v2054, %v2055
        %v2057 = vrot.slane %v1985, 2
        %v2058 = vsel %vm373, %v2055, %v2057
        %2059 = vrot.lane.b32.xlu0 %v2021, 16
        %v2060 = vpop.permute.xlu0 %2059
        %2061 = vrot.lane.b32.xlu0 %v2023, 16
        %v2062 = vpop.permute.xlu0 %2061
        %2063 = vrot.lane.b32.xlu0 %v2026, 16
        %v2064 = vpop.permute.xlu0 %2063
        %2065 = vrot.lane.b32.xlu0 %v2028, 16
        %v2066 = vpop.permute.xlu0 %2065
        %2067 = vrot.lane.b32.xlu0 %v2031, 16
        %v2068 = vpop.permute.xlu0 %2067
        %2069 = vrot.lane.b32.xlu0 %v2033, 16
        %v2070 = vpop.permute.xlu0 %2069
        %2071 = vrot.lane.b32.xlu0 %v2036, 16
        %v2072 = vpop.permute.xlu0 %2071
        %2073 = vrot.lane.b32.xlu0 %v2038, 16
        %v2074 = vpop.permute.xlu0 %2073
        %2075 = vrot.lane.b32.xlu0 %v2041, 16
        %v2076 = vpop.permute.xlu0 %2075
        %2077 = vrot.lane.b32.xlu0 %v2043, 16
        %v2078 = vpop.permute.xlu0 %2077
        %2079 = vrot.lane.b32.xlu0 %v2046, 16
        %v2080 = vpop.permute.xlu0 %2079
        %2081 = vrot.lane.b32.xlu0 %v2048, 16
        %v2082 = vpop.permute.xlu0 %2081
        %2083 = vrot.lane.b32.xlu0 %v2051, 16
        %v2084 = vpop.permute.xlu0 %2083
        %2085 = vrot.lane.b32.xlu0 %v2053, 16
        %v2086 = vpop.permute.xlu0 %2085
        %2087 = vrot.lane.b32.xlu0 %v2056, 16
        %v2088 = vpop.permute.xlu0 %2087
        %2089 = vrot.lane.b32.xlu0 %v2058, 16
        %v2090 = vpop.permute.xlu0 %2089
        %v2107 = vrot.slane %v2003, 4
        %v2108 = vrot.slane %v1965, 4
        %v2109 = vsel %vm549, %v2107, %v2108
        %v2110 = vrot.slane %v1964, 4
        %v2111 = vsel %vm549, %v2108, %v2110
        %v2112 = vrot.slane %v2004, 4
        %v2113 = vrot.slane %v1968, 4
        %v2114 = vsel %vm549, %v2112, %v2113
        %v2115 = vrot.slane %v1967, 4
        %v2116 = vsel %vm549, %v2113, %v2115
        %v2117 = vrot.slane %v2005, 4
        %v2118 = vrot.slane %v1971, 4
        %v2119 = vsel %vm549, %v2117, %v2118
        %v2120 = vrot.slane %v1970, 4
        %v2121 = vsel %vm549, %v2118, %v2120
        %v2122 = vrot.slane %v2006, 4
        %v2123 = vrot.slane %v1974, 4
        %v2124 = vsel %vm549, %v2122, %v2123
        %v2125 = vrot.slane %v1973, 4
        %v2126 = vsel %vm549, %v2123, %v2125
        %v2127 = vrot.slane %v2007, 4
        %v2128 = vrot.slane %v1977, 4
        %v2129 = vsel %vm549, %v2127, %v2128
        %v2130 = vrot.slane %v1976, 4
        %v2131 = vsel %vm549, %v2128, %v2130
        %v2132 = vrot.slane %v2008, 4
        %v2133 = vrot.slane %v1980, 4
        %v2134 = vsel %vm549, %v2132, %v2133
        %v2135 = vrot.slane %v1979, 4
        %v2136 = vsel %vm549, %v2133, %v2135
        %v2137 = vrot.slane %v2009, 4
        %v2138 = vrot.slane %v1983, 4
        %v2139 = vsel %vm549, %v2137, %v2138
        %v2140 = vrot.slane %v1982, 4
        %v2141 = vsel %vm549, %v2138, %v2140
        %v2142 = vrot.slane %v2010, 4
        %v2143 = vrot.slane %v1986, 4
        %v2144 = vsel %vm549, %v2142, %v2143
        %v2145 = vrot.slane %v1985, 4
        %v2146 = vsel %vm549, %v2143, %v2145
        %2147 = vrot.lane.b32.xlu0 %v2109, 32
        %v2148 = vpop.permute.xlu0 %2147
        %2149 = vrot.lane.b32.xlu0 %v2111, 32
        %v2150 = vpop.permute.xlu0 %2149
        %2151 = vrot.lane.b32.xlu0 %v2114, 32
        %v2152 = vpop.permute.xlu0 %2151
        %2153 = vrot.lane.b32.xlu0 %v2116, 32
        %v2154 = vpop.permute.xlu0 %2153
        %2155 = vrot.lane.b32.xlu0 %v2119, 32
        %v2156 = vpop.permute.xlu0 %2155
        %2157 = vrot.lane.b32.xlu0 %v2121, 32
        %v2158 = vpop.permute.xlu0 %2157
        %2159 = vrot.lane.b32.xlu0 %v2124, 32
        %v2160 = vpop.permute.xlu0 %2159
        %2161 = vrot.lane.b32.xlu0 %v2126, 32
        %v2162 = vpop.permute.xlu0 %2161
        %2163 = vrot.lane.b32.xlu0 %v2129, 32
        %v2164 = vpop.permute.xlu0 %2163
        %2165 = vrot.lane.b32.xlu0 %v2131, 32
        %v2166 = vpop.permute.xlu0 %2165
        %2167 = vrot.lane.b32.xlu0 %v2134, 32
        %v2168 = vpop.permute.xlu0 %2167
        %2169 = vrot.lane.b32.xlu0 %v2136, 32
        %v2170 = vpop.permute.xlu0 %2169
        %2171 = vrot.lane.b32.xlu0 %v2139, 32
        %v2172 = vpop.permute.xlu0 %2171
        %2173 = vrot.lane.b32.xlu0 %v2141, 32
        %v2174 = vpop.permute.xlu0 %2173
        %2175 = vrot.lane.b32.xlu0 %v2144, 32
        %v2176 = vpop.permute.xlu0 %2175
        %2177 = vrot.lane.b32.xlu0 %v2146, 32
        %v2178 = vpop.permute.xlu0 %2177
        %v2195 = vsel %vm970, %v2003, %v2060
        %v2196 = vsel %vm970, %v1965, %v2062
        %v2197 = vsel %vm970, %v2004, %v2064
        %v2198 = vsel %vm970, %v1968, %v2066
        %v2199 = vsel %vm970, %v2005, %v2068
        %v2200 = vsel %vm970, %v1971, %v2070
        %v2201 = vsel %vm970, %v2006, %v2072
        %v2202 = vsel %vm970, %v1974, %v2074
        %v2203 = vsel %vm970, %v2007, %v2076
        %v2204 = vsel %vm970, %v1977, %v2078
        %v2205 = vsel %vm970, %v2008, %v2080
        %v2206 = vsel %vm970, %v1980, %v2082
        %v2207 = vsel %vm970, %v2009, %v2084
        %v2208 = vsel %vm970, %v1983, %v2086
        %v2209 = vsel %vm970, %v2010, %v2088
        %v2210 = vsel %vm970, %v1986, %v2090
        %v2211 = vsel %vm987, %v2195, %v2148
        %v2212 = vsel %vm987, %v2196, %v2150
        %v2213 = vsel %vm987, %v2197, %v2152
        %v2214 = vsel %vm987, %v2198, %v2154
        %v2215 = vsel %vm987, %v2199, %v2156
        %v2216 = vsel %vm987, %v2200, %v2158
        %v2217 = vsel %vm987, %v2201, %v2160
        %v2218 = vsel %vm987, %v2202, %v2162
        %v2219 = vsel %vm987, %v2203, %v2164
        %v2220 = vsel %vm987, %v2204, %v2166
        %v2221 = vsel %vm987, %v2205, %v2168
        %v2222 = vsel %vm987, %v2206, %v2170
        %v2223 = vsel %vm987, %v2207, %v2172
        %v2224 = vsel %vm987, %v2208, %v2174
        %v2225 = vsel %vm987, %v2209, %v2176
        %v2226 = vsel %vm987, %v2210, %v2178
        %v2227 = vlaneseq
        %v2228 = vshrl.u32 %v2227, 7
        %v2229 = vsub.s32 0, %v2228
        %v2230 = vrot.slane %v1946, %v2229
        %v2232 = vsel %vm1008, %v2211, 0
        %v2235 = vsel %vm1008, %v2212, 0
        %v2238 = vsel %vm1008, %v2213, 0
        %v2241 = vsel %vm1008, %v2214, 0
        %v2244 = vsel %vm1008, %v2215, 0
        %v2247 = vsel %vm1008, %v2216, 0
        %v2250 = vsel %vm1008, %v2217, 0
        %v2253 = vsel %vm1008, %v2218, 0
        %v2256 = vsel %vm1008, %v2219, 0
        %v2259 = vsel %vm1008, %v2220, 0
        %v2262 = vsel %vm1008, %v2221, 0
        %v2265 = vsel %vm1008, %v2222, 0
        %v2268 = vsel %vm1008, %v2223, 0
        %v2271 = vsel %vm1008, %v2224, 0
        %v2274 = vsel %vm1008, %v2225, 0
        %v2277 = vsel %vm1008, %v2226, 0
        %2279 = vmatprep.subr.mxu0 0.0
        %2280 = vmatpush1.msra.mxu0 %v1940
        %2281 = vmatprep.subr.mxu0 0.0
        %2282 = vmatpush1.msra.mxu0 %v1941
        %2283 = vmatprep.subr.mxu0 0.0
        %2284 = vmatpush1.msra.mxu0 %v1942
        %2285 = vmatprep.subr.mxu0 0.0
        %2286 = vmatpush1.msra.mxu0 %v1943
        %2287 = vmatprep.subr.mxu0 0.0
        %2288 = vmatpush1.msra.mxu0 %v1944
        %2289 = vmatprep.subr.mxu0 0.0
        %2290 = vmatpush1.msra.mxu0 %v1945
        %2291 = vmatprep.subr.mxu0 0.0
        %2292 = vmatpush1.msra.mxu0 0.0
        %2293 = vmatprep.subr.mxu0 0.0
        %2294 = vmatpush1.msra.mxu0 0.0
        %2295 = vmatprep.subr.mxu0 0.0
        %2296 = vmatpush1.msra.mxu0 0.0
        %2297 = vmatprep.subr.mxu0 0.0
        %2298 = vmatpush1.msra.mxu0 0.0
        %2299 = vmatprep.subr.mxu0 0.0
        %2300 = vmatpush1.msra.mxu0 0.0
        %2301 = vmatprep.subr.mxu0 0.0
        %2302 = vmatpush1.msra.mxu0 0.0
        %2303 = vmatprep.subr.mxu0 0.0
        %2304 = vmatpush1.msra.mxu0 0.0
        %2305 = vmatprep.subr.mxu0 0.0
        %2306 = vmatpush1.msra.mxu0 0.0
        %2307 = vmatprep.subr.mxu0 0.0
        %2308 = vmatpush1.msra.mxu0 0.0
        %2309 = vmatprep.subr.mxu0 0.0
        %2310 = vmatpush1.msra.mxu0 0.0
        %2311 = vmatprep.subr.mxu0 0.0
        %2312 = vmatpush1.msra.mxu0 0.0
        %2313 = vmatprep.subr.mxu0 0.0
        %2314 = vmatpush1.msra.mxu0 0.0
        %2315 = vmatprep.subr.mxu0 0.0
        %2316 = vmatpush1.msra.mxu0 0.0
        %2317 = vmatprep.subr.mxu0 0.0
        %2318 = vmatpush1.msra.mxu0 0.0
        %2319 = vmatprep.subr.mxu0 0.0
        %2320 = vmatpush1.msra.mxu0 0.0
        %2321 = vmatprep.subr.mxu0 0.0
        %2322 = vmatpush1.msra.mxu0 0.0
        %2323 = vmatprep.subr.mxu0 0.0
        %2324 = vmatpush1.msra.mxu0 0.0
        %2325 = vmatprep.subr.mxu0 0.0
        %2326 = vmatpush1.msra.mxu0 0.0
        %2327 = vmatprep.subr.mxu0 0.0
        %2328 = vmatpush1.msra.mxu0 0.0
        %2329 = vmatprep.subr.mxu0 0.0
        %2330 = vmatpush1.msra.mxu0 0.0
        %2331 = vmatprep.subr.mxu0 0.0
        %2332 = vmatpush1.msra.mxu0 0.0
        %2333 = vmatprep.subr.mxu0 0.0
        %2334 = vmatpush1.msra.mxu0 0.0
        %2335 = vmatprep.subr.mxu0 0.0
        %2336 = vmatpush1.msra.mxu0 0.0
        %2337 = vmatprep.subr.mxu0 0.0
        %2338 = vmatpush1.msra.mxu0 0.0
        %2339 = vmatprep.subr.mxu0 0.0
        %2340 = vmatpush1.msra.mxu0 0.0
        %2341 = vmatprep.subr.mxu0 0.0
        %2342 = vmatpush1.msra.mxu0 0.0
        %2343 = vmatprep.mubr.f32.mxu0 0.0
        %2344 = vmatmul.mubr.f32.gmra.mrb[0].mxu0 %v2232
        %v2345 = vpop.f32.mrb[0].mxu0
        %v2346 = vadd.f32 %v2230, %v2345
        %v2347 = vpop.f32.mrb[0].mxu0
        %2348 = vmatprep.mubr.f32.mxu0 0.0
        %2349 = vmatmul.mubr.f32.gmra.mrb[0].mxu0 %v2235
        %v2350 = vpop.f32.mrb[0].mxu0
        %v2351 = vadd.f32 %v2230, %v2350
        %v2352 = vpop.f32.mrb[0].mxu0
        %2353 = vmatprep.mubr.f32.mxu0 0.0
        %2354 = vmatmul.mubr.f32.gmra.mrb[0].mxu0 %v2238
        %v2355 = vpop.f32.mrb[0].mxu0
        %v2356 = vadd.f32 %v2230, %v2355
        %v2357 = vpop.f32.mrb[0].mxu0
        %2358 = vmatprep.mubr.f32.mxu0 0.0
        %2359 = vmatmul.mubr.f32.gmra.mrb[0].mxu0 %v2241
        %v2360 = vpop.f32.mrb[0].mxu0
        %v2361 = vadd.f32 %v2230, %v2360
        %v2362 = vpop.f32.mrb[0].mxu0
        %2363 = vmatprep.mubr.f32.mxu0 0.0
        %2364 = vmatmul.mubr.f32.gmra.mrb[0].mxu0 %v2244
        %v2365 = vpop.f32.mrb[0].mxu0
        %v2366 = vadd.f32 %v2230, %v2365
        %v2367 = vpop.f32.mrb[0].mxu0
        %2368 = vmatprep.mubr.f32.mxu0 0.0
        %2369 = vmatmul.mubr.f32.gmra.mrb[0].mxu0 %v2247
        %v2370 = vpop.f32.mrb[0].mxu0
        %v2371 = vadd.f32 %v2230, %v2370
        %v2372 = vpop.f32.mrb[0].mxu0
        %2373 = vmatprep.mubr.f32.mxu0 0.0
        %2374 = vmatmul.mubr.f32.gmra.mrb[0].mxu0 %v2250
        %v2375 = vpop.f32.mrb[0].mxu0
        %v2376 = vadd.f32 %v2230, %v2375
        %v2377 = vpop.f32.mrb[0].mxu0
        %2378 = vmatprep.mubr.f32.mxu0 0.0
        %2379 = vmatmul.mubr.f32.gmra.mrb[0].mxu0 %v2253
        %v2380 = vpop.f32.mrb[0].mxu0
        %v2381 = vadd.f32 %v2230, %v2380
        %v2382 = vpop.f32.mrb[0].mxu0
        %2383 = vmatprep.mubr.f32.mxu0 0.0
        %2384 = vmatmul.mubr.f32.gmra.mrb[0].mxu0 %v2256
        %v2385 = vpop.f32.mrb[0].mxu0
        %v2386 = vadd.f32 %v2230, %v2385
        %v2387 = vpop.f32.mrb[0].mxu0
        %2388 = vmatprep.mubr.f32.mxu0 0.0
        %2389 = vmatmul.mubr.f32.gmra.mrb[0].mxu0 %v2259
        %v2390 = vpop.f32.mrb[0].mxu0
        %v2391 = vadd.f32 %v2230, %v2390
        %v2392 = vpop.f32.mrb[0].mxu0
        %2393 = vmatprep.mubr.f32.mxu0 0.0
        %2394 = vmatmul.mubr.f32.gmra.mrb[0].mxu0 %v2262
        %v2395 = vpop.f32.mrb[0].mxu0
        %v2396 = vadd.f32 %v2230, %v2395
        %v2397 = vpop.f32.mrb[0].mxu0
        %2398 = vmatprep.mubr.f32.mxu0 0.0
        %2399 = vmatmul.mubr.f32.gmra.mrb[0].mxu0 %v2265
        %v2400 = vpop.f32.mrb[0].mxu0
        %v2401 = vadd.f32 %v2230, %v2400
        %v2402 = vpop.f32.mrb[0].mxu0
        %2403 = vmatprep.mubr.f32.mxu0 0.0
        %2404 = vmatmul.mubr.f32.gmra.mrb[0].mxu0 %v2268
        %v2405 = vpop.f32.mrb[0].mxu0
        %v2406 = vadd.f32 %v2230, %v2405
        %v2407 = vpop.f32.mrb[0].mxu0
        %2408 = vmatprep.mubr.f32.mxu0 0.0
        %2409 = vmatmul.mubr.f32.gmra.mrb[0].mxu0 %v2271
        %v2410 = vpop.f32.mrb[0].mxu0
        %v2411 = vadd.f32 %v2230, %v2410
        %v2412 = vpop.f32.mrb[0].mxu0
        %2413 = vmatprep.mubr.f32.mxu0 0.0
        %2414 = vmatmul.mubr.f32.gmra.mrb[0].mxu0 %v2274
        %v2415 = vpop.f32.mrb[0].mxu0
        %v2416 = vadd.f32 %v2230, %v2415
        %v2417 = vpop.f32.mrb[0].mxu0
        %2418 = vmatprep.mubr.f32.mxu0 0.0
        %2419 = vmatmul.mubr.f32.gmra.mrb[0].mxu0 %v2277
        %v2420 = vpop.f32.mrb[0].mxu0
        %v2421 = vadd.f32 %v2230, %v2420
        %v2422 = vpop.f32.mrb[0].mxu0
        %2423 = vdwg.mxu0
        %v2424 = vmax.f32 %v2346, 0.0
        %v2425 = vmax.f32 %v2351, 0.0
        %v2426 = vmax.f32 %v2356, 0.0
        %v2427 = vmax.f32 %v2361, 0.0
        %v2428 = vmax.f32 %v2366, 0.0
        %v2429 = vmax.f32 %v2371, 0.0
        %v2430 = vmax.f32 %v2376, 0.0
        %v2431 = vmax.f32 %v2381, 0.0
        %v2432 = vmax.f32 %v2386, 0.0
        %v2433 = vmax.f32 %v2391, 0.0
        %v2434 = vmax.f32 %v2396, 0.0
        %v2435 = vmax.f32 %v2401, 0.0
        %v2436 = vmax.f32 %v2406, 0.0
        %v2437 = vmax.f32 %v2411, 0.0
        %v2438 = vmax.f32 %v2416, 0.0
        %v2439 = vmax.f32 %v2421, 0.0
        %v2440 = vadd.f32 %v2424, %v1422
        %v2441 = vadd.f32 %v2425, %v1423
        %v2442 = vadd.f32 %v2426, %v1424
        %v2443 = vadd.f32 %v2427, %v1425
        %v2444 = vadd.f32 %v2428, %v1426
        %v2445 = vadd.f32 %v2429, %v1427
        %v2446 = vadd.f32 %v2430, %v1428
        %v2447 = vadd.f32 %v2431, %v1429
        %v2448 = vadd.f32 %v2432, %v1430
        %v2449 = vadd.f32 %v2433, %v1431
        %v2450 = vadd.f32 %v2434, %v1432
        %v2451 = vadd.f32 %v2435, %v1433
        %v2452 = vadd.f32 %v2436, %v1434
        %v2453 = vadd.f32 %v2437, %v1435
        %v2454 = vadd.f32 %v2438, %v1436
        %v2455 = vadd.f32 %v2439, %v1437
        %v2456 = vmax.f32 %v2440, 0.0
        %v2457 = vmax.f32 %v2441, 0.0
        %v2458 = vmax.f32 %v2442, 0.0
        %v2459 = vmax.f32 %v2443, 0.0
        %v2460 = vmax.f32 %v2444, 0.0
        %v2461 = vmax.f32 %v2445, 0.0
        %v2462 = vmax.f32 %v2446, 0.0
        %v2463 = vmax.f32 %v2447, 0.0
        %v2464 = vmax.f32 %v2448, 0.0
        %v2465 = vmax.f32 %v2449, 0.0
        %v2466 = vmax.f32 %v2450, 0.0
        %v2467 = vmax.f32 %v2451, 0.0
        %v2468 = vmax.f32 %v2452, 0.0
        %v2469 = vmax.f32 %v2453, 0.0
        %v2470 = vmax.f32 %v2454, 0.0
        %v2471 = vmax.f32 %v2455, 0.0
        %s2472 = scalar_lea.vmem [#allocation2], 240
        %v2473 = vld [vmem:[%s2472] sm:$0xff]
        %v2474 = vld [vmem:[%s2472 + $0x8] sm:$0xff]
        %v2475 = vld [vmem:[%s2472 + $0x10] sm:$0xff]
        %v2476 = vld [vmem:[%s2472 + $0x18] sm:$0xff]
        %v2477 = vld [vmem:[%s2472 + $0x20] sm:$0xff]
        %v2478 = vld [vmem:[%s2472 + $0x28] sm:$0xff]
        %v2479 = vld [vmem:[%s2 + $0x5] sm:$0x1]
        %v2497 = vrot.slane 0.0, 4
        %v2498 = vrot.slane %v2456, 4
        %v2499 = vsel %vm549, %v2497, %v2498
        %v2500 = vrot.slane %v2457, 4
        %v2501 = vsel %vm549, %v2498, %v2500
        %v2502 = vrot.slane %v2458, 4
        %v2503 = vsel %vm549, %v2497, %v2502
        %v2504 = vrot.slane %v2459, 4
        %v2505 = vsel %vm549, %v2502, %v2504
        %v2506 = vrot.slane %v2460, 4
        %v2507 = vsel %vm549, %v2497, %v2506
        %v2508 = vrot.slane %v2461, 4
        %v2509 = vsel %vm549, %v2506, %v2508
        %v2510 = vrot.slane %v2462, 4
        %v2511 = vsel %vm549, %v2497, %v2510
        %v2512 = vrot.slane %v2463, 4
        %v2513 = vsel %vm549, %v2510, %v2512
        %v2514 = vrot.slane %v2464, 4
        %v2515 = vsel %vm549, %v2497, %v2514
        %v2516 = vrot.slane %v2465, 4
        %v2517 = vsel %vm549, %v2514, %v2516
        %v2518 = vrot.slane %v2466, 4
        %v2519 = vsel %vm549, %v2497, %v2518
        %v2520 = vrot.slane %v2467, 4
        %v2521 = vsel %vm549, %v2518, %v2520
        %v2522 = vrot.slane %v2468, 4
        %v2523 = vsel %vm549, %v2497, %v2522
        %v2524 = vrot.slane %v2469, 4
        %v2525 = vsel %vm549, %v2522, %v2524
        %v2526 = vrot.slane %v2470, 4
        %v2527 = vsel %vm549, %v2497, %v2526
        %v2528 = vrot.slane %v2471, 4
        %v2529 = vsel %vm549, %v2526, %v2528
        %2530 = vrot.lane.b32.xlu0 %v2499, 16
        %v2531 = vpop.permute.xlu0 %2530
        %2532 = vrot.lane.b32.xlu0 %v2501, 16
        %v2533 = vpop.permute.xlu0 %2532
        %2534 = vrot.lane.b32.xlu0 %v2503, 16
        %v2535 = vpop.permute.xlu0 %2534
        %2536 = vrot.lane.b32.xlu0 %v2505, 16
        %v2537 = vpop.permute.xlu0 %2536
        %2538 = vrot.lane.b32.xlu0 %v2507, 16
        %v2539 = vpop.permute.xlu0 %2538
        %2540 = vrot.lane.b32.xlu0 %v2509, 16
        %v2541 = vpop.permute.xlu0 %2540
        %2542 = vrot.lane.b32.xlu0 %v2511, 16
        %v2543 = vpop.permute.xlu0 %2542
        %2544 = vrot.lane.b32.xlu0 %v2513, 16
        %v2545 = vpop.permute.xlu0 %2544
        %2546 = vrot.lane.b32.xlu0 %v2515, 16
        %v2547 = vpop.permute.xlu0 %2546
        %2548 = vrot.lane.b32.xlu0 %v2517, 16
        %v2549 = vpop.permute.xlu0 %2548
        %2550 = vrot.lane.b32.xlu0 %v2519, 16
        %v2551 = vpop.permute.xlu0 %2550
        %2552 = vrot.lane.b32.xlu0 %v2521, 16
        %v2553 = vpop.permute.xlu0 %2552
        %2554 = vrot.lane.b32.xlu0 %v2523, 16
        %v2555 = vpop.permute.xlu0 %2554
        %2556 = vrot.lane.b32.xlu0 %v2525, 16
        %v2557 = vpop.permute.xlu0 %2556
        %2558 = vrot.lane.b32.xlu0 %v2527, 16
        %v2559 = vpop.permute.xlu0 %2558
        %2560 = vrot.lane.b32.xlu0 %v2529, 16
        %v2561 = vpop.permute.xlu0 %2560
        %2578 = vrot.lane.b32.xlu0 %v2456, 32
        %v2579 = vpop.permute.xlu0 %2578
        %2580 = vrot.lane.b32.xlu0 %v2457, 32
        %v2581 = vpop.permute.xlu0 %2580
        %2582 = vrot.lane.b32.xlu0 %v2458, 32
        %v2583 = vpop.permute.xlu0 %2582
        %2584 = vrot.lane.b32.xlu0 %v2459, 32
        %v2585 = vpop.permute.xlu0 %2584
        %2586 = vrot.lane.b32.xlu0 %v2460, 32
        %v2587 = vpop.permute.xlu0 %2586
        %2588 = vrot.lane.b32.xlu0 %v2461, 32
        %v2589 = vpop.permute.xlu0 %2588
        %2590 = vrot.lane.b32.xlu0 %v2462, 32
        %v2591 = vpop.permute.xlu0 %2590
        %2592 = vrot.lane.b32.xlu0 %v2463, 32
        %v2593 = vpop.permute.xlu0 %2592
        %2594 = vrot.lane.b32.xlu0 %v2464, 32
        %v2595 = vpop.permute.xlu0 %2594
        %2596 = vrot.lane.b32.xlu0 %v2465, 32
        %v2597 = vpop.permute.xlu0 %2596
        %2598 = vrot.lane.b32.xlu0 %v2466, 32
        %v2599 = vpop.permute.xlu0 %2598
        %2600 = vrot.lane.b32.xlu0 %v2467, 32
        %v2601 = vpop.permute.xlu0 %2600
        %2602 = vrot.lane.b32.xlu0 %v2468, 32
        %v2603 = vpop.permute.xlu0 %2602
        %2604 = vrot.lane.b32.xlu0 %v2469, 32
        %v2605 = vpop.permute.xlu0 %2604
        %2606 = vrot.lane.b32.xlu0 %v2470, 32
        %v2607 = vpop.permute.xlu0 %2606
        %2608 = vrot.lane.b32.xlu0 %v2471, 32
        %v2609 = vpop.permute.xlu0 %2608
        %v2626 = vsel %vm970, 0.0, %v2531
        %v2627 = vsel %vm970, %v2456, %v2533
        %v2628 = vsel %vm970, 0.0, %v2535
        %v2629 = vsel %vm970, %v2458, %v2537
        %v2630 = vsel %vm970, 0.0, %v2539
        %v2631 = vsel %vm970, %v2460, %v2541
        %v2632 = vsel %vm970, 0.0, %v2543
        %v2633 = vsel %vm970, %v2462, %v2545
        %v2634 = vsel %vm970, 0.0, %v2547
        %v2635 = vsel %vm970, %v2464, %v2549
        %v2636 = vsel %vm970, 0.0, %v2551
        %v2637 = vsel %vm970, %v2466, %v2553
        %v2638 = vsel %vm970, 0.0, %v2555
        %v2639 = vsel %vm970, %v2468, %v2557
        %v2640 = vsel %vm970, 0.0, %v2559
        %v2641 = vsel %vm970, %v2470, %v2561
        %v2642 = vsel %vm987, %v2626, %v2579
        %v2643 = vsel %vm987, %v2627, %v2581
        %v2644 = vsel %vm987, %v2628, %v2583
        %v2645 = vsel %vm987, %v2629, %v2585
        %v2646 = vsel %vm987, %v2630, %v2587
        %v2647 = vsel %vm987, %v2631, %v2589
        %v2648 = vsel %vm987, %v2632, %v2591
        %v2649 = vsel %vm987, %v2633, %v2593
        %v2650 = vsel %vm987, %v2634, %v2595
        %v2651 = vsel %vm987, %v2635, %v2597
        %v2652 = vsel %vm987, %v2636, %v2599
        %v2653 = vsel %vm987, %v2637, %v2601
        %v2654 = vsel %vm987, %v2638, %v2603
        %v2655 = vsel %vm987, %v2639, %v2605
        %v2656 = vsel %vm987, %v2640, %v2607
        %v2657 = vsel %vm987, %v2641, %v2609
        %v2658 = vlaneseq
        %v2659 = vshrl.u32 %v2658, 7
        %v2660 = vsub.s32 0, %v2659
        %v2661 = vrot.slane %v2479, %v2660
        %v2663 = vsel %vm1008, %v2642, 0
        %v2666 = vsel %vm1008, %v2643, 0
        %v2669 = vsel %vm1008, %v2644, 0
        %v2672 = vsel %vm1008, %v2645, 0
        %v2675 = vsel %vm1008, %v2646, 0
        %v2678 = vsel %vm1008, %v2647, 0
        %v2681 = vsel %vm1008, %v2648, 0
        %v2684 = vsel %vm1008, %v2649, 0
        %v2687 = vsel %vm1008, %v2650, 0
        %v2690 = vsel %vm1008, %v2651, 0
        %v2693 = vsel %vm1008, %v2652, 0
        %v2696 = vsel %vm1008, %v2653, 0
        %v2699 = vsel %vm1008, %v2654, 0
        %v2702 = vsel %vm1008, %v2655, 0
        %v2705 = vsel %vm1008, %v2656, 0
        %v2708 = vsel %vm1008, %v2657, 0
        %2710 = vmatprep.subr.mxu0 0.0
        %2711 = vmatpush1.msra.mxu0 %v2473
        %2712 = vmatprep.subr.mxu0 0.0
        %2713 = vmatpush1.msra.mxu0 %v2474
        %2714 = vmatprep.subr.mxu0 0.0
        %2715 = vmatpush1.msra.mxu0 %v2475
        %2716 = vmatprep.subr.mxu0 0.0
        %2717 = vmatpush1.msra.mxu0 %v2476
        %2718 = vmatprep.subr.mxu0 0.0
        %2719 = vmatpush1.msra.mxu0 %v2477
        %2720 = vmatprep.subr.mxu0 0.0
        %2721 = vmatpush1.msra.mxu0 %v2478
        %2722 = vmatprep.subr.mxu0 0.0
        %2723 = vmatpush1.msra.mxu0 0.0
        %2724 = vmatprep.subr.mxu0 0.0
        %2725 = vmatpush1.msra.mxu0 0.0
        %2726 = vmatprep.subr.mxu0 0.0
        %2727 = vmatpush1.msra.mxu0 0.0
        %2728 = vmatprep.subr.mxu0 0.0
        %2729 = vmatpush1.msra.mxu0 0.0
        %2730 = vmatprep.subr.mxu0 0.0
        %2731 = vmatpush1.msra.mxu0 0.0
        %2732 = vmatprep.subr.mxu0 0.0
        %2733 = vmatpush1.msra.mxu0 0.0
        %2734 = vmatprep.subr.mxu0 0.0
        %2735 = vmatpush1.msra.mxu0 0.0
        %2736 = vmatprep.subr.mxu0 0.0
        %2737 = vmatpush1.msra.mxu0 0.0
        %2738 = vmatprep.subr.mxu0 0.0
        %2739 = vmatpush1.msra.mxu0 0.0
        %2740 = vmatprep.subr.mxu0 0.0
        %2741 = vmatpush1.msra.mxu0 0.0
        %2742 = vmatprep.subr.mxu0 0.0
        %2743 = vmatpush1.msra.mxu0 0.0
        %2744 = vmatprep.subr.mxu0 0.0
        %2745 = vmatpush1.msra.mxu0 0.0
        %2746 = vmatprep.subr.mxu0 0.0
        %2747 = vmatpush1.msra.mxu0 0.0
        %2748 = vmatprep.subr.mxu0 0.0
        %2749 = vmatpush1.msra.mxu0 0.0
        %2750 = vmatprep.subr.mxu0 0.0
        %2751 = vmatpush1.msra.mxu0 0.0
        %2752 = vmatprep.subr.mxu0 0.0
        %2753 = vmatpush1.msra.mxu0 0.0
        %2754 = vmatprep.subr.mxu0 0.0
        %2755 = vmatpush1.msra.mxu0 0.0
        %2756 = vmatprep.subr.mxu0 0.0
        %2757 = vmatpush1.msra.mxu0 0.0
        %2758 = vmatprep.subr.mxu0 0.0
        %2759 = vmatpush1.msra.mxu0 0.0
        %2760 = vmatprep.subr.mxu0 0.0
        %2761 = vmatpush1.msra.mxu0 0.0
        %2762 = vmatprep.subr.mxu0 0.0
        %2763 = vmatpush1.msra.mxu0 0.0
        %2764 = vmatprep.subr.mxu0 0.0
        %2765 = vmatpush1.msra.mxu0 0.0
        %2766 = vmatprep.subr.mxu0 0.0
        %2767 = vmatpush1.msra.mxu0 0.0
        %2768 = vmatprep.subr.mxu0 0.0
        %2769 = vmatpush1.msra.mxu0 0.0
        %2770 = vmatprep.subr.mxu0 0.0
        %2771 = vmatpush1.msra.mxu0 0.0
        %2772 = vmatprep.subr.mxu0 0.0
        %2773 = vmatpush1.msra.mxu0 0.0
        %2774 = vmatprep.mubr.f32.mxu0 0.0
        %2775 = vmatmul.mubr.f32.gmra.mrb[0].mxu0 %v2663
        %v2776 = vpop.f32.mrb[0].mxu0
        %v2777 = vadd.f32 %v2661, %v2776
        %v2778 = vpop.f32.mrb[0].mxu0
        %2779 = vmatprep.mubr.f32.mxu0 0.0
        %2780 = vmatmul.mubr.f32.gmra.mrb[0].mxu0 %v2666
        %v2781 = vpop.f32.mrb[0].mxu0
        %v2782 = vadd.f32 %v2661, %v2781
        %v2783 = vpop.f32.mrb[0].mxu0
        %2784 = vmatprep.mubr.f32.mxu0 0.0
        %2785 = vmatmul.mubr.f32.gmra.mrb[0].mxu0 %v2669
        %v2786 = vpop.f32.mrb[0].mxu0
        %v2787 = vadd.f32 %v2661, %v2786
        %v2788 = vpop.f32.mrb[0].mxu0
        %2789 = vmatprep.mubr.f32.mxu0 0.0
        %2790 = vmatmul.mubr.f32.gmra.mrb[0].mxu0 %v2672
        %v2791 = vpop.f32.mrb[0].mxu0
        %v2792 = vadd.f32 %v2661, %v2791
        %v2793 = vpop.f32.mrb[0].mxu0
        %2794 = vmatprep.mubr.f32.mxu0 0.0
        %2795 = vmatmul.mubr.f32.gmra.mrb[0].mxu0 %v2675
        %v2796 = vpop.f32.mrb[0].mxu0
        %v2797 = vadd.f32 %v2661, %v2796
        %v2798 = vpop.f32.mrb[0].mxu0
        %2799 = vmatprep.mubr.f32.mxu0 0.0
        %2800 = vmatmul.mubr.f32.gmra.mrb[0].mxu0 %v2678
        %v2801 = vpop.f32.mrb[0].mxu0
        %v2802 = vadd.f32 %v2661, %v2801
        %v2803 = vpop.f32.mrb[0].mxu0
        %2804 = vmatprep.mubr.f32.mxu0 0.0
        %2805 = vmatmul.mubr.f32.gmra.mrb[0].mxu0 %v2681
        %v2806 = vpop.f32.mrb[0].mxu0
        %v2807 = vadd.f32 %v2661, %v2806
        %v2808 = vpop.f32.mrb[0].mxu0
        %2809 = vmatprep.mubr.f32.mxu0 0.0
        %2810 = vmatmul.mubr.f32.gmra.mrb[0].mxu0 %v2684
        %v2811 = vpop.f32.mrb[0].mxu0
        %v2812 = vadd.f32 %v2661, %v2811
        %v2813 = vpop.f32.mrb[0].mxu0
        %2814 = vmatprep.mubr.f32.mxu0 0.0
        %2815 = vmatmul.mubr.f32.gmra.mrb[0].mxu0 %v2687
        %v2816 = vpop.f32.mrb[0].mxu0
        %v2817 = vadd.f32 %v2661, %v2816
        %v2818 = vpop.f32.mrb[0].mxu0
        %2819 = vmatprep.mubr.f32.mxu0 0.0
        %2820 = vmatmul.mubr.f32.gmra.mrb[0].mxu0 %v2690
        %v2821 = vpop.f32.mrb[0].mxu0
        %v2822 = vadd.f32 %v2661, %v2821
        %v2823 = vpop.f32.mrb[0].mxu0
        %2824 = vmatprep.mubr.f32.mxu0 0.0
        %2825 = vmatmul.mubr.f32.gmra.mrb[0].mxu0 %v2693
        %v2826 = vpop.f32.mrb[0].mxu0
        %v2827 = vadd.f32 %v2661, %v2826
        %v2828 = vpop.f32.mrb[0].mxu0
        %2829 = vmatprep.mubr.f32.mxu0 0.0
        %2830 = vmatmul.mubr.f32.gmra.mrb[0].mxu0 %v2696
        %v2831 = vpop.f32.mrb[0].mxu0
        %v2832 = vadd.f32 %v2661, %v2831
        %v2833 = vpop.f32.mrb[0].mxu0
        %2834 = vmatprep.mubr.f32.mxu0 0.0
        %2835 = vmatmul.mubr.f32.gmra.mrb[0].mxu0 %v2699
        %v2836 = vpop.f32.mrb[0].mxu0
        %v2837 = vadd.f32 %v2661, %v2836
        %v2838 = vpop.f32.mrb[0].mxu0
        %2839 = vmatprep.mubr.f32.mxu0 0.0
        %2840 = vmatmul.mubr.f32.gmra.mrb[0].mxu0 %v2702
        %v2841 = vpop.f32.mrb[0].mxu0
        %v2842 = vadd.f32 %v2661, %v2841
        %v2843 = vpop.f32.mrb[0].mxu0
        %2844 = vmatprep.mubr.f32.mxu0 0.0
        %2845 = vmatmul.mubr.f32.gmra.mrb[0].mxu0 %v2705
        %v2846 = vpop.f32.mrb[0].mxu0
        %v2847 = vadd.f32 %v2661, %v2846
        %v2848 = vpop.f32.mrb[0].mxu0
        %2849 = vmatprep.mubr.f32.mxu0 0.0
        %2850 = vmatmul.mubr.f32.gmra.mrb[0].mxu0 %v2708
        %v2851 = vpop.f32.mrb[0].mxu0
        %v2852 = vadd.f32 %v2661, %v2851
        %v2853 = vpop.f32.mrb[0].mxu0
        %2854 = vdwg.mxu0
        %v2855 = vmax.f32 %v2777, 0.0
        %v2856 = vmax.f32 %v2782, 0.0
        %v2857 = vmax.f32 %v2787, 0.0
        %v2858 = vmax.f32 %v2792, 0.0
        %v2859 = vmax.f32 %v2797, 0.0
        %v2860 = vmax.f32 %v2802, 0.0
        %v2861 = vmax.f32 %v2807, 0.0
        %v2862 = vmax.f32 %v2812, 0.0
        %v2863 = vmax.f32 %v2817, 0.0
        %v2864 = vmax.f32 %v2822, 0.0
        %v2865 = vmax.f32 %v2827, 0.0
        %v2866 = vmax.f32 %v2832, 0.0
        %v2867 = vmax.f32 %v2837, 0.0
        %v2868 = vmax.f32 %v2842, 0.0
        %v2869 = vmax.f32 %v2847, 0.0
        %v2870 = vmax.f32 %v2852, 0.0
        %s2871 = scalar_lea.vmem [#allocation2], 288
        %v2872 = vld [vmem:[%s2871] sm:$0xff]
        %v2873 = vld [vmem:[%s2871 + $0x8] sm:$0xff]
        %v2874 = vld [vmem:[%s2871 + $0x10] sm:$0xff]
        %v2875 = vld [vmem:[%s2871 + $0x18] sm:$0xff]
        %v2876 = vld [vmem:[%s2871 + $0x20] sm:$0xff]
        %v2877 = vld [vmem:[%s2871 + $0x28] sm:$0xff]
        %v2878 = vld [vmem:[%s2 + $0x6] sm:$0x1]
        %v2895 = vrot.slane %v2855, 4
        %v2896 = vsel %vm549, %v2497, %v2895
        %v2897 = vrot.slane %v2856, 4
        %v2898 = vsel %vm549, %v2895, %v2897
        %v2899 = vrot.slane %v2857, 4
        %v2900 = vsel %vm549, %v2497, %v2899
        %v2901 = vrot.slane %v2858, 4
        %v2902 = vsel %vm549, %v2899, %v2901
        %v2903 = vrot.slane %v2859, 4
        %v2904 = vsel %vm549, %v2497, %v2903
        %v2905 = vrot.slane %v2860, 4
        %v2906 = vsel %vm549, %v2903, %v2905
        %v2907 = vrot.slane %v2861, 4
        %v2908 = vsel %vm549, %v2497, %v2907
        %v2909 = vrot.slane %v2862, 4
        %v2910 = vsel %vm549, %v2907, %v2909
        %v2911 = vrot.slane %v2863, 4
        %v2912 = vsel %vm549, %v2497, %v2911
        %v2913 = vrot.slane %v2864, 4
        %v2914 = vsel %vm549, %v2911, %v2913
        %v2915 = vrot.slane %v2865, 4
        %v2916 = vsel %vm549, %v2497, %v2915
        %v2917 = vrot.slane %v2866, 4
        %v2918 = vsel %vm549, %v2915, %v2917
        %v2919 = vrot.slane %v2867, 4
        %v2920 = vsel %vm549, %v2497, %v2919
        %v2921 = vrot.slane %v2868, 4
        %v2922 = vsel %vm549, %v2919, %v2921
        %v2923 = vrot.slane %v2869, 4
        %v2924 = vsel %vm549, %v2497, %v2923
        %v2925 = vrot.slane %v2870, 4
        %v2926 = vsel %vm549, %v2923, %v2925
        %2927 = vrot.lane.b32.xlu0 %v2896, 16
        %v2928 = vpop.permute.xlu0 %2927
        %2929 = vrot.lane.b32.xlu0 %v2898, 16
        %v2930 = vpop.permute.xlu0 %2929
        %2931 = vrot.lane.b32.xlu0 %v2900, 16
        %v2932 = vpop.permute.xlu0 %2931
        %2933 = vrot.lane.b32.xlu0 %v2902, 16
        %v2934 = vpop.permute.xlu0 %2933
        %2935 = vrot.lane.b32.xlu0 %v2904, 16
        %v2936 = vpop.permute.xlu0 %2935
        %2937 = vrot.lane.b32.xlu0 %v2906, 16
        %v2938 = vpop.permute.xlu0 %2937
        %2939 = vrot.lane.b32.xlu0 %v2908, 16
        %v2940 = vpop.permute.xlu0 %2939
        %2941 = vrot.lane.b32.xlu0 %v2910, 16
        %v2942 = vpop.permute.xlu0 %2941
        %2943 = vrot.lane.b32.xlu0 %v2912, 16
        %v2944 = vpop.permute.xlu0 %2943
        %2945 = vrot.lane.b32.xlu0 %v2914, 16
        %v2946 = vpop.permute.xlu0 %2945
        %2947 = vrot.lane.b32.xlu0 %v2916, 16
        %v2948 = vpop.permute.xlu0 %2947
        %2949 = vrot.lane.b32.xlu0 %v2918, 16
        %v2950 = vpop.permute.xlu0 %2949
        %2951 = vrot.lane.b32.xlu0 %v2920, 16
        %v2952 = vpop.permute.xlu0 %2951
        %2953 = vrot.lane.b32.xlu0 %v2922, 16
        %v2954 = vpop.permute.xlu0 %2953
        %2955 = vrot.lane.b32.xlu0 %v2924, 16
        %v2956 = vpop.permute.xlu0 %2955
        %2957 = vrot.lane.b32.xlu0 %v2926, 16
        %v2958 = vpop.permute.xlu0 %2957
        %2975 = vrot.lane.b32.xlu0 %v2855, 32
        %v2976 = vpop.permute.xlu0 %2975
        %2977 = vrot.lane.b32.xlu0 %v2856, 32
        %v2978 = vpop.permute.xlu0 %2977
        %2979 = vrot.lane.b32.xlu0 %v2857, 32
        %v2980 = vpop.permute.xlu0 %2979
        %2981 = vrot.lane.b32.xlu0 %v2858, 32
        %v2982 = vpop.permute.xlu0 %2981
        %2983 = vrot.lane.b32.xlu0 %v2859, 32
        %v2984 = vpop.permute.xlu0 %2983
        %2985 = vrot.lane.b32.xlu0 %v2860, 32
        %v2986 = vpop.permute.xlu0 %2985
        %2987 = vrot.lane.b32.xlu0 %v2861, 32
        %v2988 = vpop.permute.xlu0 %2987
        %2989 = vrot.lane.b32.xlu0 %v2862, 32
        %v2990 = vpop.permute.xlu0 %2989
        %2991 = vrot.lane.b32.xlu0 %v2863, 32
        %v2992 = vpop.permute.xlu0 %2991
        %2993 = vrot.lane.b32.xlu0 %v2864, 32
        %v2994 = vpop.permute.xlu0 %2993
        %2995 = vrot.lane.b32.xlu0 %v2865, 32
        %v2996 = vpop.permute.xlu0 %2995
        %2997 = vrot.lane.b32.xlu0 %v2866, 32
        %v2998 = vpop.permute.xlu0 %2997
        %2999 = vrot.lane.b32.xlu0 %v2867, 32
        %v3000 = vpop.permute.xlu0 %2999
        %3001 = vrot.lane.b32.xlu0 %v2868, 32
        %v3002 = vpop.permute.xlu0 %3001
        %3003 = vrot.lane.b32.xlu0 %v2869, 32
        %v3004 = vpop.permute.xlu0 %3003
        %3005 = vrot.lane.b32.xlu0 %v2870, 32
        %v3006 = vpop.permute.xlu0 %3005
        %v3023 = vsel %vm970, 0.0, %v2928
        %v3024 = vsel %vm970, %v2855, %v2930
        %v3025 = vsel %vm970, 0.0, %v2932
        %v3026 = vsel %vm970, %v2857, %v2934
        %v3027 = vsel %vm970, 0.0, %v2936
        %v3028 = vsel %vm970, %v2859, %v2938
        %v3029 = vsel %vm970, 0.0, %v2940
        %v3030 = vsel %vm970, %v2861, %v2942
        %v3031 = vsel %vm970, 0.0, %v2944
        %v3032 = vsel %vm970, %v2863, %v2946
        %v3033 = vsel %vm970, 0.0, %v2948
        %v3034 = vsel %vm970, %v2865, %v2950
        %v3035 = vsel %vm970, 0.0, %v2952
        %v3036 = vsel %vm970, %v2867, %v2954
        %v3037 = vsel %vm970, 0.0, %v2956
        %v3038 = vsel %vm970, %v2869, %v2958
        %v3039 = vsel %vm987, %v3023, %v2976
        %v3040 = vsel %vm987, %v3024, %v2978
        %v3041 = vsel %vm987, %v3025, %v2980
        %v3042 = vsel %vm987, %v3026, %v2982
        %v3043 = vsel %vm987, %v3027, %v2984
        %v3044 = vsel %vm987, %v3028, %v2986
        %v3045 = vsel %vm987, %v3029, %v2988
        %v3046 = vsel %vm987, %v3030, %v2990
        %v3047 = vsel %vm987, %v3031, %v2992
        %v3048 = vsel %vm987, %v3032, %v2994
        %v3049 = vsel %vm987, %v3033, %v2996
        %v3050 = vsel %vm987, %v3034, %v2998
        %v3051 = vsel %vm987, %v3035, %v3000
        %v3052 = vsel %vm987, %v3036, %v3002
        %v3053 = vsel %vm987, %v3037, %v3004
        %v3054 = vsel %vm987, %v3038, %v3006
        %v3055 = vlaneseq
        %v3056 = vshrl.u32 %v3055, 7
        %v3057 = vsub.s32 0, %v3056
        %v3058 = vrot.slane %v2878, %v3057
        %v3060 = vsel %vm1008, %v3039, 0
        %v3063 = vsel %vm1008, %v3040, 0
        %v3066 = vsel %vm1008, %v3041, 0
        %v3069 = vsel %vm1008, %v3042, 0
        %v3072 = vsel %vm1008, %v3043, 0
        %v3075 = vsel %vm1008, %v3044, 0
        %v3078 = vsel %vm1008, %v3045, 0
        %v3081 = vsel %vm1008, %v3046, 0
        %v3084 = vsel %vm1008, %v3047, 0
        %v3087 = vsel %vm1008, %v3048, 0
        %v3090 = vsel %vm1008, %v3049, 0
        %v3093 = vsel %vm1008, %v3050, 0
        %v3096 = vsel %vm1008, %v3051, 0
        %v3099 = vsel %vm1008, %v3052, 0
        %v3102 = vsel %vm1008, %v3053, 0
        %v3105 = vsel %vm1008, %v3054, 0
        %3107 = vmatprep.subr.mxu0 0.0
        %3108 = vmatpush1.msra.mxu0 %v2872
        %3109 = vmatprep.subr.mxu0 0.0
        %3110 = vmatpush1.msra.mxu0 %v2873
        %3111 = vmatprep.subr.mxu0 0.0
        %3112 = vmatpush1.msra.mxu0 %v2874
        %3113 = vmatprep.subr.mxu0 0.0
        %3114 = vmatpush1.msra.mxu0 %v2875
        %3115 = vmatprep.subr.mxu0 0.0
        %3116 = vmatpush1.msra.mxu0 %v2876
        %3117 = vmatprep.subr.mxu0 0.0
        %3118 = vmatpush1.msra.mxu0 %v2877
        %3119 = vmatprep.subr.mxu0 0.0
        %3120 = vmatpush1.msra.mxu0 0.0
        %3121 = vmatprep.subr.mxu0 0.0
        %3122 = vmatpush1.msra.mxu0 0.0
        %3123 = vmatprep.subr.mxu0 0.0
        %3124 = vmatpush1.msra.mxu0 0.0
        %3125 = vmatprep.subr.mxu0 0.0
        %3126 = vmatpush1.msra.mxu0 0.0
        %3127 = vmatprep.subr.mxu0 0.0
        %3128 = vmatpush1.msra.mxu0 0.0
        %3129 = vmatprep.subr.mxu0 0.0
        %3130 = vmatpush1.msra.mxu0 0.0
        %3131 = vmatprep.subr.mxu0 0.0
        %3132 = vmatpush1.msra.mxu0 0.0
        %3133 = vmatprep.subr.mxu0 0.0
        %3134 = vmatpush1.msra.mxu0 0.0
        %3135 = vmatprep.subr.mxu0 0.0
        %3136 = vmatpush1.msra.mxu0 0.0
        %3137 = vmatprep.subr.mxu0 0.0
        %3138 = vmatpush1.msra.mxu0 0.0
        %3139 = vmatprep.subr.mxu0 0.0
        %3140 = vmatpush1.msra.mxu0 0.0
        %3141 = vmatprep.subr.mxu0 0.0
        %3142 = vmatpush1.msra.mxu0 0.0
        %3143 = vmatprep.subr.mxu0 0.0
        %3144 = vmatpush1.msra.mxu0 0.0
        %3145 = vmatprep.subr.mxu0 0.0
        %3146 = vmatpush1.msra.mxu0 0.0
        %3147 = vmatprep.subr.mxu0 0.0
        %3148 = vmatpush1.msra.mxu0 0.0
        %3149 = vmatprep.subr.mxu0 0.0
        %3150 = vmatpush1.msra.mxu0 0.0
        %3151 = vmatprep.subr.mxu0 0.0
        %3152 = vmatpush1.msra.mxu0 0.0
        %3153 = vmatprep.subr.mxu0 0.0
        %3154 = vmatpush1.msra.mxu0 0.0
        %3155 = vmatprep.subr.mxu0 0.0
        %3156 = vmatpush1.msra.mxu0 0.0
        %3157 = vmatprep.subr.mxu0 0.0
        %3158 = vmatpush1.msra.mxu0 0.0
        %3159 = vmatprep.subr.mxu0 0.0
        %3160 = vmatpush1.msra.mxu0 0.0
        %3161 = vmatprep.subr.mxu0 0.0
        %3162 = vmatpush1.msra.mxu0 0.0
        %3163 = vmatprep.subr.mxu0 0.0
        %3164 = vmatpush1.msra.mxu0 0.0
        %3165 = vmatprep.subr.mxu0 0.0
        %3166 = vmatpush1.msra.mxu0 0.0
        %3167 = vmatprep.subr.mxu0 0.0
        %3168 = vmatpush1.msra.mxu0 0.0
        %3169 = vmatprep.subr.mxu0 0.0
        %3170 = vmatpush1.msra.mxu0 0.0
        %3171 = vmatprep.mubr.f32.mxu0 0.0
        %3172 = vmatmul.mubr.f32.gmra.mrb[0].mxu0 %v3060
        %v3173 = vpop.f32.mrb[0].mxu0
        %v3174 = vadd.f32 %v3058, %v3173
        %v3175 = vpop.f32.mrb[0].mxu0
        %3176 = vmatprep.mubr.f32.mxu0 0.0
        %3177 = vmatmul.mubr.f32.gmra.mrb[0].mxu0 %v3063
        %v3178 = vpop.f32.mrb[0].mxu0
        %v3179 = vadd.f32 %v3058, %v3178
        %v3180 = vpop.f32.mrb[0].mxu0
        %3181 = vmatprep.mubr.f32.mxu0 0.0
        %3182 = vmatmul.mubr.f32.gmra.mrb[0].mxu0 %v3066
        %v3183 = vpop.f32.mrb[0].mxu0
        %v3184 = vadd.f32 %v3058, %v3183
        %v3185 = vpop.f32.mrb[0].mxu0
        %3186 = vmatprep.mubr.f32.mxu0 0.0
        %3187 = vmatmul.mubr.f32.gmra.mrb[0].mxu0 %v3069
        %v3188 = vpop.f32.mrb[0].mxu0
        %v3189 = vadd.f32 %v3058, %v3188
        %v3190 = vpop.f32.mrb[0].mxu0
        %3191 = vmatprep.mubr.f32.mxu0 0.0
        %3192 = vmatmul.mubr.f32.gmra.mrb[0].mxu0 %v3072
        %v3193 = vpop.f32.mrb[0].mxu0
        %v3194 = vadd.f32 %v3058, %v3193
        %v3195 = vpop.f32.mrb[0].mxu0
        %3196 = vmatprep.mubr.f32.mxu0 0.0
        %3197 = vmatmul.mubr.f32.gmra.mrb[0].mxu0 %v3075
        %v3198 = vpop.f32.mrb[0].mxu0
        %v3199 = vadd.f32 %v3058, %v3198
        %v3200 = vpop.f32.mrb[0].mxu0
        %3201 = vmatprep.mubr.f32.mxu0 0.0
        %3202 = vmatmul.mubr.f32.gmra.mrb[0].mxu0 %v3078
        %v3203 = vpop.f32.mrb[0].mxu0
        %v3204 = vadd.f32 %v3058, %v3203
        %v3205 = vpop.f32.mrb[0].mxu0
        %3206 = vmatprep.mubr.f32.mxu0 0.0
        %3207 = vmatmul.mubr.f32.gmra.mrb[0].mxu0 %v3081
        %v3208 = vpop.f32.mrb[0].mxu0
        %v3209 = vadd.f32 %v3058, %v3208
        %v3210 = vpop.f32.mrb[0].mxu0
        %3211 = vmatprep.mubr.f32.mxu0 0.0
        %3212 = vmatmul.mubr.f32.gmra.mrb[0].mxu0 %v3084
        %v3213 = vpop.f32.mrb[0].mxu0
        %v3214 = vadd.f32 %v3058, %v3213
        %v3215 = vpop.f32.mrb[0].mxu0
        %3216 = vmatprep.mubr.f32.mxu0 0.0
        %3217 = vmatmul.mubr.f32.gmra.mrb[0].mxu0 %v3087
        %v3218 = vpop.f32.mrb[0].mxu0
        %v3219 = vadd.f32 %v3058, %v3218
        %v3220 = vpop.f32.mrb[0].mxu0
        %3221 = vmatprep.mubr.f32.mxu0 0.0
        %3222 = vmatmul.mubr.f32.gmra.mrb[0].mxu0 %v3090
        %v3223 = vpop.f32.mrb[0].mxu0
        %v3224 = vadd.f32 %v3058, %v3223
        %v3225 = vpop.f32.mrb[0].mxu0
        %3226 = vmatprep.mubr.f32.mxu0 0.0
        %3227 = vmatmul.mubr.f32.gmra.mrb[0].mxu0 %v3093
        %v3228 = vpop.f32.mrb[0].mxu0
        %v3229 = vadd.f32 %v3058, %v3228
        %v3230 = vpop.f32.mrb[0].mxu0
        %3231 = vmatprep.mubr.f32.mxu0 0.0
        %3232 = vmatmul.mubr.f32.gmra.mrb[0].mxu0 %v3096
        %v3233 = vpop.f32.mrb[0].mxu0
        %v3234 = vadd.f32 %v3058, %v3233
        %v3235 = vpop.f32.mrb[0].mxu0
        %3236 = vmatprep.mubr.f32.mxu0 0.0
        %3237 = vmatmul.mubr.f32.gmra.mrb[0].mxu0 %v3099
        %v3238 = vpop.f32.mrb[0].mxu0
        %v3239 = vadd.f32 %v3058, %v3238
        %v3240 = vpop.f32.mrb[0].mxu0
        %3241 = vmatprep.mubr.f32.mxu0 0.0
        %3242 = vmatmul.mubr.f32.gmra.mrb[0].mxu0 %v3102
        %v3243 = vpop.f32.mrb[0].mxu0
        %v3244 = vadd.f32 %v3058, %v3243
        %v3245 = vpop.f32.mrb[0].mxu0
        %3246 = vmatprep.mubr.f32.mxu0 0.0
        %3247 = vmatmul.mubr.f32.gmra.mrb[0].mxu0 %v3105
        %v3248 = vpop.f32.mrb[0].mxu0
        %v3249 = vadd.f32 %v3058, %v3248
        %v3250 = vpop.f32.mrb[0].mxu0
        %3251 = vdwg.mxu0
        %v3252 = vmax.f32 %v3174, 0.0
        %v3253 = vmax.f32 %v3179, 0.0
        %v3254 = vmax.f32 %v3184, 0.0
        %v3255 = vmax.f32 %v3189, 0.0
        %v3256 = vmax.f32 %v3194, 0.0
        %v3257 = vmax.f32 %v3199, 0.0
        %v3258 = vmax.f32 %v3204, 0.0
        %v3259 = vmax.f32 %v3209, 0.0
        %v3260 = vmax.f32 %v3214, 0.0
        %v3261 = vmax.f32 %v3219, 0.0
        %v3262 = vmax.f32 %v3224, 0.0
        %v3263 = vmax.f32 %v3229, 0.0
        %v3264 = vmax.f32 %v3234, 0.0
        %v3265 = vmax.f32 %v3239, 0.0
        %v3266 = vmax.f32 %v3244, 0.0
        %v3267 = vmax.f32 %v3249, 0.0
        %v3268 = vadd.f32 %v3252, %v2456
        %v3269 = vadd.f32 %v3253, %v2457
        %v3270 = vadd.f32 %v3254, %v2458
        %v3271 = vadd.f32 %v3255, %v2459
        %v3272 = vadd.f32 %v3256, %v2460
        %v3273 = vadd.f32 %v3257, %v2461
        %v3274 = vadd.f32 %v3258, %v2462
        %v3275 = vadd.f32 %v3259, %v2463
        %v3276 = vadd.f32 %v3260, %v2464
        %v3277 = vadd.f32 %v3261, %v2465
        %v3278 = vadd.f32 %v3262, %v2466
        %v3279 = vadd.f32 %v3263, %v2467
        %v3280 = vadd.f32 %v3264, %v2468
        %v3281 = vadd.f32 %v3265, %v2469
        %v3282 = vadd.f32 %v3266, %v2470
        %v3283 = vadd.f32 %v3267, %v2471
        %v3284 = vmax.f32 %v3268, 0.0
        %v3285 = vmax.f32 %v3269, 0.0
        %v3286 = vmax.f32 %v3270, 0.0
        %v3287 = vmax.f32 %v3271, 0.0
        %v3288 = vmax.f32 %v3272, 0.0
        %v3289 = vmax.f32 %v3273, 0.0
        %v3290 = vmax.f32 %v3274, 0.0
        %v3291 = vmax.f32 %v3275, 0.0
        %v3292 = vmax.f32 %v3276, 0.0
        %v3293 = vmax.f32 %v3277, 0.0
        %v3294 = vmax.f32 %v3278, 0.0
        %v3295 = vmax.f32 %v3279, 0.0
        %v3296 = vmax.f32 %v3280, 0.0
        %v3297 = vmax.f32 %v3281, 0.0
        %v3298 = vmax.f32 %v3282, 0.0
        %v3299 = vmax.f32 %v3283, 0.0
        %s3300 = scalar_lea.vmem [#allocation2], 336
        %v3301 = vld [vmem:[%s3300] sm:$0xff]
        %v3302 = vld [vmem:[%s3300 + $0x8] sm:$0xff]
        %v3303 = vld [vmem:[%s3300 + $0x10] sm:$0xff]
        %v3304 = vld [vmem:[%s3300 + $0x18] sm:$0xff]
        %v3305 = vld [vmem:[%s3300 + $0x20] sm:$0xff]
        %v3306 = vld [vmem:[%s3300 + $0x28] sm:$0xff]
        %v3307 = vld [vmem:[%s2 + $0x7] sm:$0x1]
        %3316 = vrot.lane.b32.xlu0 0.0, 16
        %v3317 = vpop.permute.xlu0 %3316
        %3318 = vrot.lane.b32.xlu0 %v3284, 16
        %v3319 = vpop.permute.xlu0 %3318
        %3320 = vrot.lane.b32.xlu0 %v3286, 16
        %v3321 = vpop.permute.xlu0 %3320
        %3322 = vrot.lane.b32.xlu0 %v3288, 16
        %v3323 = vpop.permute.xlu0 %3322
        %3324 = vrot.lane.b32.xlu0 %v3290, 16
        %v3325 = vpop.permute.xlu0 %3324
        %3326 = vrot.lane.b32.xlu0 %v3292, 16
        %v3327 = vpop.permute.xlu0 %3326
        %3328 = vrot.lane.b32.xlu0 %v3294, 16
        %v3329 = vpop.permute.xlu0 %3328
        %3330 = vrot.lane.b32.xlu0 %v3296, 16
        %v3331 = vpop.permute.xlu0 %3330
        %3332 = vrot.lane.b32.xlu0 %v3298, 16
        %v3333 = vpop.permute.xlu0 %3332
        %3351 = vrot.lane.b32.xlu0 %v3284, 32
        %v3352 = vpop.permute.xlu0 %3351
        %3353 = vrot.lane.b32.xlu0 %v3285, 32
        %v3354 = vpop.permute.xlu0 %3353
        %3355 = vrot.lane.b32.xlu0 %v3286, 32
        %v3356 = vpop.permute.xlu0 %3355
        %3357 = vrot.lane.b32.xlu0 %v3287, 32
        %v3358 = vpop.permute.xlu0 %3357
        %3359 = vrot.lane.b32.xlu0 %v3288, 32
        %v3360 = vpop.permute.xlu0 %3359
        %3361 = vrot.lane.b32.xlu0 %v3289, 32
        %v3362 = vpop.permute.xlu0 %3361
        %3363 = vrot.lane.b32.xlu0 %v3290, 32
        %v3364 = vpop.permute.xlu0 %3363
        %3365 = vrot.lane.b32.xlu0 %v3291, 32
        %v3366 = vpop.permute.xlu0 %3365
        %3367 = vrot.lane.b32.xlu0 %v3292, 32
        %v3368 = vpop.permute.xlu0 %3367
        %3369 = vrot.lane.b32.xlu0 %v3293, 32
        %v3370 = vpop.permute.xlu0 %3369
        %3371 = vrot.lane.b32.xlu0 %v3294, 32
        %v3372 = vpop.permute.xlu0 %3371
        %3373 = vrot.lane.b32.xlu0 %v3295, 32
        %v3374 = vpop.permute.xlu0 %3373
        %3375 = vrot.lane.b32.xlu0 %v3296, 32
        %v3376 = vpop.permute.xlu0 %3375
        %3377 = vrot.lane.b32.xlu0 %v3297, 32
        %v3378 = vpop.permute.xlu0 %3377
        %3379 = vrot.lane.b32.xlu0 %v3298, 32
        %v3380 = vpop.permute.xlu0 %3379
        %3381 = vrot.lane.b32.xlu0 %v3299, 32
        %v3382 = vpop.permute.xlu0 %3381
        %v3399 = vsel %vm970, 0.0, %v3317
        %v3400 = vsel %vm970, 0.0, %v3319
        %v3401 = vsel %vm970, 0.0, %v3321
        %v3402 = vsel %vm970, 0.0, %v3323
        %v3403 = vsel %vm970, 0.0, %v3325
        %v3404 = vsel %vm970, 0.0, %v3327
        %v3405 = vsel %vm970, 0.0, %v3329
        %v3406 = vsel %vm970, 0.0, %v3331
        %v3407 = vsel %vm970, 0.0, %v3333
        %v3408 = vsel %vm987, %v3399, %v3352
        %v3409 = vsel %vm987, %v3400, %v3354
        %v3410 = vsel %vm987, %v3399, %v3356
        %v3411 = vsel %vm987, %v3401, %v3358
        %v3412 = vsel %vm987, %v3399, %v3360
        %v3413 = vsel %vm987, %v3402, %v3362
        %v3414 = vsel %vm987, %v3399, %v3364
        %v3415 = vsel %vm987, %v3403, %v3366
        %v3416 = vsel %vm987, %v3399, %v3368
        %v3417 = vsel %vm987, %v3404, %v3370
        %v3418 = vsel %vm987, %v3399, %v3372
        %v3419 = vsel %vm987, %v3405, %v3374
        %v3420 = vsel %vm987, %v3399, %v3376
        %v3421 = vsel %vm987, %v3406, %v3378
        %v3422 = vsel %vm987, %v3399, %v3380
        %v3423 = vsel %vm987, %v3407, %v3382
        %v3424 = vlaneseq
        %v3425 = vshrl.u32 %v3424, 7
        %v3426 = vsub.s32 0, %v3425
        %v3427 = vrot.slane %v3307, %v3426
        %v3429 = vsel %vm1008, %v3408, 0
        %v3432 = vsel %vm1008, %v3409, 0
        %v3435 = vsel %vm1008, %v3410, 0
        %v3438 = vsel %vm1008, %v3411, 0
        %v3441 = vsel %vm1008, %v3412, 0
        %v3444 = vsel %vm1008, %v3413, 0
        %v3447 = vsel %vm1008, %v3414, 0
        %v3450 = vsel %vm1008, %v3415, 0
        %v3453 = vsel %vm1008, %v3416, 0
        %v3456 = vsel %vm1008, %v3417, 0
        %v3459 = vsel %vm1008, %v3418, 0
        %v3462 = vsel %vm1008, %v3419, 0
        %v3465 = vsel %vm1008, %v3420, 0
        %v3468 = vsel %vm1008, %v3421, 0
        %v3471 = vsel %vm1008, %v3422, 0
        %v3474 = vsel %vm1008, %v3423, 0
        %3476 = vmatprep.subr.mxu0 0.0
        %3477 = vmatpush1.msra.mxu0 %v3301
        %3478 = vmatprep.subr.mxu0 0.0
        %3479 = vmatpush1.msra.mxu0 %v3302
        %3480 = vmatprep.subr.mxu0 0.0
        %3481 = vmatpush1.msra.mxu0 %v3303
        %3482 = vmatprep.subr.mxu0 0.0
        %3483 = vmatpush1.msra.mxu0 %v3304
        %3484 = vmatprep.subr.mxu0 0.0
        %3485 = vmatpush1.msra.mxu0 %v3305
        %3486 = vmatprep.subr.mxu0 0.0
        %3487 = vmatpush1.msra.mxu0 %v3306
        %3488 = vmatprep.subr.mxu0 0.0
        %3489 = vmatpush1.msra.mxu0 0.0
        %3490 = vmatprep.subr.mxu0 0.0
        %3491 = vmatpush1.msra.mxu0 0.0
        %3492 = vmatprep.subr.mxu0 0.0
        %3493 = vmatpush1.msra.mxu0 0.0
        %3494 = vmatprep.subr.mxu0 0.0
        %3495 = vmatpush1.msra.mxu0 0.0
        %3496 = vmatprep.subr.mxu0 0.0
        %3497 = vmatpush1.msra.mxu0 0.0
        %3498 = vmatprep.subr.mxu0 0.0
        %3499 = vmatpush1.msra.mxu0 0.0
        %3500 = vmatprep.subr.mxu0 0.0
        %3501 = vmatpush1.msra.mxu0 0.0
        %3502 = vmatprep.subr.mxu0 0.0
        %3503 = vmatpush1.msra.mxu0 0.0
        %3504 = vmatprep.subr.mxu0 0.0
        %3505 = vmatpush1.msra.mxu0 0.0
        %3506 = vmatprep.subr.mxu0 0.0
        %3507 = vmatpush1.msra.mxu0 0.0
        %3508 = vmatprep.subr.mxu0 0.0
        %3509 = vmatpush1.msra.mxu0 0.0
        %3510 = vmatprep.subr.mxu0 0.0
        %3511 = vmatpush1.msra.mxu0 0.0
        %3512 = vmatprep.subr.mxu0 0.0
        %3513 = vmatpush1.msra.mxu0 0.0
        %3514 = vmatprep.subr.mxu0 0.0
        %3515 = vmatpush1.msra.mxu0 0.0
        %3516 = vmatprep.subr.mxu0 0.0
        %3517 = vmatpush1.msra.mxu0 0.0
        %3518 = vmatprep.subr.mxu0 0.0
        %3519 = vmatpush1.msra.mxu0 0.0
        %3520 = vmatprep.subr.mxu0 0.0
        %3521 = vmatpush1.msra.mxu0 0.0
        %3522 = vmatprep.subr.mxu0 0.0
        %3523 = vmatpush1.msra.mxu0 0.0
        %3524 = vmatprep.subr.mxu0 0.0
        %3525 = vmatpush1.msra.mxu0 0.0
        %3526 = vmatprep.subr.mxu0 0.0
        %3527 = vmatpush1.msra.mxu0 0.0
        %3528 = vmatprep.subr.mxu0 0.0
        %3529 = vmatpush1.msra.mxu0 0.0
        %3530 = vmatprep.subr.mxu0 0.0
        %3531 = vmatpush1.msra.mxu0 0.0
        %3532 = vmatprep.subr.mxu0 0.0
        %3533 = vmatpush1.msra.mxu0 0.0
        %3534 = vmatprep.subr.mxu0 0.0
        %3535 = vmatpush1.msra.mxu0 0.0
        %3536 = vmatprep.subr.mxu0 0.0
        %3537 = vmatpush1.msra.mxu0 0.0
        %3538 = vmatprep.subr.mxu0 0.0
        %3539 = vmatpush1.msra.mxu0 0.0
        %3540 = vmatprep.mubr.f32.mxu0 0.0
        %3541 = vmatmul.mubr.f32.gmra.mrb[0].mxu0 %v3429
        %v3542 = vpop.f32.mrb[0].mxu0
        %v3543 = vadd.f32 %v3427, %v3542
        %v3544 = vpop.f32.mrb[0].mxu0
        %3545 = vmatprep.mubr.f32.mxu0 0.0
        %3546 = vmatmul.mubr.f32.gmra.mrb[0].mxu0 %v3432
        %v3547 = vpop.f32.mrb[0].mxu0
        %v3548 = vadd.f32 %v3427, %v3547
        %v3549 = vpop.f32.mrb[0].mxu0
        %3550 = vmatprep.mubr.f32.mxu0 0.0
        %3551 = vmatmul.mubr.f32.gmra.mrb[0].mxu0 %v3435
        %v3552 = vpop.f32.mrb[0].mxu0
        %v3553 = vadd.f32 %v3427, %v3552
        %v3554 = vpop.f32.mrb[0].mxu0
        %3555 = vmatprep.mubr.f32.mxu0 0.0
        %3556 = vmatmul.mubr.f32.gmra.mrb[0].mxu0 %v3438
        %v3557 = vpop.f32.mrb[0].mxu0
        %v3558 = vadd.f32 %v3427, %v3557
        %v3559 = vpop.f32.mrb[0].mxu0
        %3560 = vmatprep.mubr.f32.mxu0 0.0
        %3561 = vmatmul.mubr.f32.gmra.mrb[0].mxu0 %v3441
        %v3562 = vpop.f32.mrb[0].mxu0
        %v3563 = vadd.f32 %v3427, %v3562
        %v3564 = vpop.f32.mrb[0].mxu0
        %3565 = vmatprep.mubr.f32.mxu0 0.0
        %3566 = vmatmul.mubr.f32.gmra.mrb[0].mxu0 %v3444
        %v3567 = vpop.f32.mrb[0].mxu0
        %v3568 = vadd.f32 %v3427, %v3567
        %v3569 = vpop.f32.mrb[0].mxu0
        %3570 = vmatprep.mubr.f32.mxu0 0.0
        %3571 = vmatmul.mubr.f32.gmra.mrb[0].mxu0 %v3447
        %v3572 = vpop.f32.mrb[0].mxu0
        %v3573 = vadd.f32 %v3427, %v3572
        %v3574 = vpop.f32.mrb[0].mxu0
        %3575 = vmatprep.mubr.f32.mxu0 0.0
        %3576 = vmatmul.mubr.f32.gmra.mrb[0].mxu0 %v3450
        %v3577 = vpop.f32.mrb[0].mxu0
        %v3578 = vadd.f32 %v3427, %v3577
        %v3579 = vpop.f32.mrb[0].mxu0
        %3580 = vmatprep.mubr.f32.mxu0 0.0
        %3581 = vmatmul.mubr.f32.gmra.mrb[0].mxu0 %v3453
        %v3582 = vpop.f32.mrb[0].mxu0
        %v3583 = vadd.f32 %v3427, %v3582
        %v3584 = vpop.f32.mrb[0].mxu0
        %3585 = vmatprep.mubr.f32.mxu0 0.0
        %3586 = vmatmul.mubr.f32.gmra.mrb[0].mxu0 %v3456
        %v3587 = vpop.f32.mrb[0].mxu0
        %v3588 = vadd.f32 %v3427, %v3587
        %v3589 = vpop.f32.mrb[0].mxu0
        %3590 = vmatprep.mubr.f32.mxu0 0.0
        %3591 = vmatmul.mubr.f32.gmra.mrb[0].mxu0 %v3459
        %v3592 = vpop.f32.mrb[0].mxu0
        %v3593 = vadd.f32 %v3427, %v3592
        %v3594 = vpop.f32.mrb[0].mxu0
        %3595 = vmatprep.mubr.f32.mxu0 0.0
        %3596 = vmatmul.mubr.f32.gmra.mrb[0].mxu0 %v3462
        %v3597 = vpop.f32.mrb[0].mxu0
        %v3598 = vadd.f32 %v3427, %v3597
        %v3599 = vpop.f32.mrb[0].mxu0
        %3600 = vmatprep.mubr.f32.mxu0 0.0
        %3601 = vmatmul.mubr.f32.gmra.mrb[0].mxu0 %v3465
        %v3602 = vpop.f32.mrb[0].mxu0
        %v3603 = vadd.f32 %v3427, %v3602
        %v3604 = vpop.f32.mrb[0].mxu0
        %3605 = vmatprep.mubr.f32.mxu0 0.0
        %3606 = vmatmul.mubr.f32.gmra.mrb[0].mxu0 %v3468
        %v3607 = vpop.f32.mrb[0].mxu0
        %v3608 = vadd.f32 %v3427, %v3607
        %v3609 = vpop.f32.mrb[0].mxu0
        %3610 = vmatprep.mubr.f32.mxu0 0.0
        %3611 = vmatmul.mubr.f32.gmra.mrb[0].mxu0 %v3471
        %v3612 = vpop.f32.mrb[0].mxu0
        %v3613 = vadd.f32 %v3427, %v3612
        %v3614 = vpop.f32.mrb[0].mxu0
        %3615 = vmatprep.mubr.f32.mxu0 0.0
        %3616 = vmatmul.mubr.f32.gmra.mrb[0].mxu0 %v3474
        %v3617 = vpop.f32.mrb[0].mxu0
        %v3618 = vadd.f32 %v3427, %v3617
        %v3619 = vpop.f32.mrb[0].mxu0
        %3620 = vdwg.mxu0
        %v3621 = vmax.f32 %v3543, 0.0
        %v3622 = vmax.f32 %v3548, 0.0
        %v3623 = vmax.f32 %v3553, 0.0
        %v3624 = vmax.f32 %v3558, 0.0
        %v3625 = vmax.f32 %v3563, 0.0
        %v3626 = vmax.f32 %v3568, 0.0
        %v3627 = vmax.f32 %v3573, 0.0
        %v3628 = vmax.f32 %v3578, 0.0
        %v3629 = vmax.f32 %v3583, 0.0
        %v3630 = vmax.f32 %v3588, 0.0
        %v3631 = vmax.f32 %v3593, 0.0
        %v3632 = vmax.f32 %v3598, 0.0
        %v3633 = vmax.f32 %v3603, 0.0
        %v3634 = vmax.f32 %v3608, 0.0
        %v3635 = vmax.f32 %v3613, 0.0
        %v3636 = vmax.f32 %v3618, 0.0
        %s3637 = scalar_lea.vmem [#allocation2], 384
        %v3638 = vld [vmem:[%s3637] sm:$0xff]
        %v3639 = vld [vmem:[%s3637 + $0x8] sm:$0xff]
        %v3640 = vld [vmem:[%s3637 + $0x10] sm:$0xff]
        %v3641 = vld [vmem:[%s3637 + $0x18] sm:$0xff]
        %v3642 = vld [vmem:[%s3637 + $0x20] sm:$0xff]
        %v3643 = vld [vmem:[%s3637 + $0x28] sm:$0xff]
        %v3644 = vld [vmem:[%s2 + $0x8] sm:$0x1]
        %3653 = vrot.lane.b32.xlu0 %v3621, 16
        %v3654 = vpop.permute.xlu0 %3653
        %3655 = vrot.lane.b32.xlu0 %v3623, 16
        %v3656 = vpop.permute.xlu0 %3655
        %3657 = vrot.lane.b32.xlu0 %v3625, 16
        %v3658 = vpop.permute.xlu0 %3657
        %3659 = vrot.lane.b32.xlu0 %v3627, 16
        %v3660 = vpop.permute.xlu0 %3659
        %3661 = vrot.lane.b32.xlu0 %v3629, 16
        %v3662 = vpop.permute.xlu0 %3661
        %3663 = vrot.lane.b32.xlu0 %v3631, 16
        %v3664 = vpop.permute.xlu0 %3663
        %3665 = vrot.lane.b32.xlu0 %v3633, 16
        %v3666 = vpop.permute.xlu0 %3665
        %3667 = vrot.lane.b32.xlu0 %v3635, 16
        %v3668 = vpop.permute.xlu0 %3667
        %3685 = vrot.lane.b32.xlu0 %v3621, 32
        %v3686 = vpop.permute.xlu0 %3685
        %3687 = vrot.lane.b32.xlu0 %v3622, 32
        %v3688 = vpop.permute.xlu0 %3687
        %3689 = vrot.lane.b32.xlu0 %v3623, 32
        %v3690 = vpop.permute.xlu0 %3689
        %3691 = vrot.lane.b32.xlu0 %v3624, 32
        %v3692 = vpop.permute.xlu0 %3691
        %3693 = vrot.lane.b32.xlu0 %v3625, 32
        %v3694 = vpop.permute.xlu0 %3693
        %3695 = vrot.lane.b32.xlu0 %v3626, 32
        %v3696 = vpop.permute.xlu0 %3695
        %3697 = vrot.lane.b32.xlu0 %v3627, 32
        %v3698 = vpop.permute.xlu0 %3697
        %3699 = vrot.lane.b32.xlu0 %v3628, 32
        %v3700 = vpop.permute.xlu0 %3699
        %3701 = vrot.lane.b32.xlu0 %v3629, 32
        %v3702 = vpop.permute.xlu0 %3701
        %3703 = vrot.lane.b32.xlu0 %v3630, 32
        %v3704 = vpop.permute.xlu0 %3703
        %3705 = vrot.lane.b32.xlu0 %v3631, 32
        %v3706 = vpop.permute.xlu0 %3705
        %3707 = vrot.lane.b32.xlu0 %v3632, 32
        %v3708 = vpop.permute.xlu0 %3707
        %3709 = vrot.lane.b32.xlu0 %v3633, 32
        %v3710 = vpop.permute.xlu0 %3709
        %3711 = vrot.lane.b32.xlu0 %v3634, 32
        %v3712 = vpop.permute.xlu0 %3711
        %3713 = vrot.lane.b32.xlu0 %v3635, 32
        %v3714 = vpop.permute.xlu0 %3713
        %3715 = vrot.lane.b32.xlu0 %v3636, 32
        %v3716 = vpop.permute.xlu0 %3715
        %v3733 = vsel %vm970, 0.0, %v3654
        %v3734 = vsel %vm970, 0.0, %v3656
        %v3735 = vsel %vm970, 0.0, %v3658
        %v3736 = vsel %vm970, 0.0, %v3660
        %v3737 = vsel %vm970, 0.0, %v3662
        %v3738 = vsel %vm970, 0.0, %v3664
        %v3739 = vsel %vm970, 0.0, %v3666
        %v3740 = vsel %vm970, 0.0, %v3668
        %v3741 = vsel %vm987, %v3399, %v3686
        %v3742 = vsel %vm987, %v3733, %v3688
        %v3743 = vsel %vm987, %v3399, %v3690
        %v3744 = vsel %vm987, %v3734, %v3692
        %v3745 = vsel %vm987, %v3399, %v3694
        %v3746 = vsel %vm987, %v3735, %v3696
        %v3747 = vsel %vm987, %v3399, %v3698
        %v3748 = vsel %vm987, %v3736, %v3700
        %v3749 = vsel %vm987, %v3399, %v3702
        %v3750 = vsel %vm987, %v3737, %v3704
        %v3751 = vsel %vm987, %v3399, %v3706
        %v3752 = vsel %vm987, %v3738, %v3708
        %v3753 = vsel %vm987, %v3399, %v3710
        %v3754 = vsel %vm987, %v3739, %v3712
        %v3755 = vsel %vm987, %v3399, %v3714
        %v3756 = vsel %vm987, %v3740, %v3716
        %v3757 = vlaneseq
        %v3758 = vshrl.u32 %v3757, 7
        %v3759 = vsub.s32 0, %v3758
        %v3760 = vrot.slane %v3644, %v3759
        %v3762 = vsel %vm1008, %v3741, 0
        %v3765 = vsel %vm1008, %v3742, 0
        %v3768 = vsel %vm1008, %v3743, 0
        %v3771 = vsel %vm1008, %v3744, 0
        %v3774 = vsel %vm1008, %v3745, 0
        %v3777 = vsel %vm1008, %v3746, 0
        %v3780 = vsel %vm1008, %v3747, 0
        %v3783 = vsel %vm1008, %v3748, 0
        %v3786 = vsel %vm1008, %v3749, 0
        %v3789 = vsel %vm1008, %v3750, 0
        %v3792 = vsel %vm1008, %v3751, 0
        %v3795 = vsel %vm1008, %v3752, 0
        %v3798 = vsel %vm1008, %v3753, 0
        %v3801 = vsel %vm1008, %v3754, 0
        %v3804 = vsel %vm1008, %v3755, 0
        %v3807 = vsel %vm1008, %v3756, 0
        %3809 = vmatprep.subr.mxu0 0.0
        %3810 = vmatpush1.msra.mxu0 %v3638
        %3811 = vmatprep.subr.mxu0 0.0
        %3812 = vmatpush1.msra.mxu0 %v3639
        %3813 = vmatprep.subr.mxu0 0.0
        %3814 = vmatpush1.msra.mxu0 %v3640
        %3815 = vmatprep.subr.mxu0 0.0
        %3816 = vmatpush1.msra.mxu0 %v3641
        %3817 = vmatprep.subr.mxu0 0.0
        %3818 = vmatpush1.msra.mxu0 %v3642
        %3819 = vmatprep.subr.mxu0 0.0
        %3820 = vmatpush1.msra.mxu0 %v3643
        %3821 = vmatprep.subr.mxu0 0.0
        %3822 = vmatpush1.msra.mxu0 0.0
        %3823 = vmatprep.subr.mxu0 0.0
        %3824 = vmatpush1.msra.mxu0 0.0
        %3825 = vmatprep.subr.mxu0 0.0
        %3826 = vmatpush1.msra.mxu0 0.0
        %3827 = vmatprep.subr.mxu0 0.0
        %3828 = vmatpush1.msra.mxu0 0.0
        %3829 = vmatprep.subr.mxu0 0.0
        %3830 = vmatpush1.msra.mxu0 0.0
        %3831 = vmatprep.subr.mxu0 0.0
        %3832 = vmatpush1.msra.mxu0 0.0
        %3833 = vmatprep.subr.mxu0 0.0
        %3834 = vmatpush1.msra.mxu0 0.0
        %3835 = vmatprep.subr.mxu0 0.0
        %3836 = vmatpush1.msra.mxu0 0.0
        %3837 = vmatprep.subr.mxu0 0.0
        %3838 = vmatpush1.msra.mxu0 0.0
        %3839 = vmatprep.subr.mxu0 0.0
        %3840 = vmatpush1.msra.mxu0 0.0
        %3841 = vmatprep.subr.mxu0 0.0
        %3842 = vmatpush1.msra.mxu0 0.0
        %3843 = vmatprep.subr.mxu0 0.0
        %3844 = vmatpush1.msra.mxu0 0.0
        %3845 = vmatprep.subr.mxu0 0.0
        %3846 = vmatpush1.msra.mxu0 0.0
        %3847 = vmatprep.subr.mxu0 0.0
        %3848 = vmatpush1.msra.mxu0 0.0
        %3849 = vmatprep.subr.mxu0 0.0
        %3850 = vmatpush1.msra.mxu0 0.0
        %3851 = vmatprep.subr.mxu0 0.0
        %3852 = vmatpush1.msra.mxu0 0.0
        %3853 = vmatprep.subr.mxu0 0.0
        %3854 = vmatpush1.msra.mxu0 0.0
        %3855 = vmatprep.subr.mxu0 0.0
        %3856 = vmatpush1.msra.mxu0 0.0
        %3857 = vmatprep.subr.mxu0 0.0
        %3858 = vmatpush1.msra.mxu0 0.0
        %3859 = vmatprep.subr.mxu0 0.0
        %3860 = vmatpush1.msra.mxu0 0.0
        %3861 = vmatprep.subr.mxu0 0.0
        %3862 = vmatpush1.msra.mxu0 0.0
        %3863 = vmatprep.subr.mxu0 0.0
        %3864 = vmatpush1.msra.mxu0 0.0
        %3865 = vmatprep.subr.mxu0 0.0
        %3866 = vmatpush1.msra.mxu0 0.0
        %3867 = vmatprep.subr.mxu0 0.0
        %3868 = vmatpush1.msra.mxu0 0.0
        %3869 = vmatprep.subr.mxu0 0.0
        %3870 = vmatpush1.msra.mxu0 0.0
        %3871 = vmatprep.subr.mxu0 0.0
        %3872 = vmatpush1.msra.mxu0 0.0
        %3873 = vmatprep.mubr.f32.mxu0 0.0
        %3874 = vmatmul.mubr.f32.gmra.mrb[0].mxu0 %v3762
        %v3875 = vpop.f32.mrb[0].mxu0
        %v3876 = vpop.f32.mrb[0].mxu0
        %3877 = vmatprep.mubr.f32.mxu0 0.0
        %3878 = vmatmul.mubr.f32.gmra.mrb[0].mxu0 %v3765
        %v3879 = vpop.f32.mrb[0].mxu0
        %v3880 = vadd.f32 %v3760, %v3879
        %v3881 = vpop.f32.mrb[0].mxu0
        %3882 = vmatprep.mubr.f32.mxu0 0.0
        %3883 = vmatmul.mubr.f32.gmra.mrb[0].mxu0 %v3768
        %v3884 = vpop.f32.mrb[0].mxu0
        %v3885 = vpop.f32.mrb[0].mxu0
        %3886 = vmatprep.mubr.f32.mxu0 0.0
        %3887 = vmatmul.mubr.f32.gmra.mrb[0].mxu0 %v3771
        %v3888 = vpop.f32.mrb[0].mxu0
        %v3889 = vadd.f32 %v3760, %v3888
        %v3890 = vpop.f32.mrb[0].mxu0
        %3891 = vmatprep.mubr.f32.mxu0 0.0
        %3892 = vmatmul.mubr.f32.gmra.mrb[0].mxu0 %v3774
        %v3893 = vpop.f32.mrb[0].mxu0
        %v3894 = vpop.f32.mrb[0].mxu0
        %3895 = vmatprep.mubr.f32.mxu0 0.0
        %3896 = vmatmul.mubr.f32.gmra.mrb[0].mxu0 %v3777
        %v3897 = vpop.f32.mrb[0].mxu0
        %v3898 = vadd.f32 %v3760, %v3897
        %v3899 = vpop.f32.mrb[0].mxu0
        %3900 = vmatprep.mubr.f32.mxu0 0.0
        %3901 = vmatmul.mubr.f32.gmra.mrb[0].mxu0 %v3780
        %v3902 = vpop.f32.mrb[0].mxu0
        %v3903 = vpop.f32.mrb[0].mxu0
        %3904 = vmatprep.mubr.f32.mxu0 0.0
        %3905 = vmatmul.mubr.f32.gmra.mrb[0].mxu0 %v3783
        %v3906 = vpop.f32.mrb[0].mxu0
        %v3907 = vadd.f32 %v3760, %v3906
        %v3908 = vpop.f32.mrb[0].mxu0
        %3909 = vmatprep.mubr.f32.mxu0 0.0
        %3910 = vmatmul.mubr.f32.gmra.mrb[0].mxu0 %v3786
        %v3911 = vpop.f32.mrb[0].mxu0
        %v3912 = vpop.f32.mrb[0].mxu0
        %3913 = vmatprep.mubr.f32.mxu0 0.0
        %3914 = vmatmul.mubr.f32.gmra.mrb[0].mxu0 %v3789
        %v3915 = vpop.f32.mrb[0].mxu0
        %v3916 = vadd.f32 %v3760, %v3915
        %v3917 = vpop.f32.mrb[0].mxu0
        %3918 = vmatprep.mubr.f32.mxu0 0.0
        %3919 = vmatmul.mubr.f32.gmra.mrb[0].mxu0 %v3792
        %v3920 = vpop.f32.mrb[0].mxu0
        %v3921 = vpop.f32.mrb[0].mxu0
        %3922 = vmatprep.mubr.f32.mxu0 0.0
        %3923 = vmatmul.mubr.f32.gmra.mrb[0].mxu0 %v3795
        %v3924 = vpop.f32.mrb[0].mxu0
        %v3925 = vadd.f32 %v3760, %v3924
        %v3926 = vpop.f32.mrb[0].mxu0
        %3927 = vmatprep.mubr.f32.mxu0 0.0
        %3928 = vmatmul.mubr.f32.gmra.mrb[0].mxu0 %v3798
        %v3929 = vpop.f32.mrb[0].mxu0
        %v3930 = vpop.f32.mrb[0].mxu0
        %3931 = vmatprep.mubr.f32.mxu0 0.0
        %3932 = vmatmul.mubr.f32.gmra.mrb[0].mxu0 %v3801
        %v3933 = vpop.f32.mrb[0].mxu0
        %v3934 = vadd.f32 %v3760, %v3933
        %v3935 = vpop.f32.mrb[0].mxu0
        %3936 = vmatprep.mubr.f32.mxu0 0.0
        %3937 = vmatmul.mubr.f32.gmra.mrb[0].mxu0 %v3804
        %v3938 = vpop.f32.mrb[0].mxu0
        %v3939 = vpop.f32.mrb[0].mxu0
        %3940 = vmatprep.mubr.f32.mxu0 0.0
        %3941 = vmatmul.mubr.f32.gmra.mrb[0].mxu0 %v3807
        %v3942 = vpop.f32.mrb[0].mxu0
        %v3943 = vadd.f32 %v3760, %v3942
        %v3944 = vpop.f32.mrb[0].mxu0
        %3945 = vdwg.mxu0
        %v3946 = vmax.f32 %v3880, 0.0
        %v3947 = vmax.f32 %v3889, 0.0
        %v3948 = vmax.f32 %v3898, 0.0
        %v3949 = vmax.f32 %v3907, 0.0
        %v3950 = vmax.f32 %v3916, 0.0
        %v3951 = vmax.f32 %v3925, 0.0
        %v3952 = vmax.f32 %v3934, 0.0
        %v3953 = vmax.f32 %v3943, 0.0
        %v3954 = vadd.f32 %v3946, %v3285
        %v3955 = vadd.f32 %v3947, %v3287
        %v3956 = vadd.f32 %v3948, %v3289
        %v3957 = vadd.f32 %v3949, %v3291
        %v3958 = vadd.f32 %v3950, %v3293
        %v3959 = vadd.f32 %v3951, %v3295
        %v3960 = vadd.f32 %v3952, %v3297
        %v3961 = vadd.f32 %v3953, %v3299
        %v3962 = vmax.f32 %v3954, 0.0
        %v3963 = vmax.f32 %v3955, 0.0
        %v3964 = vmax.f32 %v3956, 0.0
        %v3965 = vmax.f32 %v3957, 0.0
        %v3966 = vmax.f32 %v3958, 0.0
        %v3967 = vmax.f32 %v3959, 0.0
        %v3968 = vmax.f32 %v3960, 0.0
        %v3969 = vmax.f32 %v3961, 0.0
        %s3970 = scalar_lea.vmem [#allocation2], 432
        %v3971 = vld [vmem:[%s3970] sm:$0xff]
        %v3972 = vld [vmem:[%s3970 + $0x8] sm:$0xff]
        %v3973 = vld [vmem:[%s2 + $0x9] sm:$0x1]
        %v3974 = vlaneseq
        %v3975 = vshrl.u32 %v3974, 7
        %v3976 = vsub.s32 0, %v3975
        %v3977 = vrot.slane %v3973, %v3976
        %v3986 = vrot.slane %v3962, 7
        %v3987 = vrot.slane %v3963, 6
        %vm3988 = vcmask 1041409
        %v3989 = vsel %vm3988, %v3987, %v3986
        %v3990 = vrot.slane %v3964, 5
        %vm3991 = vcmask 1042434
        %v3992 = vsel %vm3991, %v3990, %v3989
        %v3993 = vrot.slane %v3965, 4
        %vm3994 = vcmask 1043459
        %v3995 = vsel %vm3994, %v3993, %v3992
        %v3996 = vrot.slane %v3966, 3
        %vm3997 = vcmask 1044484
        %v3998 = vsel %vm3997, %v3996, %v3995
        %v3999 = vrot.slane %v3967, 2
        %vm4000 = vcmask 1045509
        %v4001 = vsel %vm4000, %v3999, %v3998
        %v4002 = vrot.slane %v3968, 1
        %vm4003 = vcmask 1046534
        %v4004 = vsel %vm4003, %v4002, %v4001
        %vm4005 = vcmask 1047559
        %v4006 = vsel %vm4005, %v3969, %v4004
        %v4007 = vsel %vm970, %v4006, 0
        %4009 = vmatprep.subr.mxu0 0.0
        %4010 = vmatpush1.msra.mxu0 %v3971
        %4011 = vmatprep.subr.mxu0 0.0
        %4012 = vmatpush1.msra.mxu0 %v3972
        %4013 = vmatprep.subr.mxu0 0.0
        %4014 = vmatpush1.msra.mxu0 0.0
        %4015 = vmatprep.subr.mxu0 0.0
        %4016 = vmatpush1.msra.mxu0 0.0
        %4017 = vmatprep.subr.mxu0 0.0
        %4018 = vmatpush1.msra.mxu0 0.0
        %4019 = vmatprep.subr.mxu0 0.0
        %4020 = vmatpush1.msra.mxu0 0.0
        %4021 = vmatprep.subr.mxu0 0.0
        %4022 = vmatpush1.msra.mxu0 0.0
        %4023 = vmatprep.subr.mxu0 0.0
        %4024 = vmatpush1.msra.mxu0 0.0
        %4025 = vmatprep.subr.mxu0 0.0
        %4026 = vmatpush1.msra.mxu0 0.0
        %4027 = vmatprep.subr.mxu0 0.0
        %4028 = vmatpush1.msra.mxu0 0.0
        %4029 = vmatprep.subr.mxu0 0.0
        %4030 = vmatpush1.msra.mxu0 0.0
        %4031 = vmatprep.subr.mxu0 0.0
        %4032 = vmatpush1.msra.mxu0 0.0
        %4033 = vmatprep.subr.mxu0 0.0
        %4034 = vmatpush1.msra.mxu0 0.0
        %4035 = vmatprep.subr.mxu0 0.0
        %4036 = vmatpush1.msra.mxu0 0.0
        %4037 = vmatprep.subr.mxu0 0.0
        %4038 = vmatpush1.msra.mxu0 0.0
        %4039 = vmatprep.subr.mxu0 0.0
        %4040 = vmatpush1.msra.mxu0 0.0
        %4041 = vmatprep.subr.mxu0 0.0
        %4042 = vmatpush1.msra.mxu0 0.0
        %4043 = vmatprep.subr.mxu0 0.0
        %4044 = vmatpush1.msra.mxu0 0.0
        %4045 = vmatprep.subr.mxu0 0.0
        %4046 = vmatpush1.msra.mxu0 0.0
        %4047 = vmatprep.subr.mxu0 0.0
        %4048 = vmatpush1.msra.mxu0 0.0
        %4049 = vmatprep.subr.mxu0 0.0
        %4050 = vmatpush1.msra.mxu0 0.0
        %4051 = vmatprep.subr.mxu0 0.0
        %4052 = vmatpush1.msra.mxu0 0.0
        %4053 = vmatprep.subr.mxu0 0.0
        %4054 = vmatpush1.msra.mxu0 0.0
        %4055 = vmatprep.subr.mxu0 0.0
        %4056 = vmatpush1.msra.mxu0 0.0
        %4057 = vmatprep.subr.mxu0 0.0
        %4058 = vmatpush1.msra.mxu0 0.0
        %4059 = vmatprep.subr.mxu0 0.0
        %4060 = vmatpush1.msra.mxu0 0.0
        %4061 = vmatprep.subr.mxu0 0.0
        %4062 = vmatpush1.msra.mxu0 0.0
        %4063 = vmatprep.subr.mxu0 0.0
        %4064 = vmatpush1.msra.mxu0 0.0
        %4065 = vmatprep.subr.mxu0 0.0
        %4066 = vmatpush1.msra.mxu0 0.0
        %4067 = vmatprep.subr.mxu0 0.0
        %4068 = vmatpush1.msra.mxu0 0.0
        %4069 = vmatprep.subr.mxu0 0.0
        %4070 = vmatpush1.msra.mxu0 0.0
        %4071 = vmatprep.subr.mxu0 0.0
        %4072 = vmatpush1.msra.mxu0 0.0
        %4073 = vmatprep.mubr.f32.mxu0 0.0
        %4074 = vmatmul.mubr.f32.gmra.mrb[0].mxu0 %v4007
        %v4075 = vpop.f32.mrb[0].mxu0
        %v4076 = vadd.f32 %v3977, %v4075
        %v4077 = vpop.f32.mrb[0].mxu0
        %4078 = vdwg.mxu0
        %4079 = vst [vmem:[%s181] sm:$0xff] %v4076
        %s4080 = sand.u32 %s94, 1
        %s4081 = scalar_lea.sflag [#allocation4], %s4080
        %s4082 = sand.u32 %s94, 1
        %s4083 = smul.addr %s4082, 8
        %s4084 = scalar_lea.vmem [#allocation5], %s4083
        // Predicated region
        $region37: #{tpu_custom_call.1} parent=31 // pred_check
          %p4085 = pneg %p104
        $region38: #{tpu_custom_call.1} parent=31 // pred_check_branch
          %4087 = sbr.rel (%p4085) target = $region40
        $region39: #{tpu_custom_call.1} parent=31 // pred_region
          %s4089 = ssub.s32 128, 128
          %4090 = vsyncadd %s4081, %s4089
          %s4091 = smul.addr %s18, 128
          %s4092 = scalar_lea.hbm %s3, %s4091
          %s4094 = sshll.u32 %s4084, 4
          %s4095 = int_to_ptr.vmem [resolvable:$true] %s4094
          %4097 = dma.vmem_to_hbm [thread:$0]  %s4095, 128, %s4092, %s4081
        $region40: #{tpu_custom_call.1} parent=31 // pred_fallthru
          _
      $region32: #{tpu_custom_call.1} parent=5 // pred_fallthru
        _
      %p4098 = scmp.le.s32.totalorder 2, %s13
      // Predicated region
      $region41: #{tpu_custom_call.1} parent=5 // pred_check
        %p4099 = pneg %p4098
      $region42: #{tpu_custom_call.1} parent=5 // pred_check_branch
        %4101 = sbr.rel (%p4099) target = $region44
      $region43: #{tpu_custom_call.1} parent=5 // pred_region
        %s4102 = ssub.s32 %s13, 2
        // Predicated region
        $region45: #{tpu_custom_call.1} parent=43 // pred_check
          %p4103 = pneg %p110
        $region46: #{tpu_custom_call.1} parent=43 // pred_check_branch
          %4105 = sbr.rel (%p4103) target = $region48
        $region47: #{tpu_custom_call.1} parent=43 // pred_region
          %s4106 = sand.u32 %s95, 1
          %s4107 = scalar_lea.sflag [#allocation4], %s4106
          %s4108 = sand.u32 %s95, 1
          %s4109 = smul.addr %s4108, 8
          %s4110 = scalar_lea.vmem [#allocation5], %s4109
          %4111 = dma.done %s4107, 128
        $region48: #{tpu_custom_call.1} parent=43 // pred_fallthru
          _
      $region44: #{tpu_custom_call.1} parent=5 // pred_fallthru
        _
    $region6: #{tpu_custom_call.1} parent=1 // loop_footer
      %s17 = sadd.s32 1, %s13
    $region7: #{tpu_custom_call.1} parent=1 // loop_footer_branch
      %12 = sbr.rel target = $region3
    $region8: #{tpu_custom_call.1} parent=1 // loop_exit
      _
    %4112 = vsyncpa [#allocation3], 1
    %s4113 = scalar_lea.sflag [#allocation3], 1
    %4114 = vsyncpa %s4113, 1
    %4115 = vsyncpa [#allocation4], 1
    %s4116 = scalar_lea.sflag [#allocation4], 1
    %4117 = vsyncpa %s4116, 1

</llo_original>
